<compile_context>
chip_gen: v7x
topology: tpu7x:2x2x1
jax: 0.10.0
libtpu: 0.0.40
codegen_flags: <defaults>
</compile_context>

<pallas_src>
import math

import jax
import jax.numpy as jnp
from jax import lax
from jax.experimental import pallas as pl
from jax.experimental.pallas import tpu as pltpu

NEG_BIG = -1e9   # bias for padded class columns (finite => no NaN in 0 * bias)
HIDP = 128       # lane-dense padded hidden width
KP = 128         # lane-dense padded class width


def _vmem():
    return pl.BlockSpec(memory_space=pltpu.MemorySpace.VMEM)


def _smem():
    return pl.BlockSpec(memory_space=pltpu.MemorySpace.SMEM)


# ---------------------------------------------------------------------------
# Fused kernel: Langevin dynamics + energies + EBM loss.
#
#   for s in range(ld_steps):
#       h  = tanh(x @ W1 + b1);  f = h @ W2 + b2
#       p  = softmax(f)                              (padded classes -> 0)
#       gx = (p @ W2^T * (1 - h^2)) @ W1^T           = d/dx logsumexp(f)
#       x  = x + alpha * gx + sigma * N(0, 1)        (noise precomputed)
#
#   f_xy   = energy_net(x_data)        lse_xy = logsumexp(f_xy)
#   f_samp = energy_net(x_sample)      lse_s  = logsumexp(f_samp)
#   L_clf  = mean_b(lse_xy - f_xy[y])
#   L_gen  = -mean_b(lse_xy - lse_s)
#   loss   = L_clf + L_gen             (gradient_penalty == 0 in reference)
# ---------------------------------------------------------------------------
def _make_ebm_forward_kernel(batch, alpha, ld_steps):
    # full unroll only for short chains; avoids vreg spills for long ones
    unroll = True if ld_steps <= 8 else 4

    def kernel(x_ref, x0_ref, noise_ref, y1h_ref,
               w1_ref, b1_ref, w2_ref, b2_ref, w1t_ref, w2t_ref,
               xo_ref, loss_ref):

        def mlp(xf32):
            # energy_net forward; weights read from VMEM Refs at each use
            h = jnp.tanh(
                jnp.dot(xf32.astype(jnp.bfloat16), w1_ref[...],
                        preferred_element_type=jnp.float32) + b1_ref[...])
            f = (jnp.dot(h.astype(jnp.bfloat16), w2_ref[...],
                         preferred_element_type=jnp.float32) + b2_ref[...])
            return h, f

        def logsumexp_rows(f):
            m = jnp.max(f, axis=1, keepdims=True)
            return m + jnp.log(jnp.sum(jnp.exp(f - m), axis=1, keepdims=True))

        # ------------------- Langevin dynamics loop ----------------------
        def ld_step(s, x):
            h, f = mlp(x)
            m = jnp.max(f, axis=1, keepdims=True)
            e = jnp.exp(f - m)
            p = e / jnp.sum(e, axis=1, keepdims=True)     # softmax = d lse/df
            # analytic backward pass through the MLP using pre-transposed
            # weights (no per-step XLU transpose).
            gh = jnp.dot(p.astype(jnp.bfloat16), w2t_ref[...],
                         preferred_element_type=jnp.float32)
            gt = (gh * (1.0 - h * h)).astype(jnp.bfloat16)
            gx = jnp.dot(gt, w1t_ref[...],
                         preferred_element_type=jnp.float32)
            return x + alpha * gx + noise_ref[s]

        x_samp = lax.fori_loop(0, ld_steps, ld_step, x0_ref[...],
                               unroll=unroll)
        xo_ref[...] = x_samp

        # ------------------- energies + loss (all in VMEM) ---------------
        _, f_xy = mlp(x_ref[...])
        _, f_s = mlp(x_samp)
        lse_xy = logsumexp_rows(f_xy)
        lse_s = logsumexp_rows(f_s)
        picked = jnp.sum(f_xy * y1h_ref[...], axis=1, keepdims=True)

        per_clf = lse_xy - picked            # cross entropy per sample
        per_gen = -(lse_xy - lse_s)          # generative term per sample
        per = per_clf + per_gen

        row = lax.broadcasted_iota(jnp.int32, per.shape, 0)
        mask = (row < batch).astype(jnp.float32)   # drop sublane-pad rows
        loss_ref[0, 0] = jnp.sum(per * mask) * (1.0 / batch)

    return kernel


def ebm_forward_fused(params, x_flat, x0_flat, noise, y1h, batch, alpha,
                      ld_steps):
    """One pallas_call returning (x_sample_flat (Bp,Dflat), loss scalar)."""
    Bp, Dflat = x_flat.shape

    mm_flops_per_eval = 2 * Bp * (Dflat * HIDP + HIDP * KP)
    flops = (2 * ld_steps + 2) * mm_flops_per_eval
    transcendentals = (ld_steps + 2) * Bp * (HIDP + 2 * KP)
    bytes_accessed = int(
        4 * (x_flat.size + x0_flat.size + noise.size + y1h.size
             + Bp * Dflat + 1)
        + sum(int(v.size) * v.dtype.itemsize for v in params.values()))

    x_out, loss = pl.pallas_call(
        _make_ebm_forward_kernel(batch, alpha, ld_steps),
        out_shape=(jax.ShapeDtypeStruct((Bp, Dflat), jnp.float32),
                   jax.ShapeDtypeStruct((1, 1), jnp.float32)),
        in_specs=[_vmem()] * 10,
        out_specs=(_vmem(), _smem()),
        cost_estimate=pl.CostEstimate(flops=flops,
                                      transcendentals=transcendentals,
                                      bytes_accessed=bytes_accessed),
    )(x_flat, x0_flat, noise, y1h,
      params["w1"], params["b1"], params["w2"], params["b2"],
      params["w1t"], params["w2t"])
    return x_out, loss[0, 0]


# ---------------------------------------------------------------------------
# EBM module (JAX port of the PyTorch class; randomness via jax.random keys)
# ---------------------------------------------------------------------------
class EBM:
    def __init__(self, w1, b1, w2, b2, alpha, sigma, ld_steps, D,
                 buffer_key, buffer_size=10000):
        self.alpha = float(alpha)
        self.sigma = float(sigma)
        self.ld_steps = int(ld_steps)
        self.D = tuple(int(d) for d in D)

        Dflat, hid = w1.shape
        k = w2.shape[1]
        assert Dflat == math.prod(self.D)
        assert hid <= HIDP and k <= KP
        self.num_classes = k

        # pad: zero weight rows/cols (exact) + very negative bias on padded
        # classes so logsumexp / softmax over KP == over the real k classes.
        w1p = jnp.zeros((Dflat, HIDP), jnp.float32).at[:, :hid].set(w1)
        b1p = jnp.zeros((HIDP,), jnp.float32).at[:hid].set(b1)
        w2p = jnp.zeros((HIDP, KP), jnp.float32).at[:hid, :k].set(w2)
        b2p = jnp.full((KP,), NEG_BIG, jnp.float32).at[:k].set(b2)

        self.params = dict(
            w1=w1p.astype(jnp.bfloat16),        # (Dflat, HIDP) bf16
            b1=b1p.reshape(1, HIDP),            # f32
            w2=w2p.astype(jnp.bfloat16),        # (HIDP, KP)    bf16
            b2=b2p.reshape(1, KP),              # f32 (padded cols = -1e9)
            w1t=w1p.T.astype(jnp.bfloat16),     # pre-transposed for backward
            w2t=w2p.T.astype(jnp.bfloat16),     # pre-transposed for backward
        )

        self.replay_buffer = jax.random.uniform(
            buffer_key, (buffer_size,) + self.D,
            minval=-1.0, maxval=1.0, dtype=jnp.float32)

    def forward(self, x, y, key):
        # TODO(synk): the reference's unused `regularization` term and the
        # debug print in gen_loss do not affect the returned loss; omitted.
        B = x.shape[0]
        Dflat = math.prod(self.D)
        Bp = max(8, ((B + 7) // 8) * 8)     # sublane-aligned batch

        k_rand, k_idx, k_choose, k_noise = jax.random.split(key, 4)

        # --- replay-buffer / random mix (reference's sample() init) -------
        random_sample = jax.random.uniform(
            k_rand, (B,) + self.D, minval=-1.0, maxval=1.0,
            dtype=jnp.float32)
        idx = jax.random.randint(k_idx, (B,), 0,
                                 self.replay_buffer.shape[0])
        buffer_sample = self.replay_buffer[idx]
        choose_random = (jax.random.uniform(k_choose, (B,)) < 0.05
                         ).astype(jnp.float32)[:, None, None, None]
        x0 = (choose_random * random_sample
              + (1.0 - choose_random) * buffer_sample)

        # --- flatten + pad, stage Langevin noise, one-hot labels ----------
        x_flat = jnp.pad(x.reshape(B, -1).astype(jnp.float32),
                         ((0, Bp - B), (0, 0)))
        x0_flat = jnp.pad(x0.reshape(B, -1), ((0, Bp - B), (0, 0)))
        noise = self.sigma * jax.random.normal(
            k_noise, (self.ld_steps, Bp, Dflat), dtype=jnp.float32)
        y_pad = jnp.full((Bp,), -1, jnp.int32).at[:B].set(y.astype(jnp.int32))
        y1h = jax.nn.one_hot(y_pad, KP, dtype=jnp.float32)  # pad rows -> 0

        # --- one fused kernel: LD sampling + energies + scalar loss -------
        x_out, loss = ebm_forward_fused(
            self.params, x_flat, x0_flat, noise, y1h,
            B, self.alpha, self.ld_steps)

        # functional stand-in for the in-place replay buffer update
        x_sample = lax.stop_gradient(x_out[:B].reshape((B,) + self.D))
        self.replay_buffer = self.replay_buffer.at[idx].set(x_sample)
        return loss


# ---------------------------------------------------------------------------
if __name__ == "__main__":
    key = jax.random.PRNGKey(0)
    k_w1, k_b1, k_w2, k_b2, k_x, k_y, k_buf, k_fwd = jax.random.split(key, 8)

    B, C, H, W = 2, 3, 16, 16           # small CIFAR-like images, NCHW
    HID, K = 32, 10                      # real hidden width / num classes
    Dflat = C * H * W                    # 768

    w1 = (jax.random.normal(k_w1, (Dflat, HID)) * 0.05).astype(jnp.float32)
    b1 = (jax.random.normal(k_b1, (HID,)) * 0.01).astype(jnp.float32)
    w2 = (jax.random.normal(k_w2, (HID, K)) * 0.05).astype(jnp.float32)
    b2 = (jax.random.normal(k_b2, (K,)) * 0.01).astype(jnp.float32)

    x = jax.random.uniform(k_x, (B, C, H, W), minval=-1.0, maxval=1.0,
                           dtype=jnp.float32)
    y = jax.random.randint(k_y, (B,), 0, K)

    ebm = EBM(w1, b1, w2, b2, alpha=1.0, sigma=0.01, ld_steps=3,
              D=(C, H, W), buffer_key=k_buf)

    loss = ebm.forward(x, y, k_fwd)
    jax.block_until_ready(loss)
    assert loss.shape == () and bool(jnp.isfinite(loss))
    print("KERNEL_OK")
</pallas_src>

<mosaic_0001>
module attributes {stable_mosaic.version = 11 : i64} {
  func.func @kernel(%arg0: memref<8x768xf32, #tpu.memory_space<vmem>>, %arg1: memref<8x768xf32, #tpu.memory_space<vmem>>, %arg2: memref<3x8x768xf32, #tpu.memory_space<vmem>>, %arg3: memref<8x128xf32, #tpu.memory_space<vmem>>, %arg4: memref<768x128xbf16, #tpu.memory_space<vmem>>, %arg5: memref<1x128xf32, #tpu.memory_space<vmem>>, %arg6: memref<128x128xbf16, #tpu.memory_space<vmem>>, %arg7: memref<1x128xf32, #tpu.memory_space<vmem>>, %arg8: memref<128x768xbf16, #tpu.memory_space<vmem>>, %arg9: memref<128x128xbf16, #tpu.memory_space<vmem>>, %arg10: memref<8x768xf32, #tpu.memory_space<vmem>>, %arg11: memref<1x1xf32, #tpu.memory_space<smem>>) attributes {dimension_semantics = [], scalar_prefetch = 0 : i64, scratch_operands = 0 : i64, tpu.core_type = #tpu.core_type<tc>} {
    %c0 = arith.constant 0 : index
    %c0_0 = arith.constant 0 : index
    %0 = vector.load %arg1[%c0, %c0_0] : memref<8x768xf32, #tpu.memory_space<vmem>>, vector<8x768xf32>
    %c0_i32 = arith.constant 0 : i32
    %1 = arith.truncf %0 : vector<8x768xf32> to vector<8x768xbf16>
    %c0_1 = arith.constant 0 : index
    %c0_2 = arith.constant 0 : index
    %2 = vector.load %arg4[%c0_1, %c0_2] : memref<768x128xbf16, #tpu.memory_space<vmem>>, vector<768x128xbf16>
    %cst = arith.constant dense<0.000000e+00> : vector<8x128xf32>
    %3 = tpu.matmul %1, %2, %cst {dimension_numbers = #tpu.dot_dimension_numbers<[1], [0], [0], [1], [0, 0, 1, 1], [], []>} : vector<8x768xbf16>, vector<768x128xbf16>, vector<8x128xf32> -> vector<8x128xf32>
    %c0_3 = arith.constant 0 : index
    %c0_4 = arith.constant 0 : index
    %4 = vector.load %arg5[%c0_3, %c0_4] : memref<1x128xf32, #tpu.memory_space<vmem>>, vector<1x128xf32>
    %5 = vector.broadcast %4 : vector<1x128xf32> to vector<8x128xf32>
    %6 = arith.addf %3, %5 : vector<8x128xf32>
    %7 = math.tanh %6 : vector<8x128xf32>
    %8 = arith.truncf %7 : vector<8x128xf32> to vector<8x128xbf16>
    %c0_5 = arith.constant 0 : index
    %c0_6 = arith.constant 0 : index
    %9 = vector.load %arg6[%c0_5, %c0_6] : memref<128x128xbf16, #tpu.memory_space<vmem>>, vector<128x128xbf16>
    %cst_7 = arith.constant dense<0.000000e+00> : vector<8x128xf32>
    %10 = tpu.matmul %8, %9, %cst_7 {dimension_numbers = #tpu.dot_dimension_numbers<[1], [0], [0], [1], [0, 0, 1, 1], [], []>} : vector<8x128xbf16>, vector<128x128xbf16>, vector<8x128xf32> -> vector<8x128xf32>
    %c0_8 = arith.constant 0 : index
    %c0_9 = arith.constant 0 : index
    %11 = vector.load %arg7[%c0_8, %c0_9] : memref<1x128xf32, #tpu.memory_space<vmem>>, vector<1x128xf32>
    %12 = vector.broadcast %11 : vector<1x128xf32> to vector<8x128xf32>
    %13 = arith.addf %10, %12 : vector<8x128xf32>
    %cst_10 = arith.constant dense<0xFF800000> : vector<8xf32>
    %14 = vector.multi_reduction <maximumf>, %13, %cst_10 [1] : vector<8x128xf32> to vector<8xf32>
    %15 = vector.shape_cast %14 : vector<8xf32> to vector<8x1xf32>
    %16 = vector.broadcast %15 : vector<8x1xf32> to vector<8x128xf32>
    %17 = arith.subf %13, %16 : vector<8x128xf32>
    %18 = math.exp %17 : vector<8x128xf32>
    %cst_11 = arith.constant dense<0.000000e+00> : vector<8xf32>
    %19 = vector.multi_reduction <add>, %18, %cst_11 [1] : vector<8x128xf32> to vector<8xf32>
    %20 = vector.shape_cast %19 : vector<8xf32> to vector<8x1xf32>
    %21 = vector.broadcast %20 : vector<8x1xf32> to vector<8x128xf32>
    %22 = arith.divf %18, %21 : vector<8x128xf32>
    %23 = arith.truncf %22 : vector<8x128xf32> to vector<8x128xbf16>
    %c0_12 = arith.constant 0 : index
    %c0_13 = arith.constant 0 : index
    %24 = vector.load %arg9[%c0_12, %c0_13] : memref<128x128xbf16, #tpu.memory_space<vmem>>, vector<128x128xbf16>
    %cst_14 = arith.constant dense<0.000000e+00> : vector<8x128xf32>
    %25 = tpu.matmul %23, %24, %cst_14 {dimension_numbers = #tpu.dot_dimension_numbers<[1], [0], [0], [1], [0, 0, 1, 1], [], []>} : vector<8x128xbf16>, vector<128x128xbf16>, vector<8x128xf32> -> vector<8x128xf32>
    %26 = arith.mulf %7, %7 : vector<8x128xf32>
    %cst_15 = arith.constant 1.000000e+00 : f32
    %27 = vector.broadcast %cst_15 : f32 to vector<8x128xf32>
    %28 = arith.subf %27, %26 : vector<8x128xf32>
    %29 = arith.mulf %25, %28 : vector<8x128xf32>
    %30 = arith.truncf %29 : vector<8x128xf32> to vector<8x128xbf16>
    %c0_16 = arith.constant 0 : index
    %c0_17 = arith.constant 0 : index
    %31 = vector.load %arg8[%c0_16, %c0_17] : memref<128x768xbf16, #tpu.memory_space<vmem>>, vector<128x768xbf16>
    %cst_18 = arith.constant dense<0.000000e+00> : vector<8x768xf32>
    %32 = tpu.matmul %30, %31, %cst_18 {dimension_numbers = #tpu.dot_dimension_numbers<[1], [0], [0], [1], [0, 0, 1, 1], [], []>} : vector<8x128xbf16>, vector<128x768xbf16>, vector<8x768xf32> -> vector<8x768xf32>
    %cst_19 = arith.constant 1.000000e+00 : f32
    %33 = vector.broadcast %cst_19 : f32 to vector<8x768xf32>
    %34 = arith.mulf %33, %32 : vector<8x768xf32>
    %35 = arith.addf %0, %34 : vector<8x768xf32>
    %36 = arith.index_cast %c0_i32 : i32 to index
    %c0_20 = arith.constant 0 : index
    %c0_21 = arith.constant 0 : index
    %37 = vector.load %arg2[%36, %c0_20, %c0_21] : memref<3x8x768xf32, #tpu.memory_space<vmem>>, vector<1x8x768xf32>
    %38 = vector.shape_cast %37 : vector<1x8x768xf32> to vector<8x768xf32>
    %39 = arith.addf %35, %38 : vector<8x768xf32>
    %c1_i32 = arith.constant 1 : i32
    %40 = arith.truncf %39 : vector<8x768xf32> to vector<8x768xbf16>
    %c0_22 = arith.constant 0 : index
    %c0_23 = arith.constant 0 : index
    %41 = vector.load %arg4[%c0_22, %c0_23] : memref<768x128xbf16, #tpu.memory_space<vmem>>, vector<768x128xbf16>
    %cst_24 = arith.constant dense<0.000000e+00> : vector<8x128xf32>
    %42 = tpu.matmul %40, %41, %cst_24 {dimension_numbers = #tpu.dot_dimension_numbers<[1], [0], [0], [1], [0, 0, 1, 1], [], []>} : vector<8x768xbf16>, vector<768x128xbf16>, vector<8x128xf32> -> vector<8x128xf32>
    %c0_25 = arith.constant 0 : index
    %c0_26 = arith.constant 0 : index
    %43 = vector.load %arg5[%c0_25, %c0_26] : memref<1x128xf32, #tpu.memory_space<vmem>>, vector<1x128xf32>
    %44 = vector.broadcast %43 : vector<1x128xf32> to vector<8x128xf32>
    %45 = arith.addf %42, %44 : vector<8x128xf32>
    %46 = math.tanh %45 : vector<8x128xf32>
    %47 = arith.truncf %46 : vector<8x128xf32> to vector<8x128xbf16>
    %c0_27 = arith.constant 0 : index
    %c0_28 = arith.constant 0 : index
    %48 = vector.load %arg6[%c0_27, %c0_28] : memref<128x128xbf16, #tpu.memory_space<vmem>>, vector<128x128xbf16>
    %cst_29 = arith.constant dense<0.000000e+00> : vector<8x128xf32>
    %49 = tpu.matmul %47, %48, %cst_29 {dimension_numbers = #tpu.dot_dimension_numbers<[1], [0], [0], [1], [0, 0, 1, 1], [], []>} : vector<8x128xbf16>, vector<128x128xbf16>, vector<8x128xf32> -> vector<8x128xf32>
    %c0_30 = arith.constant 0 : index
    %c0_31 = arith.constant 0 : index
    %50 = vector.load %arg7[%c0_30, %c0_31] : memref<1x128xf32, #tpu.memory_space<vmem>>, vector<1x128xf32>
    %51 = vector.broadcast %50 : vector<1x128xf32> to vector<8x128xf32>
    %52 = arith.addf %49, %51 : vector<8x128xf32>
    %cst_32 = arith.constant dense<0xFF800000> : vector<8xf32>
    %53 = vector.multi_reduction <maximumf>, %52, %cst_32 [1] : vector<8x128xf32> to vector<8xf32>
    %54 = vector.shape_cast %53 : vector<8xf32> to vector<8x1xf32>
    %55 = vector.broadcast %54 : vector<8x1xf32> to vector<8x128xf32>
    %56 = arith.subf %52, %55 : vector<8x128xf32>
    %57 = math.exp %56 : vector<8x128xf32>
    %cst_33 = arith.constant dense<0.000000e+00> : vector<8xf32>
    %58 = vector.multi_reduction <add>, %57, %cst_33 [1] : vector<8x128xf32> to vector<8xf32>
    %59 = vector.shape_cast %58 : vector<8xf32> to vector<8x1xf32>
    %60 = vector.broadcast %59 : vector<8x1xf32> to vector<8x128xf32>
    %61 = arith.divf %57, %60 : vector<8x128xf32>
    %62 = arith.truncf %61 : vector<8x128xf32> to vector<8x128xbf16>
    %c0_34 = arith.constant 0 : index
    %c0_35 = arith.constant 0 : index
    %63 = vector.load %arg9[%c0_34, %c0_35] : memref<128x128xbf16, #tpu.memory_space<vmem>>, vector<128x128xbf16>
    %cst_36 = arith.constant dense<0.000000e+00> : vector<8x128xf32>
    %64 = tpu.matmul %62, %63, %cst_36 {dimension_numbers = #tpu.dot_dimension_numbers<[1], [0], [0], [1], [0, 0, 1, 1], [], []>} : vector<8x128xbf16>, vector<128x128xbf16>, vector<8x128xf32> -> vector<8x128xf32>
    %65 = arith.mulf %46, %46 : vector<8x128xf32>
    %cst_37 = arith.constant 1.000000e+00 : f32
    %66 = vector.broadcast %cst_37 : f32 to vector<8x128xf32>
    %67 = arith.subf %66, %65 : vector<8x128xf32>
    %68 = arith.mulf %64, %67 : vector<8x128xf32>
    %69 = arith.truncf %68 : vector<8x128xf32> to vector<8x128xbf16>
    %c0_38 = arith.constant 0 : index
    %c0_39 = arith.constant 0 : index
    %70 = vector.load %arg8[%c0_38, %c0_39] : memref<128x768xbf16, #tpu.memory_space<vmem>>, vector<128x768xbf16>
    %cst_40 = arith.constant dense<0.000000e+00> : vector<8x768xf32>
    %71 = tpu.matmul %69, %70, %cst_40 {dimension_numbers = #tpu.dot_dimension_numbers<[1], [0], [0], [1], [0, 0, 1, 1], [], []>} : vector<8x128xbf16>, vector<128x768xbf16>, vector<8x768xf32> -> vector<8x768xf32>
    %cst_41 = arith.constant 1.000000e+00 : f32
    %72 = vector.broadcast %cst_41 : f32 to vector<8x768xf32>
    %73 = arith.mulf %72, %71 : vector<8x768xf32>
    %74 = arith.addf %39, %73 : vector<8x768xf32>
    %75 = arith.index_cast %c1_i32 : i32 to index
    %c0_42 = arith.constant 0 : index
    %c0_43 = arith.constant 0 : index
    %76 = vector.load %arg2[%75, %c0_42, %c0_43] : memref<3x8x768xf32, #tpu.memory_space<vmem>>, vector<1x8x768xf32>
    %77 = vector.shape_cast %76 : vector<1x8x768xf32> to vector<8x768xf32>
    %78 = arith.addf %74, %77 : vector<8x768xf32>
    %c2_i32 = arith.constant 2 : i32
    %79 = arith.truncf %78 : vector<8x768xf32> to vector<8x768xbf16>
    %c0_44 = arith.constant 0 : index
    %c0_45 = arith.constant 0 : index
    %80 = vector.load %arg4[%c0_44, %c0_45] : memref<768x128xbf16, #tpu.memory_space<vmem>>, vector<768x128xbf16>
    %cst_46 = arith.constant dense<0.000000e+00> : vector<8x128xf32>
    %81 = tpu.matmul %79, %80, %cst_46 {dimension_numbers = #tpu.dot_dimension_numbers<[1], [0], [0], [1], [0, 0, 1, 1], [], []>} : vector<8x768xbf16>, vector<768x128xbf16>, vector<8x128xf32> -> vector<8x128xf32>
    %c0_47 = arith.constant 0 : index
    %c0_48 = arith.constant 0 : index
    %82 = vector.load %arg5[%c0_47, %c0_48] : memref<1x128xf32, #tpu.memory_space<vmem>>, vector<1x128xf32>
    %83 = vector.broadcast %82 : vector<1x128xf32> to vector<8x128xf32>
    %84 = arith.addf %81, %83 : vector<8x128xf32>
    %85 = math.tanh %84 : vector<8x128xf32>
    %86 = arith.truncf %85 : vector<8x128xf32> to vector<8x128xbf16>
    %c0_49 = arith.constant 0 : index
    %c0_50 = arith.constant 0 : index
    %87 = vector.load %arg6[%c0_49, %c0_50] : memref<128x128xbf16, #tpu.memory_space<vmem>>, vector<128x128xbf16>
    %cst_51 = arith.constant dense<0.000000e+00> : vector<8x128xf32>
    %88 = tpu.matmul %86, %87, %cst_51 {dimension_numbers = #tpu.dot_dimension_numbers<[1], [0], [0], [1], [0, 0, 1, 1], [], []>} : vector<8x128xbf16>, vector<128x128xbf16>, vector<8x128xf32> -> vector<8x128xf32>
    %c0_52 = arith.constant 0 : index
    %c0_53 = arith.constant 0 : index
    %89 = vector.load %arg7[%c0_52, %c0_53] : memref<1x128xf32, #tpu.memory_space<vmem>>, vector<1x128xf32>
    %90 = vector.broadcast %89 : vector<1x128xf32> to vector<8x128xf32>
    %91 = arith.addf %88, %90 : vector<8x128xf32>
    %cst_54 = arith.constant dense<0xFF800000> : vector<8xf32>
    %92 = vector.multi_reduction <maximumf>, %91, %cst_54 [1] : vector<8x128xf32> to vector<8xf32>
    %93 = vector.shape_cast %92 : vector<8xf32> to vector<8x1xf32>
    %94 = vector.broadcast %93 : vector<8x1xf32> to vector<8x128xf32>
    %95 = arith.subf %91, %94 : vector<8x128xf32>
    %96 = math.exp %95 : vector<8x128xf32>
    %cst_55 = arith.constant dense<0.000000e+00> : vector<8xf32>
    %97 = vector.multi_reduction <add>, %96, %cst_55 [1] : vector<8x128xf32> to vector<8xf32>
    %98 = vector.shape_cast %97 : vector<8xf32> to vector<8x1xf32>
    %99 = vector.broadcast %98 : vector<8x1xf32> to vector<8x128xf32>
    %100 = arith.divf %96, %99 : vector<8x128xf32>
    %101 = arith.truncf %100 : vector<8x128xf32> to vector<8x128xbf16>
    %c0_56 = arith.constant 0 : index
    %c0_57 = arith.constant 0 : index
    %102 = vector.load %arg9[%c0_56, %c0_57] : memref<128x128xbf16, #tpu.memory_space<vmem>>, vector<128x128xbf16>
    %cst_58 = arith.constant dense<0.000000e+00> : vector<8x128xf32>
    %103 = tpu.matmul %101, %102, %cst_58 {dimension_numbers = #tpu.dot_dimension_numbers<[1], [0], [0], [1], [0, 0, 1, 1], [], []>} : vector<8x128xbf16>, vector<128x128xbf16>, vector<8x128xf32> -> vector<8x128xf32>
    %104 = arith.mulf %85, %85 : vector<8x128xf32>
    %cst_59 = arith.constant 1.000000e+00 : f32
    %105 = vector.broadcast %cst_59 : f32 to vector<8x128xf32>
    %106 = arith.subf %105, %104 : vector<8x128xf32>
    %107 = arith.mulf %103, %106 : vector<8x128xf32>
    %108 = arith.truncf %107 : vector<8x128xf32> to vector<8x128xbf16>
    %c0_60 = arith.constant 0 : index
    %c0_61 = arith.constant 0 : index
    %109 = vector.load %arg8[%c0_60, %c0_61] : memref<128x768xbf16, #tpu.memory_space<vmem>>, vector<128x768xbf16>
    %cst_62 = arith.constant dense<0.000000e+00> : vector<8x768xf32>
    %110 = tpu.matmul %108, %109, %cst_62 {dimension_numbers = #tpu.dot_dimension_numbers<[1], [0], [0], [1], [0, 0, 1, 1], [], []>} : vector<8x128xbf16>, vector<128x768xbf16>, vector<8x768xf32> -> vector<8x768xf32>
    %cst_63 = arith.constant 1.000000e+00 : f32
    %111 = vector.broadcast %cst_63 : f32 to vector<8x768xf32>
    %112 = arith.mulf %111, %110 : vector<8x768xf32>
    %113 = arith.addf %78, %112 : vector<8x768xf32>
    %114 = arith.index_cast %c2_i32 : i32 to index
    %c0_64 = arith.constant 0 : index
    %c0_65 = arith.constant 0 : index
    %115 = vector.load %arg2[%114, %c0_64, %c0_65] : memref<3x8x768xf32, #tpu.memory_space<vmem>>, vector<1x8x768xf32>
    %116 = vector.shape_cast %115 : vector<1x8x768xf32> to vector<8x768xf32>
    %117 = arith.addf %113, %116 : vector<8x768xf32>
    %c3_i32 = arith.constant 3 : i32
    %c0_66 = arith.constant 0 : index
    %c0_67 = arith.constant 0 : index
    %118 = vector.load %arg10[%c0_66, %c0_67] : memref<8x768xf32, #tpu.memory_space<vmem>>, vector<8x768xf32>
    tpu.vector_store %arg10[%c0_66, %c0_67], %117 {strides = array<i32>} : memref<8x768xf32, #tpu.memory_space<vmem>>, vector<8x768xf32>,
    %c0_68 = arith.constant 0 : index
    %c0_69 = arith.constant 0 : index
    %119 = vector.load %arg0[%c0_68, %c0_69] : memref<8x768xf32, #tpu.memory_space<vmem>>, vector<8x768xf32>
    %120 = arith.truncf %119 : vector<8x768xf32> to vector<8x768xbf16>
    %c0_70 = arith.constant 0 : index
    %c0_71 = arith.constant 0 : index
    %121 = vector.load %arg4[%c0_70, %c0_71] : memref<768x128xbf16, #tpu.memory_space<vmem>>, vector<768x128xbf16>
    %cst_72 = arith.constant dense<0.000000e+00> : vector<8x128xf32>
    %122 = tpu.matmul %120, %121, %cst_72 {dimension_numbers = #tpu.dot_dimension_numbers<[1], [0], [0], [1], [0, 0, 1, 1], [], []>} : vector<8x768xbf16>, vector<768x128xbf16>, vector<8x128xf32> -> vector<8x128xf32>
    %c0_73 = arith.constant 0 : index
    %c0_74 = arith.constant 0 : index
    %123 = vector.load %arg5[%c0_73, %c0_74] : memref<1x128xf32, #tpu.memory_space<vmem>>, vector<1x128xf32>
    %124 = vector.broadcast %123 : vector<1x128xf32> to vector<8x128xf32>
    %125 = arith.addf %122, %124 : vector<8x128xf32>
    %126 = math.tanh %125 : vector<8x128xf32>
    %127 = arith.truncf %126 : vector<8x128xf32> to vector<8x128xbf16>
    %c0_75 = arith.constant 0 : index
    %c0_76 = arith.constant 0 : index
    %128 = vector.load %arg6[%c0_75, %c0_76] : memref<128x128xbf16, #tpu.memory_space<vmem>>, vector<128x128xbf16>
    %cst_77 = arith.constant dense<0.000000e+00> : vector<8x128xf32>
    %129 = tpu.matmul %127, %128, %cst_77 {dimension_numbers = #tpu.dot_dimension_numbers<[1], [0], [0], [1], [0, 0, 1, 1], [], []>} : vector<8x128xbf16>, vector<128x128xbf16>, vector<8x128xf32> -> vector<8x128xf32>
    %c0_78 = arith.constant 0 : index
    %c0_79 = arith.constant 0 : index
    %130 = vector.load %arg7[%c0_78, %c0_79] : memref<1x128xf32, #tpu.memory_space<vmem>>, vector<1x128xf32>
    %131 = vector.broadcast %130 : vector<1x128xf32> to vector<8x128xf32>
    %132 = arith.addf %129, %131 : vector<8x128xf32>
    %133 = arith.truncf %117 : vector<8x768xf32> to vector<8x768xbf16>
    %c0_80 = arith.constant 0 : index
    %c0_81 = arith.constant 0 : index
    %134 = vector.load %arg4[%c0_80, %c0_81] : memref<768x128xbf16, #tpu.memory_space<vmem>>, vector<768x128xbf16>
    %cst_82 = arith.constant dense<0.000000e+00> : vector<8x128xf32>
    %135 = tpu.matmul %133, %134, %cst_82 {dimension_numbers = #tpu.dot_dimension_numbers<[1], [0], [0], [1], [0, 0, 1, 1], [], []>} : vector<8x768xbf16>, vector<768x128xbf16>, vector<8x128xf32> -> vector<8x128xf32>
    %c0_83 = arith.constant 0 : index
    %c0_84 = arith.constant 0 : index
    %136 = vector.load %arg5[%c0_83, %c0_84] : memref<1x128xf32, #tpu.memory_space<vmem>>, vector<1x128xf32>
    %137 = vector.broadcast %136 : vector<1x128xf32> to vector<8x128xf32>
    %138 = arith.addf %135, %137 : vector<8x128xf32>
    %139 = math.tanh %138 : vector<8x128xf32>
    %140 = arith.truncf %139 : vector<8x128xf32> to vector<8x128xbf16>
    %c0_85 = arith.constant 0 : index
    %c0_86 = arith.constant 0 : index
    %141 = vector.load %arg6[%c0_85, %c0_86] : memref<128x128xbf16, #tpu.memory_space<vmem>>, vector<128x128xbf16>
    %cst_87 = arith.constant dense<0.000000e+00> : vector<8x128xf32>
    %142 = tpu.matmul %140, %141, %cst_87 {dimension_numbers = #tpu.dot_dimension_numbers<[1], [0], [0], [1], [0, 0, 1, 1], [], []>} : vector<8x128xbf16>, vector<128x128xbf16>, vector<8x128xf32> -> vector<8x128xf32>
    %c0_88 = arith.constant 0 : index
    %c0_89 = arith.constant 0 : index
    %143 = vector.load %arg7[%c0_88, %c0_89] : memref<1x128xf32, #tpu.memory_space<vmem>>, vector<1x128xf32>
    %144 = vector.broadcast %143 : vector<1x128xf32> to vector<8x128xf32>
    %145 = arith.addf %142, %144 : vector<8x128xf32>
    %cst_90 = arith.constant dense<0xFF800000> : vector<8xf32>
    %146 = vector.multi_reduction <maximumf>, %132, %cst_90 [1] : vector<8x128xf32> to vector<8xf32>
    %147 = vector.shape_cast %146 : vector<8xf32> to vector<8x1xf32>
    %148 = vector.broadcast %147 : vector<8x1xf32> to vector<8x128xf32>
    %149 = arith.subf %132, %148 : vector<8x128xf32>
    %150 = math.exp %149 : vector<8x128xf32>
    %cst_91 = arith.constant dense<0.000000e+00> : vector<8xf32>
    %151 = vector.multi_reduction <add>, %150, %cst_91 [1] : vector<8x128xf32> to vector<8xf32>
    %152 = vector.shape_cast %151 : vector<8xf32> to vector<8x1xf32>
    %153 = math.log %152 : vector<8x1xf32>
    %154 = arith.addf %147, %153 : vector<8x1xf32>
    %cst_92 = arith.constant dense<0xFF800000> : vector<8xf32>
    %155 = vector.multi_reduction <maximumf>, %145, %cst_92 [1] : vector<8x128xf32> to vector<8xf32>
    %156 = vector.shape_cast %155 : vector<8xf32> to vector<8x1xf32>
    %157 = vector.broadcast %156 : vector<8x1xf32> to vector<8x128xf32>
    %158 = arith.subf %145, %157 : vector<8x128xf32>
    %159 = math.exp %158 : vector<8x128xf32>
    %cst_93 = arith.constant dense<0.000000e+00> : vector<8xf32>
    %160 = vector.multi_reduction <add>, %159, %cst_93 [1] : vector<8x128xf32> to vector<8xf32>
    %161 = vector.shape_cast %160 : vector<8xf32> to vector<8x1xf32>
    %162 = math.log %161 : vector<8x1xf32>
    %163 = arith.addf %156, %162 : vector<8x1xf32>
    %c0_94 = arith.constant 0 : index
    %c0_95 = arith.constant 0 : index
    %164 = vector.load %arg3[%c0_94, %c0_95] : memref<8x128xf32, #tpu.memory_space<vmem>>, vector<8x128xf32>
    %165 = arith.mulf %132, %164 : vector<8x128xf32>
    %cst_96 = arith.constant dense<0.000000e+00> : vector<8xf32>
    %166 = vector.multi_reduction <add>, %165, %cst_96 [1] : vector<8x128xf32> to vector<8xf32>
    %167 = vector.shape_cast %166 : vector<8xf32> to vector<8x1xf32>
    %168 = arith.subf %154, %167 : vector<8x1xf32>
    %169 = arith.subf %154, %163 : vector<8x1xf32>
    %cst_97 = arith.constant 0.000000e+00 : f32
    %170 = vector.broadcast %cst_97 : f32 to vector<8x1xf32>
    %171 = arith.subf %170, %169 : vector<8x1xf32>
    %172 = arith.addf %168, %171 : vector<8x1xf32>
    %173 = tpu.iota {dimensions = array<i32: 0>} : vector<8x1xi32>
    %c2_i32_98 = arith.constant 2 : i32
    %174 = vector.broadcast %c2_i32_98 : i32 to vector<8x1xi32>
    %175 = arith.cmpi slt, %173, %174 : vector<8x1xi32>
    %176 = arith.extui %175 : vector<8x1xi1> to vector<8x1xi32>
    %177 = arith.sitofp %176 : vector<8x1xi32> to vector<8x1xf32>
    %178 = arith.mulf %172, %177 : vector<8x1xf32>
    %179 = vector.shape_cast %178 : vector<8x1xf32> to vector<1x8x1xf32>
    %cst_99 = arith.constant dense<0.000000e+00> : vector<1xf32>
    %180 = vector.multi_reduction <add>, %179, %cst_99 [1, 2] : vector<1x8x1xf32> to vector<1xf32>
    %181 = vector.shape_cast %180 : vector<1xf32> to vector<1x1x1xf32>
    %182 = vector.extract %181[0, 0, 0] : f32 from vector<1x1x1xf32>
    %cst_100 = arith.constant 5.000000e-01 : f32
    %183 = arith.mulf %182, %cst_100 : f32
    %c0_101 = arith.constant 0 : index
    %c0_102 = arith.constant 0 : index
    %184 = memref.load %arg11[%c0_101, %c0_102] : memref<1x1xf32, #tpu.memory_space<smem>>
    memref.store %183, %arg11[%c0_101, %c0_102] : memref<1x1xf32, #tpu.memory_space<smem>>
    return
  }
}

</mosaic_0001>

<llo_original>
// kernel: tpu_custom_call.1
$region0: #{tpu_custom_call.1}
  #allocation0 [shape = 'u32[]', space=smem, size = 0x4, offset = 0x4, fixed_abs, tag = 'smem constant byte address 0x4 - core index']
  #allocation1 [shape = 'u32[144,128]{1,0:T(1,128)}', space=vmem, size = 0x12000, scoped, tag = 'internal scratch']
  %s0 = inlined_call_operand.hbm [shape: f32[8,768], index: 0, kind: input, shape index: {}]
  %s1 = inlined_call_operand.hbm [shape: f32[8,768], index: 1, kind: input, shape index: {}]
  %s2 = inlined_call_operand.hbm [shape: f32[3,8,768], index: 2, kind: input, shape index: {}]
  %s3 = inlined_call_operand.vmem [shape: f32[8,128], index: 3, kind: input, shape index: {}]
  %s4 = inlined_call_operand.hbm [shape: bf16[768,128], index: 4, kind: input, shape index: {}]
  %s5 = inlined_call_operand.vmem [shape: f32[1,128], index: 5, kind: input, shape index: {}]
  %s6 = inlined_call_operand.hbm [shape: bf16[128,128], index: 6, kind: input, shape index: {}]
  %s7 = inlined_call_operand.vmem [shape: f32[1,128], index: 7, kind: input, shape index: {}]
  %s8 = inlined_call_operand.hbm [shape: bf16[128,768], index: 8, kind: input, shape index: {}]
  %s9 = inlined_call_operand.hbm [shape: bf16[128,128], index: 9, kind: input, shape index: {}]
  %s10 = inlined_call_operand.hbm [shape: f32[8,768], index: 10, kind: output, shape index: {0}]
  %s11 = inlined_call_operand.hbm [shape: f32[1,1], index: 11, kind: output, shape index: {1}]
  %12 = xla_tuple %s10, %s11
  %s13 = sld [smem:[#allocation0]]
  $region86: #{tpu_custom_call.1} parent=0
    _
  %s15 = ssub.s32 1, %s13
  %s16 = scalar_select 0, %s15, %s13
  $region1: #{tpu_custom_call.1} parent=0
    #allocation2 [shape = 'u8[24576]{0}', space=vmem, size = 0x6000, scoped, tag = 'input window, operand 0, single buffered']
    #allocation3 [shape = 's32[1]{0}', space=sflag, size = 0x4, scoped, tag = 'scoped memory for tpu_custom_call.1']
    #allocation4 [shape = 's32[1]{0}', space=sflag, size = 0x4, scoped, tag = 'scoped memory for tpu_custom_call.1']
    #allocation5 [shape = 's32[1]{0}', space=sflag, size = 0x4, scoped, tag = 'scoped memory for tpu_custom_call.1']
    #allocation6 [shape = 'u8[24576]{0}', space=vmem, size = 0x6000, scoped, tag = 'input window, operand 1, single buffered']
    #allocation7 [shape = 's32[1]{0}', space=sflag, size = 0x4, scoped, tag = 'scoped memory for tpu_custom_call.1']
    #allocation8 [shape = 'u8[73728]{0}', space=vmem, size = 0x12000, scoped, tag = 'input window, operand 2, single buffered']
    #allocation9 [shape = 'u8[196608]{0}', space=vmem, size = 0x30000, scoped, tag = 'input window, operand 4, single buffered']
    #allocation10 [shape = 's32[1]{0}', space=sflag, size = 0x4, scoped, tag = 'scoped memory for tpu_custom_call.1']
    #allocation11 [shape = 'u8[32768]{0}', space=vmem, size = 0x8000, scoped, tag = 'input window, operand 6, single buffered']
    #allocation12 [shape = 'u8[196608]{0}', space=vmem, size = 0x30000, scoped, tag = 'input window, operand 8, single buffered']
    #allocation13 [shape = 's32[1]{0}', space=sflag, size = 0x4, scoped, tag = 'scoped memory for tpu_custom_call.1']
    #allocation14 [shape = 'u8[32768]{0}', space=vmem, size = 0x8000, scoped, tag = 'input window, operand 9, single buffered']
    #allocation15 [shape = 'u8[24576]{0}', space=vmem, size = 0x6000, scoped, tag = 'output window, operand 0, single buffered']
    #allocation16 [shape = 'u8[512]{0}', space=smem, size = 0x200, scoped, tag = 'output window, operand 1, single buffered']
    %17 = vsyncpa [#allocation3], 0
    %18 = vsyncpa [#allocation7], 0
    %19 = vsyncpa [#allocation10], 0
    %20 = vsyncpa [#allocation13], 0
    %21 = vsyncpa [#allocation4], 0
    %22 = vsyncpa [#allocation5], 0
    // Predicated region
    $region2: #{tpu_custom_call.1} parent=1 // pred_check
      _
    $region3: #{tpu_custom_call.1} parent=1 // pred_check_branch
      %24 = sbr.rel (0) target = $region5
    $region4: #{tpu_custom_call.1} parent=1 // pred_region
      %s26 = ssub.s32 768, 768
      %27 = vsyncadd [#allocation3], %s26
      %s29 = sshll.u32 [#allocation2], 4
      %s30 = int_to_ptr.vmem [resolvable:$true] %s29
      %32 = dma.hbm_to_vmem [thread:$0]  %s0, 768, %s30, [#allocation3]
    $region5: #{tpu_custom_call.1} parent=1 // pred_fallthru
      _
    // Predicated region
    $region6: #{tpu_custom_call.1} parent=1 // pred_check
      _
    $region7: #{tpu_custom_call.1} parent=1 // pred_check_branch
      %34 = sbr.rel (0) target = $region9
    $region8: #{tpu_custom_call.1} parent=1 // pred_region
      %s36 = ssub.s32 768, 768
      %37 = vsyncadd [#allocation7], %s36
      %s39 = sshll.u32 [#allocation6], 4
      %s40 = int_to_ptr.vmem [resolvable:$true] %s39
      %42 = dma.hbm_to_vmem [thread:$0]  %s1, 768, %s40, [#allocation7]
    $region9: #{tpu_custom_call.1} parent=1 // pred_fallthru
      _
    // Predicated region
    $region10: #{tpu_custom_call.1} parent=1 // pred_check
      _
    $region11: #{tpu_custom_call.1} parent=1 // pred_check_branch
      %44 = sbr.rel (0) target = $region13
    $region12: #{tpu_custom_call.1} parent=1 // pred_region
      %s46 = ssub.s32 2304, 2304
      %47 = vsyncadd [#allocation7], %s46
      %s48 = sshll.u32 [#allocation8], 4
      %s49 = int_to_ptr.vmem [resolvable:$true] %s48
      %54 = dma.hbm_to_vmem [thread:$0]  %s2, 2304, %s49, [#allocation7], 768, 768, 48
    $region13: #{tpu_custom_call.1} parent=1 // pred_fallthru
      _
    // Predicated region
    $region14: #{tpu_custom_call.1} parent=1 // pred_check
      _
    $region15: #{tpu_custom_call.1} parent=1 // pred_check_branch
      %56 = sbr.rel (0) target = $region17
    $region16: #{tpu_custom_call.1} parent=1 // pred_region
      _
    $region17: #{tpu_custom_call.1} parent=1 // pred_fallthru
      _
    // Predicated region
    $region18: #{tpu_custom_call.1} parent=1 // pred_check
      _
    $region19: #{tpu_custom_call.1} parent=1 // pred_check_branch
      %58 = sbr.rel (0) target = $region21
    $region20: #{tpu_custom_call.1} parent=1 // pred_region
      %s60 = ssub.s32 6144, 6144
      %61 = vsyncadd [#allocation10], %s60
      %s62 = sshll.u32 [#allocation9], 4
      %s63 = int_to_ptr.vmem [resolvable:$true] %s62
      %68 = dma.hbm_to_vmem [thread:$0]  %s4, 6144, %s63, [#allocation10], 64, 64, 4
    $region21: #{tpu_custom_call.1} parent=1 // pred_fallthru
      _
    // Predicated region
    $region22: #{tpu_custom_call.1} parent=1 // pred_check
      _
    $region23: #{tpu_custom_call.1} parent=1 // pred_check_branch
      %70 = sbr.rel (0) target = $region25
    $region24: #{tpu_custom_call.1} parent=1 // pred_region
      _
    $region25: #{tpu_custom_call.1} parent=1 // pred_fallthru
      _
    // Predicated region
    $region26: #{tpu_custom_call.1} parent=1 // pred_check
      _
    $region27: #{tpu_custom_call.1} parent=1 // pred_check_branch
      %72 = sbr.rel (0) target = $region29
    $region28: #{tpu_custom_call.1} parent=1 // pred_region
      %s74 = ssub.s32 1024, 1024
      %75 = vsyncadd [#allocation10], %s74
      %s76 = sshll.u32 [#allocation11], 4
      %s77 = int_to_ptr.vmem [resolvable:$true] %s76
      %82 = dma.hbm_to_vmem [thread:$0]  %s6, 1024, %s77, [#allocation10], 64, 64, 4
    $region29: #{tpu_custom_call.1} parent=1 // pred_fallthru
      _
    // Predicated region
    $region30: #{tpu_custom_call.1} parent=1 // pred_check
      _
    $region31: #{tpu_custom_call.1} parent=1 // pred_check_branch
      %84 = sbr.rel (0) target = $region33
    $region32: #{tpu_custom_call.1} parent=1 // pred_region
      _
    $region33: #{tpu_custom_call.1} parent=1 // pred_fallthru
      _
    // Predicated region
    $region34: #{tpu_custom_call.1} parent=1 // pred_check
      _
    $region35: #{tpu_custom_call.1} parent=1 // pred_check_branch
      %86 = sbr.rel (0) target = $region37
    $region36: #{tpu_custom_call.1} parent=1 // pred_region
      %s88 = ssub.s32 6144, 6144
      %89 = vsyncadd [#allocation13], %s88
      %s90 = sshll.u32 [#allocation12], 4
      %s91 = int_to_ptr.vmem [resolvable:$true] %s90
      %96 = dma.hbm_to_vmem [thread:$0]  %s8, 6144, %s91, [#allocation13], 384, 384, 24
    $region37: #{tpu_custom_call.1} parent=1 // pred_fallthru
      _
    // Predicated region
    $region38: #{tpu_custom_call.1} parent=1 // pred_check
      _
    $region39: #{tpu_custom_call.1} parent=1 // pred_check_branch
      %98 = sbr.rel (0) target = $region41
    $region40: #{tpu_custom_call.1} parent=1 // pred_region
      %s100 = ssub.s32 1024, 1024
      %101 = vsyncadd [#allocation13], %s100
      %s102 = sshll.u32 [#allocation14], 4
      %s103 = int_to_ptr.vmem [resolvable:$true] %s102
      %108 = dma.hbm_to_vmem [thread:$0]  %s9, 1024, %s103, [#allocation13], 64, 64, 4
    $region41: #{tpu_custom_call.1} parent=1 // pred_fallthru
      _
    // Predicated region
    $region42: #{tpu_custom_call.1} parent=1 // pred_check
      _
    $region43: #{tpu_custom_call.1} parent=1 // pred_check_branch
      %110 = sbr.rel (0) target = $region45
    $region44: #{tpu_custom_call.1} parent=1 // pred_region
      %111 = dma.done [#allocation3], 768
    $region45: #{tpu_custom_call.1} parent=1 // pred_fallthru
      _
    // Predicated region
    $region46: #{tpu_custom_call.1} parent=1 // pred_check
      _
    $region47: #{tpu_custom_call.1} parent=1 // pred_check_branch
      %113 = sbr.rel (0) target = $region49
    $region48: #{tpu_custom_call.1} parent=1 // pred_region
      %114 = dma.done [#allocation7], 768
    $region49: #{tpu_custom_call.1} parent=1 // pred_fallthru
      _
    // Predicated region
    $region50: #{tpu_custom_call.1} parent=1 // pred_check
      _
    $region51: #{tpu_custom_call.1} parent=1 // pred_check_branch
      %116 = sbr.rel (0) target = $region53
    $region52: #{tpu_custom_call.1} parent=1 // pred_region
      %117 = dma.done [#allocation7], 2304
    $region53: #{tpu_custom_call.1} parent=1 // pred_fallthru
      _
    // Predicated region
    $region54: #{tpu_custom_call.1} parent=1 // pred_check
      _
    $region55: #{tpu_custom_call.1} parent=1 // pred_check_branch
      %119 = sbr.rel (0) target = $region57
    $region56: #{tpu_custom_call.1} parent=1 // pred_region
      %120 = dma.done [#allocation10], 6144
    $region57: #{tpu_custom_call.1} parent=1 // pred_fallthru
      _
    // Predicated region
    $region58: #{tpu_custom_call.1} parent=1 // pred_check
      _
    $region59: #{tpu_custom_call.1} parent=1 // pred_check_branch
      %122 = sbr.rel (0) target = $region61
    $region60: #{tpu_custom_call.1} parent=1 // pred_region
      %123 = dma.done [#allocation10], 1024
    $region61: #{tpu_custom_call.1} parent=1 // pred_fallthru
      _
    // Predicated region
    $region62: #{tpu_custom_call.1} parent=1 // pred_check
      _
    $region63: #{tpu_custom_call.1} parent=1 // pred_check_branch
      %125 = sbr.rel (0) target = $region65
    $region64: #{tpu_custom_call.1} parent=1 // pred_region
      %126 = dma.done [#allocation13], 6144
    $region65: #{tpu_custom_call.1} parent=1 // pred_fallthru
      _
    // Predicated region
    $region66: #{tpu_custom_call.1} parent=1 // pred_check
      _
    $region67: #{tpu_custom_call.1} parent=1 // pred_check_branch
      %128 = sbr.rel (0) target = $region69
    $region68: #{tpu_custom_call.1} parent=1 // pred_region
      %129 = dma.done [#allocation13], 1024
    $region69: #{tpu_custom_call.1} parent=1 // pred_fallthru
      _
    %v131 = vld [vmem:[#allocation6] sm:$0xff]
    %v132 = vld [vmem:[#allocation6 + $0x8] sm:$0xff]
    %v133 = vld [vmem:[#allocation6 + $0x10] sm:$0xff]
    %v134 = vld [vmem:[#allocation6 + $0x18] sm:$0xff]
    %v135 = vld [vmem:[#allocation6 + $0x20] sm:$0xff]
    %v136 = vld [vmem:[#allocation6 + $0x28] sm:$0xff]
    %v137 = vpack.c.bf16 %v131, %v131
    %v138 = vpack.c.bf16 %v132, %v132
    %v139 = vpack.c.bf16 %v133, %v133
    %v140 = vpack.c.bf16 %v134, %v134
    %v141 = vpack.c.bf16 %v135, %v135
    %v142 = vpack.c.bf16 %v136, %v136
    %v143 = vld [vmem:[#allocation9] sm:$0xf]
    %v144 = vld [vmem:[#allocation9 + $0x4] sm:$0xf]
    %v145 = vld [vmem:[#allocation9 + $0x8] sm:$0xf]
    %v146 = vld [vmem:[#allocation9 + $0xc] sm:$0xf]
    %v147 = vld [vmem:[#allocation9 + $0x10] sm:$0xf]
    %v148 = vld [vmem:[#allocation9 + $0x14] sm:$0xf]
    %v149 = vld [vmem:[#allocation9 + $0x18] sm:$0xf]
    %v150 = vld [vmem:[#allocation9 + $0x1c] sm:$0xf]
    %v151 = vld [vmem:[#allocation9 + $0x20] sm:$0xf]
    %v152 = vld [vmem:[#allocation9 + $0x24] sm:$0xf]
    %v153 = vld [vmem:[#allocation9 + $0x28] sm:$0xf]
    %v154 = vld [vmem:[#allocation9 + $0x2c] sm:$0xf]
    %v155 = vld [vmem:[#allocation9 + $0x30] sm:$0xf]
    %v156 = vld [vmem:[#allocation9 + $0x34] sm:$0xf]
    %v157 = vld [vmem:[#allocation9 + $0x38] sm:$0xf]
    %v158 = vld [vmem:[#allocation9 + $0x3c] sm:$0xf]
    %v159 = vld [vmem:[#allocation9 + $0x40] sm:$0xf]
    %v160 = vld [vmem:[#allocation9 + $0x44] sm:$0xf]
    %v161 = vld [vmem:[#allocation9 + $0x48] sm:$0xf]
    %v162 = vld [vmem:[#allocation9 + $0x4c] sm:$0xf]
    %v163 = vld [vmem:[#allocation9 + $0x50] sm:$0xf]
    %v164 = vld [vmem:[#allocation9 + $0x54] sm:$0xf]
    %v165 = vld [vmem:[#allocation9 + $0x58] sm:$0xf]
    %v166 = vld [vmem:[#allocation9 + $0x5c] sm:$0xf]
    %v167 = vld [vmem:[#allocation9 + $0x60] sm:$0xf]
    %v168 = vld [vmem:[#allocation9 + $0x64] sm:$0xf]
    %v169 = vld [vmem:[#allocation9 + $0x68] sm:$0xf]
    %v170 = vld [vmem:[#allocation9 + $0x6c] sm:$0xf]
    %v171 = vld [vmem:[#allocation9 + $0x70] sm:$0xf]
    %v172 = vld [vmem:[#allocation9 + $0x74] sm:$0xf]
    %v173 = vld [vmem:[#allocation9 + $0x78] sm:$0xf]
    %v174 = vld [vmem:[#allocation9 + $0x7c] sm:$0xf]
    %v175 = vld [vmem:[#allocation9 + $0x80] sm:$0xf]
    %v176 = vld [vmem:[#allocation9 + $0x84] sm:$0xf]
    %v177 = vld [vmem:[#allocation9 + $0x88] sm:$0xf]
    %v178 = vld [vmem:[#allocation9 + $0x8c] sm:$0xf]
    %v179 = vld [vmem:[#allocation9 + $0x90] sm:$0xf]
    %v180 = vld [vmem:[#allocation9 + $0x94] sm:$0xf]
    %v181 = vld [vmem:[#allocation9 + $0x98] sm:$0xf]
    %v182 = vld [vmem:[#allocation9 + $0x9c] sm:$0xf]
    %v183 = vld [vmem:[#allocation9 + $0xa0] sm:$0xf]
    %v184 = vld [vmem:[#allocation9 + $0xa4] sm:$0xf]
    %v185 = vld [vmem:[#allocation9 + $0xa8] sm:$0xf]
    %v186 = vld [vmem:[#allocation9 + $0xac] sm:$0xf]
    %v187 = vld [vmem:[#allocation9 + $0xb0] sm:$0xf]
    %v188 = vld [vmem:[#allocation9 + $0xb4] sm:$0xf]
    %v189 = vld [vmem:[#allocation9 + $0xb8] sm:$0xf]
    %v190 = vld [vmem:[#allocation9 + $0xbc] sm:$0xf]
    %v191 = vld [vmem:[#allocation9 + $0xc0] sm:$0xf]
    %v192 = vld [vmem:[#allocation9 + $0xc4] sm:$0xf]
    %v193 = vld [vmem:[#allocation9 + $0xc8] sm:$0xf]
    %v194 = vld [vmem:[#allocation9 + $0xcc] sm:$0xf]
    %v195 = vld [vmem:[#allocation9 + $0xd0] sm:$0xf]
    %v196 = vld [vmem:[#allocation9 + $0xd4] sm:$0xf]
    %v197 = vld [vmem:[#allocation9 + $0xd8] sm:$0xf]
    %v198 = vld [vmem:[#allocation9 + $0xdc] sm:$0xf]
    %v199 = vld [vmem:[#allocation9 + $0xe0] sm:$0xf]
    %v200 = vld [vmem:[#allocation9 + $0xe4] sm:$0xf]
    %v201 = vld [vmem:[#allocation9 + $0xe8] sm:$0xf]
    %v202 = vld [vmem:[#allocation9 + $0xec] sm:$0xf]
    %v203 = vld [vmem:[#allocation9 + $0xf0] sm:$0xf]
    %v204 = vld [vmem:[#allocation9 + $0xf4] sm:$0xf]
    %v205 = vld [vmem:[#allocation9 + $0xf8] sm:$0xf]
    %v206 = vld [vmem:[#allocation9 + $0xfc] sm:$0xf]
    %v207 = vld [vmem:[#allocation9 + $0x100] sm:$0xf]
    %v208 = vld [vmem:[#allocation9 + $0x104] sm:$0xf]
    %v209 = vld [vmem:[#allocation9 + $0x108] sm:$0xf]
    %v210 = vld [vmem:[#allocation9 + $0x10c] sm:$0xf]
    %v211 = vld [vmem:[#allocation9 + $0x110] sm:$0xf]
    %v212 = vld [vmem:[#allocation9 + $0x114] sm:$0xf]
    %v213 = vld [vmem:[#allocation9 + $0x118] sm:$0xf]
    %v214 = vld [vmem:[#allocation9 + $0x11c] sm:$0xf]
    %v215 = vld [vmem:[#allocation9 + $0x120] sm:$0xf]
    %v216 = vld [vmem:[#allocation9 + $0x124] sm:$0xf]
    %v217 = vld [vmem:[#allocation9 + $0x128] sm:$0xf]
    %v218 = vld [vmem:[#allocation9 + $0x12c] sm:$0xf]
    %v219 = vld [vmem:[#allocation9 + $0x130] sm:$0xf]
    %v220 = vld [vmem:[#allocation9 + $0x134] sm:$0xf]
    %v221 = vld [vmem:[#allocation9 + $0x138] sm:$0xf]
    %v222 = vld [vmem:[#allocation9 + $0x13c] sm:$0xf]
    %v223 = vld [vmem:[#allocation9 + $0x140] sm:$0xf]
    %v224 = vld [vmem:[#allocation9 + $0x144] sm:$0xf]
    %v225 = vld [vmem:[#allocation9 + $0x148] sm:$0xf]
    %v226 = vld [vmem:[#allocation9 + $0x14c] sm:$0xf]
    %v227 = vld [vmem:[#allocation9 + $0x150] sm:$0xf]
    %v228 = vld [vmem:[#allocation9 + $0x154] sm:$0xf]
    %v229 = vld [vmem:[#allocation9 + $0x158] sm:$0xf]
    %v230 = vld [vmem:[#allocation9 + $0x15c] sm:$0xf]
    %v231 = vld [vmem:[#allocation9 + $0x160] sm:$0xf]
    %v232 = vld [vmem:[#allocation9 + $0x164] sm:$0xf]
    %v233 = vld [vmem:[#allocation9 + $0x168] sm:$0xf]
    %v234 = vld [vmem:[#allocation9 + $0x16c] sm:$0xf]
    %v235 = vld [vmem:[#allocation9 + $0x170] sm:$0xf]
    %v236 = vld [vmem:[#allocation9 + $0x174] sm:$0xf]
    %v237 = vld [vmem:[#allocation9 + $0x178] sm:$0xf]
    %v238 = vld [vmem:[#allocation9 + $0x17c] sm:$0xf]
    %v239 = vld [vmem:[%s5] sm:$0x1]
    %v241 = vlaneseq
    %v242 = vshrl.u32 %v241, 7
    %v243 = vsub.s32 0, %v242
    %v244 = vrot.slane %v239, %v243
    %v342 = vunpack.c.l.b16 %v143
    %v343 = vunpack.c.l.b16 %v144
    %v344 = vunpack.c.l.b16 %v145
    %v345 = vunpack.c.l.b16 %v146
    %v346 = vunpack.c.l.b16 %v147
    %v347 = vunpack.c.l.b16 %v148
    %v348 = vunpack.c.l.b16 %v149
    %v349 = vunpack.c.l.b16 %v150
    %v350 = vunpack.c.l.b16 %v151
    %v351 = vunpack.c.l.b16 %v152
    %v352 = vunpack.c.l.b16 %v153
    %v353 = vunpack.c.l.b16 %v154
    %v354 = vunpack.c.l.b16 %v155
    %v355 = vunpack.c.l.b16 %v156
    %v356 = vunpack.c.l.b16 %v157
    %v357 = vunpack.c.l.b16 %v158
    %v358 = vunpack.c.l.b16 %v159
    %v359 = vunpack.c.l.b16 %v160
    %v360 = vunpack.c.l.b16 %v161
    %v361 = vunpack.c.l.b16 %v162
    %v362 = vunpack.c.l.b16 %v163
    %v363 = vunpack.c.l.b16 %v164
    %v364 = vunpack.c.l.b16 %v165
    %v365 = vunpack.c.l.b16 %v166
    %v366 = vunpack.c.l.b16 %v167
    %v367 = vunpack.c.l.b16 %v168
    %v368 = vunpack.c.l.b16 %v169
    %v369 = vunpack.c.l.b16 %v170
    %v370 = vunpack.c.l.b16 %v171
    %v371 = vunpack.c.l.b16 %v172
    %v372 = vunpack.c.l.b16 %v173
    %v373 = vunpack.c.l.b16 %v174
    %v374 = vunpack.c.l.b16 %v175
    %v375 = vunpack.c.l.b16 %v176
    %v376 = vunpack.c.l.b16 %v177
    %v377 = vunpack.c.l.b16 %v178
    %v378 = vunpack.c.l.b16 %v179
    %v379 = vunpack.c.l.b16 %v180
    %v380 = vunpack.c.l.b16 %v181
    %v381 = vunpack.c.l.b16 %v182
    %v382 = vunpack.c.l.b16 %v183
    %v383 = vunpack.c.l.b16 %v184
    %v384 = vunpack.c.l.b16 %v185
    %v385 = vunpack.c.l.b16 %v186
    %v386 = vunpack.c.l.b16 %v187
    %v387 = vunpack.c.l.b16 %v188
    %v388 = vunpack.c.l.b16 %v189
    %v389 = vunpack.c.l.b16 %v190
    %v390 = vunpack.c.l.b16 %v191
    %v391 = vunpack.c.l.b16 %v192
    %v392 = vunpack.c.l.b16 %v193
    %v393 = vunpack.c.l.b16 %v194
    %v394 = vunpack.c.l.b16 %v195
    %v395 = vunpack.c.l.b16 %v196
    %v396 = vunpack.c.l.b16 %v197
    %v397 = vunpack.c.l.b16 %v198
    %v398 = vunpack.c.l.b16 %v199
    %v399 = vunpack.c.l.b16 %v200
    %v400 = vunpack.c.l.b16 %v201
    %v401 = vunpack.c.l.b16 %v202
    %v402 = vunpack.c.l.b16 %v203
    %v403 = vunpack.c.l.b16 %v204
    %v404 = vunpack.c.l.b16 %v205
    %v405 = vunpack.c.l.b16 %v206
    %v406 = vunpack.c.l.b16 %v207
    %v407 = vunpack.c.l.b16 %v208
    %v408 = vunpack.c.l.b16 %v209
    %v409 = vunpack.c.l.b16 %v210
    %v410 = vunpack.c.l.b16 %v211
    %v411 = vunpack.c.l.b16 %v212
    %v412 = vunpack.c.l.b16 %v213
    %v413 = vunpack.c.l.b16 %v214
    %v414 = vunpack.c.l.b16 %v215
    %v415 = vunpack.c.l.b16 %v216
    %v416 = vunpack.c.l.b16 %v217
    %v417 = vunpack.c.l.b16 %v218
    %v418 = vunpack.c.l.b16 %v219
    %v419 = vunpack.c.l.b16 %v220
    %v420 = vunpack.c.l.b16 %v221
    %v421 = vunpack.c.l.b16 %v222
    %v422 = vunpack.c.l.b16 %v223
    %v423 = vunpack.c.l.b16 %v224
    %v424 = vunpack.c.l.b16 %v225
    %v425 = vunpack.c.l.b16 %v226
    %v426 = vunpack.c.l.b16 %v227
    %v427 = vunpack.c.l.b16 %v228
    %v428 = vunpack.c.l.b16 %v229
    %v429 = vunpack.c.l.b16 %v230
    %v430 = vunpack.c.l.b16 %v231
    %v431 = vunpack.c.l.b16 %v232
    %v432 = vunpack.c.l.b16 %v233
    %v433 = vunpack.c.l.b16 %v234
    %v434 = vunpack.c.l.b16 %v235
    %v435 = vunpack.c.l.b16 %v236
    %v436 = vunpack.c.l.b16 %v237
    %v437 = vunpack.c.l.b16 %v238
    %v438 = vpack.c.b16 %v343, %v342
    %v439 = vpack.c.b16 %v345, %v344
    %v440 = vpack.c.b16 %v347, %v346
    %v441 = vpack.c.b16 %v349, %v348
    %v442 = vpack.c.b16 %v351, %v350
    %v443 = vpack.c.b16 %v353, %v352
    %v444 = vpack.c.b16 %v355, %v354
    %v445 = vpack.c.b16 %v357, %v356
    %v446 = vpack.c.b16 %v359, %v358
    %v447 = vpack.c.b16 %v361, %v360
    %v448 = vpack.c.b16 %v363, %v362
    %v449 = vpack.c.b16 %v365, %v364
    %v450 = vpack.c.b16 %v367, %v366
    %v451 = vpack.c.b16 %v369, %v368
    %v452 = vpack.c.b16 %v371, %v370
    %v453 = vpack.c.b16 %v373, %v372
    %v454 = vpack.c.b16 %v375, %v374
    %v455 = vpack.c.b16 %v377, %v376
    %v456 = vpack.c.b16 %v379, %v378
    %v457 = vpack.c.b16 %v381, %v380
    %v458 = vpack.c.b16 %v383, %v382
    %v459 = vpack.c.b16 %v385, %v384
    %v460 = vpack.c.b16 %v387, %v386
    %v461 = vpack.c.b16 %v389, %v388
    %v462 = vpack.c.b16 %v391, %v390
    %v463 = vpack.c.b16 %v393, %v392
    %v464 = vpack.c.b16 %v395, %v394
    %v465 = vpack.c.b16 %v397, %v396
    %v466 = vpack.c.b16 %v399, %v398
    %v467 = vpack.c.b16 %v401, %v400
    %v468 = vpack.c.b16 %v403, %v402
    %v469 = vpack.c.b16 %v405, %v404
    %v470 = vpack.c.b16 %v407, %v406
    %v471 = vpack.c.b16 %v409, %v408
    %v472 = vpack.c.b16 %v411, %v410
    %v473 = vpack.c.b16 %v413, %v412
    %v474 = vpack.c.b16 %v415, %v414
    %v475 = vpack.c.b16 %v417, %v416
    %v476 = vpack.c.b16 %v419, %v418
    %v477 = vpack.c.b16 %v421, %v420
    %v478 = vpack.c.b16 %v423, %v422
    %v479 = vpack.c.b16 %v425, %v424
    %v480 = vpack.c.b16 %v427, %v426
    %v481 = vpack.c.b16 %v429, %v428
    %v482 = vpack.c.b16 %v431, %v430
    %v483 = vpack.c.b16 %v433, %v432
    %v484 = vpack.c.b16 %v435, %v434
    %v485 = vpack.c.b16 %v437, %v436
    %534 = vmatprep.subr.bf16.mxu0 0
    %535 = vmatpush1.bf16.msra.mxu0 %v438
    %536 = vmatprep.subr.bf16.mxu0 0
    %537 = vmatpush1.bf16.msra.mxu0 %v439
    %538 = vmatprep.subr.bf16.mxu0 0
    %539 = vmatpush1.bf16.msra.mxu0 %v440
    %540 = vmatprep.subr.bf16.mxu0 0
    %541 = vmatpush1.bf16.msra.mxu0 %v441
    %542 = vmatprep.subr.bf16.mxu0 0
    %543 = vmatpush1.bf16.msra.mxu0 %v442
    %544 = vmatprep.subr.bf16.mxu0 0
    %545 = vmatpush1.bf16.msra.mxu0 %v443
    %546 = vmatprep.subr.bf16.mxu0 0
    %547 = vmatpush1.bf16.msra.mxu0 %v444
    %548 = vmatprep.subr.bf16.mxu0 0
    %549 = vmatpush1.bf16.msra.mxu0 %v445
    %550 = vmatprep.subr.bf16.mxu0 0
    %551 = vmatpush1.bf16.msra.mxu0 %v446
    %552 = vmatprep.subr.bf16.mxu0 0
    %553 = vmatpush1.bf16.msra.mxu0 %v447
    %554 = vmatprep.subr.bf16.mxu0 0
    %555 = vmatpush1.bf16.msra.mxu0 %v448
    %556 = vmatprep.subr.bf16.mxu0 0
    %557 = vmatpush1.bf16.msra.mxu0 %v449
    %558 = vmatprep.subr.bf16.mxu0 0
    %559 = vmatpush1.bf16.msra.mxu0 %v450
    %560 = vmatprep.subr.bf16.mxu0 0
    %561 = vmatpush1.bf16.msra.mxu0 %v451
    %562 = vmatprep.subr.bf16.mxu0 0
    %563 = vmatpush1.bf16.msra.mxu0 %v452
    %564 = vmatprep.subr.bf16.mxu0 0
    %565 = vmatpush1.bf16.msra.mxu0 %v453
    %566 = vmatprep.mubr.bf16.mxu0 %v138
    %567 = vmatmul.mubr.bf16.gmra.mrb[0].mxu0 %v137
    %v568 = vpop.f32.mrb[0].mxu0
    %v569 = vadd.f32 %v244, %v568
    %v570 = vpop.f32.mrb[0].mxu0
    %v571 = vpop.f32.mrb[0].mxu0
    %v572 = vpop.f32.mrb[0].mxu0
    %573 = vdwg.mxu0
    %574 = vmatprep.subr.bf16.mxu0 0
    %575 = vmatpush1.bf16.msra.mxu0 %v454
    %576 = vmatprep.subr.bf16.mxu0 0
    %577 = vmatpush1.bf16.msra.mxu0 %v455
    %578 = vmatprep.subr.bf16.mxu0 0
    %579 = vmatpush1.bf16.msra.mxu0 %v456
    %580 = vmatprep.subr.bf16.mxu0 0
    %581 = vmatpush1.bf16.msra.mxu0 %v457
    %582 = vmatprep.subr.bf16.mxu0 0
    %583 = vmatpush1.bf16.msra.mxu0 %v458
    %584 = vmatprep.subr.bf16.mxu0 0
    %585 = vmatpush1.bf16.msra.mxu0 %v459
    %586 = vmatprep.subr.bf16.mxu0 0
    %587 = vmatpush1.bf16.msra.mxu0 %v460
    %588 = vmatprep.subr.bf16.mxu0 0
    %589 = vmatpush1.bf16.msra.mxu0 %v461
    %590 = vmatprep.subr.bf16.mxu0 0
    %591 = vmatpush1.bf16.msra.mxu0 %v462
    %592 = vmatprep.subr.bf16.mxu0 0
    %593 = vmatpush1.bf16.msra.mxu0 %v463
    %594 = vmatprep.subr.bf16.mxu0 0
    %595 = vmatpush1.bf16.msra.mxu0 %v464
    %596 = vmatprep.subr.bf16.mxu0 0
    %597 = vmatpush1.bf16.msra.mxu0 %v465
    %598 = vmatprep.subr.bf16.mxu0 0
    %599 = vmatpush1.bf16.msra.mxu0 %v466
    %600 = vmatprep.subr.bf16.mxu0 0
    %601 = vmatpush1.bf16.msra.mxu0 %v467
    %602 = vmatprep.subr.bf16.mxu0 0
    %603 = vmatpush1.bf16.msra.mxu0 %v468
    %604 = vmatprep.subr.bf16.mxu0 0
    %605 = vmatpush1.bf16.msra.mxu0 %v469
    %606 = vmatprep.mubr.bf16.mxu0 %v140
    %607 = vmatmul.mubr.bf16.gmra.mrb[0].mxu0 %v139
    %v608 = vpop.f32.mrb[0].mxu0
    %v609 = vadd.f32 %v569, %v608
    %v610 = vpop.f32.mrb[0].mxu0
    %v611 = vpop.f32.mrb[0].mxu0
    %v612 = vpop.f32.mrb[0].mxu0
    %613 = vdwg.mxu0
    %614 = vmatprep.subr.bf16.mxu0 0
    %615 = vmatpush1.bf16.msra.mxu0 %v470
    %616 = vmatprep.subr.bf16.mxu0 0
    %617 = vmatpush1.bf16.msra.mxu0 %v471
    %618 = vmatprep.subr.bf16.mxu0 0
    %619 = vmatpush1.bf16.msra.mxu0 %v472
    %620 = vmatprep.subr.bf16.mxu0 0
    %621 = vmatpush1.bf16.msra.mxu0 %v473
    %622 = vmatprep.subr.bf16.mxu0 0
    %623 = vmatpush1.bf16.msra.mxu0 %v474
    %624 = vmatprep.subr.bf16.mxu0 0
    %625 = vmatpush1.bf16.msra.mxu0 %v475
    %626 = vmatprep.subr.bf16.mxu0 0
    %627 = vmatpush1.bf16.msra.mxu0 %v476
    %628 = vmatprep.subr.bf16.mxu0 0
    %629 = vmatpush1.bf16.msra.mxu0 %v477
    %630 = vmatprep.subr.bf16.mxu0 0
    %631 = vmatpush1.bf16.msra.mxu0 %v478
    %632 = vmatprep.subr.bf16.mxu0 0
    %633 = vmatpush1.bf16.msra.mxu0 %v479
    %634 = vmatprep.subr.bf16.mxu0 0
    %635 = vmatpush1.bf16.msra.mxu0 %v480
    %636 = vmatprep.subr.bf16.mxu0 0
    %637 = vmatpush1.bf16.msra.mxu0 %v481
    %638 = vmatprep.subr.bf16.mxu0 0
    %639 = vmatpush1.bf16.msra.mxu0 %v482
    %640 = vmatprep.subr.bf16.mxu0 0
    %641 = vmatpush1.bf16.msra.mxu0 %v483
    %642 = vmatprep.subr.bf16.mxu0 0
    %643 = vmatpush1.bf16.msra.mxu0 %v484
    %644 = vmatprep.subr.bf16.mxu0 0
    %645 = vmatpush1.bf16.msra.mxu0 %v485
    %646 = vmatprep.mubr.bf16.mxu0 %v142
    %647 = vmatmul.mubr.bf16.gmra.mrb[0].mxu0 %v141
    %v648 = vpop.f32.mrb[0].mxu0
    %v649 = vadd.f32 %v609, %v648
    %v650 = vpop.f32.mrb[0].mxu0
    %v651 = vpop.f32.mrb[0].mxu0
    %v652 = vpop.f32.mrb[0].mxu0
    %653 = vdwg.mxu0
    %v654 = vtanh.pop %v649
    %v655 = vpack.c.bf16 %v654, %v654
    %v656 = vld [vmem:[#allocation11] sm:$0xf]
    %v657 = vld [vmem:[#allocation11 + $0x4] sm:$0xf]
    %v658 = vld [vmem:[#allocation11 + $0x8] sm:$0xf]
    %v659 = vld [vmem:[#allocation11 + $0xc] sm:$0xf]
    %v660 = vld [vmem:[#allocation11 + $0x10] sm:$0xf]
    %v661 = vld [vmem:[#allocation11 + $0x14] sm:$0xf]
    %v662 = vld [vmem:[#allocation11 + $0x18] sm:$0xf]
    %v663 = vld [vmem:[#allocation11 + $0x1c] sm:$0xf]
    %v664 = vld [vmem:[#allocation11 + $0x20] sm:$0xf]
    %v665 = vld [vmem:[#allocation11 + $0x24] sm:$0xf]
    %v666 = vld [vmem:[#allocation11 + $0x28] sm:$0xf]
    %v667 = vld [vmem:[#allocation11 + $0x2c] sm:$0xf]
    %v668 = vld [vmem:[#allocation11 + $0x30] sm:$0xf]
    %v669 = vld [vmem:[#allocation11 + $0x34] sm:$0xf]
    %v670 = vld [vmem:[#allocation11 + $0x38] sm:$0xf]
    %v671 = vld [vmem:[#allocation11 + $0x3c] sm:$0xf]
    %v672 = vld [vmem:[%s7] sm:$0x1]
    %v674 = vlaneseq
    %v675 = vshrl.u32 %v674, 7
    %v676 = vsub.s32 0, %v675
    %v677 = vrot.slane %v672, %v676
    %v695 = vunpack.c.l.b16 %v656
    %v696 = vunpack.c.l.b16 %v657
    %v697 = vunpack.c.l.b16 %v658
    %v698 = vunpack.c.l.b16 %v659
    %v699 = vunpack.c.l.b16 %v660
    %v700 = vunpack.c.l.b16 %v661
    %v701 = vunpack.c.l.b16 %v662
    %v702 = vunpack.c.l.b16 %v663
    %v703 = vunpack.c.l.b16 %v664
    %v704 = vunpack.c.l.b16 %v665
    %v705 = vunpack.c.l.b16 %v666
    %v706 = vunpack.c.l.b16 %v667
    %v707 = vunpack.c.l.b16 %v668
    %v708 = vunpack.c.l.b16 %v669
    %v709 = vunpack.c.l.b16 %v670
    %v710 = vunpack.c.l.b16 %v671
    %v711 = vpack.c.b16 %v696, %v695
    %v712 = vpack.c.b16 %v698, %v697
    %v713 = vpack.c.b16 %v700, %v699
    %v714 = vpack.c.b16 %v702, %v701
    %v715 = vpack.c.b16 %v704, %v703
    %v716 = vpack.c.b16 %v706, %v705
    %v717 = vpack.c.b16 %v708, %v707
    %v718 = vpack.c.b16 %v710, %v709
    %727 = vmatprep.subr.bf16.mxu0 0
    %728 = vmatpush1.bf16.msra.mxu0 %v711
    %729 = vmatprep.subr.bf16.mxu0 0
    %730 = vmatpush1.bf16.msra.mxu0 %v712
    %731 = vmatprep.subr.bf16.mxu0 0
    %732 = vmatpush1.bf16.msra.mxu0 %v713
    %733 = vmatprep.subr.bf16.mxu0 0
    %734 = vmatpush1.bf16.msra.mxu0 %v714
    %735 = vmatprep.subr.bf16.mxu0 0
    %736 = vmatpush1.bf16.msra.mxu0 %v715
    %737 = vmatprep.subr.bf16.mxu0 0
    %738 = vmatpush1.bf16.msra.mxu0 %v716
    %739 = vmatprep.subr.bf16.mxu0 0
    %740 = vmatpush1.bf16.msra.mxu0 %v717
    %741 = vmatprep.subr.bf16.mxu0 0
    %742 = vmatpush1.bf16.msra.mxu0 %v718
    %743 = vmatprep.subr.bf16.mxu0 0
    %744 = vmatpush1.bf16.msra.mxu0 0
    %745 = vmatprep.subr.bf16.mxu0 0
    %746 = vmatpush1.bf16.msra.mxu0 0
    %747 = vmatprep.subr.bf16.mxu0 0
    %748 = vmatpush1.bf16.msra.mxu0 0
    %749 = vmatprep.subr.bf16.mxu0 0
    %750 = vmatpush1.bf16.msra.mxu0 0
    %751 = vmatprep.subr.bf16.mxu0 0
    %752 = vmatpush1.bf16.msra.mxu0 0
    %753 = vmatprep.subr.bf16.mxu0 0
    %754 = vmatpush1.bf16.msra.mxu0 0
    %755 = vmatprep.subr.bf16.mxu0 0
    %756 = vmatpush1.bf16.msra.mxu0 0
    %757 = vmatprep.subr.bf16.mxu0 0
    %758 = vmatpush1.bf16.msra.mxu0 0
    %759 = vmatprep.mubr.bf16.mxu0 0
    %760 = vmatmul.mubr.bf16.gmra.mrb[0].mxu0 %v655
    %v761 = vpop.f32.mrb[0].mxu0
    %v762 = vadd.f32 %v677, %v761
    %v763 = vpop.f32.mrb[0].mxu0
    %v764 = vpop.f32.mrb[0].mxu0
    %v765 = vpop.f32.mrb[0].mxu0
    %766 = vdwg.mxu0
    %767 = vmax.xlane.f32.xlu0 %v762
    %v768 = vpop.xlane.xlu0 %767
    %v769 = vsub.f32 %v762, %v768
    %v770 = vmul.f32 %v769, 1.442695
    %v771 = vpow.pop %v770
    %772 = vadd.xlane.f32.xlu0 %v771
    %v773 = vpop.xlane.xlu0 %772
    %v774 = vrcp.pop %v773
    %v775 = vmul.f32 %v771, %v774
    %v776 = vpack.c.bf16 %v775, %v775
    %v777 = vld [vmem:[#allocation14] sm:$0xf]
    %v778 = vld [vmem:[#allocation14 + $0x4] sm:$0xf]
    %v779 = vld [vmem:[#allocation14 + $0x8] sm:$0xf]
    %v780 = vld [vmem:[#allocation14 + $0xc] sm:$0xf]
    %v781 = vld [vmem:[#allocation14 + $0x10] sm:$0xf]
    %v782 = vld [vmem:[#allocation14 + $0x14] sm:$0xf]
    %v783 = vld [vmem:[#allocation14 + $0x18] sm:$0xf]
    %v784 = vld [vmem:[#allocation14 + $0x1c] sm:$0xf]
    %v785 = vld [vmem:[#allocation14 + $0x20] sm:$0xf]
    %v786 = vld [vmem:[#allocation14 + $0x24] sm:$0xf]
    %v787 = vld [vmem:[#allocation14 + $0x28] sm:$0xf]
    %v788 = vld [vmem:[#allocation14 + $0x2c] sm:$0xf]
    %v789 = vld [vmem:[#allocation14 + $0x30] sm:$0xf]
    %v790 = vld [vmem:[#allocation14 + $0x34] sm:$0xf]
    %v791 = vld [vmem:[#allocation14 + $0x38] sm:$0xf]
    %v792 = vld [vmem:[#allocation14 + $0x3c] sm:$0xf]
    %v809 = vunpack.c.l.b16 %v777
    %v810 = vunpack.c.l.b16 %v778
    %v811 = vunpack.c.l.b16 %v779
    %v812 = vunpack.c.l.b16 %v780
    %v813 = vunpack.c.l.b16 %v781
    %v814 = vunpack.c.l.b16 %v782
    %v815 = vunpack.c.l.b16 %v783
    %v816 = vunpack.c.l.b16 %v784
    %v817 = vunpack.c.l.b16 %v785
    %v818 = vunpack.c.l.b16 %v786
    %v819 = vunpack.c.l.b16 %v787
    %v820 = vunpack.c.l.b16 %v788
    %v821 = vunpack.c.l.b16 %v789
    %v822 = vunpack.c.l.b16 %v790
    %v823 = vunpack.c.l.b16 %v791
    %v824 = vunpack.c.l.b16 %v792
    %v825 = vpack.c.b16 %v810, %v809
    %v826 = vpack.c.b16 %v812, %v811
    %v827 = vpack.c.b16 %v814, %v813
    %v828 = vpack.c.b16 %v816, %v815
    %v829 = vpack.c.b16 %v818, %v817
    %v830 = vpack.c.b16 %v820, %v819
    %v831 = vpack.c.b16 %v822, %v821
    %v832 = vpack.c.b16 %v824, %v823
    %841 = vmatprep.subr.bf16.mxu0 0
    %842 = vmatpush1.bf16.msra.mxu0 %v825
    %843 = vmatprep.subr.bf16.mxu0 0
    %844 = vmatpush1.bf16.msra.mxu0 %v826
    %845 = vmatprep.subr.bf16.mxu0 0
    %846 = vmatpush1.bf16.msra.mxu0 %v827
    %847 = vmatprep.subr.bf16.mxu0 0
    %848 = vmatpush1.bf16.msra.mxu0 %v828
    %849 = vmatprep.subr.bf16.mxu0 0
    %850 = vmatpush1.bf16.msra.mxu0 %v829
    %851 = vmatprep.subr.bf16.mxu0 0
    %852 = vmatpush1.bf16.msra.mxu0 %v830
    %853 = vmatprep.subr.bf16.mxu0 0
    %854 = vmatpush1.bf16.msra.mxu0 %v831
    %855 = vmatprep.subr.bf16.mxu0 0
    %856 = vmatpush1.bf16.msra.mxu0 %v832
    %857 = vmatprep.subr.bf16.mxu0 0
    %858 = vmatpush1.bf16.msra.mxu0 0
    %859 = vmatprep.subr.bf16.mxu0 0
    %860 = vmatpush1.bf16.msra.mxu0 0
    %861 = vmatprep.subr.bf16.mxu0 0
    %862 = vmatpush1.bf16.msra.mxu0 0
    %863 = vmatprep.subr.bf16.mxu0 0
    %864 = vmatpush1.bf16.msra.mxu0 0
    %865 = vmatprep.subr.bf16.mxu0 0
    %866 = vmatpush1.bf16.msra.mxu0 0
    %867 = vmatprep.subr.bf16.mxu0 0
    %868 = vmatpush1.bf16.msra.mxu0 0
    %869 = vmatprep.subr.bf16.mxu0 0
    %870 = vmatpush1.bf16.msra.mxu0 0
    %871 = vmatprep.subr.bf16.mxu0 0
    %872 = vmatpush1.bf16.msra.mxu0 0
    %873 = vmatprep.mubr.bf16.mxu0 0
    %874 = vmatmul.mubr.bf16.gmra.mrb[0].mxu0 %v776
    %v875 = vpop.f32.mrb[0].mxu0
    %v876 = vadd.f32 0.0, %v875
    %v877 = vpop.f32.mrb[0].mxu0
    %v878 = vpop.f32.mrb[0].mxu0
    %v879 = vpop.f32.mrb[0].mxu0
    %880 = vdwg.mxu0
    %v881 = vmul.f32 %v654, %v654
    %v882 = vsub.f32 1.0, %v881
    %v883 = vmul.f32 %v876, %v882
    %v884 = vpack.c.bf16 %v883, %v883
    %v885 = vld [vmem:[#allocation12] sm:$0xff]
    %v886 = vld [vmem:[#allocation12 + $0x8] sm:$0xff]
    %v887 = vld [vmem:[#allocation12 + $0x10] sm:$0xff]
    %v888 = vld [vmem:[#allocation12 + $0x18] sm:$0xff]
    %v889 = vld [vmem:[#allocation12 + $0x20] sm:$0xff]
    %v890 = vld [vmem:[#allocation12 + $0x28] sm:$0xff]
    %v891 = vld [vmem:[#allocation12 + $0x30] sm:$0xff]
    %v892 = vld [vmem:[#allocation12 + $0x38] sm:$0xff]
    %v893 = vld [vmem:[#allocation12 + $0x40] sm:$0xff]
    %v894 = vld [vmem:[#allocation12 + $0x48] sm:$0xff]
    %v895 = vld [vmem:[#allocation12 + $0x50] sm:$0xff]
    %v896 = vld [vmem:[#allocation12 + $0x58] sm:$0xff]
    %v897 = vld [vmem:[#allocation12 + $0x60] sm:$0xff]
    %v898 = vld [vmem:[#allocation12 + $0x68] sm:$0xff]
    %v899 = vld [vmem:[#allocation12 + $0x70] sm:$0xff]
    %v900 = vld [vmem:[#allocation12 + $0x78] sm:$0xff]
    %v901 = vld [vmem:[#allocation12 + $0x80] sm:$0xff]
    %v902 = vld [vmem:[#allocation12 + $0x88] sm:$0xff]
    %v903 = vld [vmem:[#allocation12 + $0x90] sm:$0xff]
    %v904 = vld [vmem:[#allocation12 + $0x98] sm:$0xff]
    %v905 = vld [vmem:[#allocation12 + $0xa0] sm:$0xff]
    %v906 = vld [vmem:[#allocation12 + $0xa8] sm:$0xff]
    %v907 = vld [vmem:[#allocation12 + $0xb0] sm:$0xff]
    %v908 = vld [vmem:[#allocation12 + $0xb8] sm:$0xff]
    %v909 = vld [vmem:[#allocation12 + $0xc0] sm:$0xff]
    %v910 = vld [vmem:[#allocation12 + $0xc8] sm:$0xff]
    %v911 = vld [vmem:[#allocation12 + $0xd0] sm:$0xff]
    %v912 = vld [vmem:[#allocation12 + $0xd8] sm:$0xff]
    %v913 = vld [vmem:[#allocation12 + $0xe0] sm:$0xff]
    %v914 = vld [vmem:[#allocation12 + $0xe8] sm:$0xff]
    %v915 = vld [vmem:[#allocation12 + $0xf0] sm:$0xff]
    %v916 = vld [vmem:[#allocation12 + $0xf8] sm:$0xff]
    %v917 = vld [vmem:[#allocation12 + $0x100] sm:$0xff]
    %v918 = vld [vmem:[#allocation12 + $0x108] sm:$0xff]
    %v919 = vld [vmem:[#allocation12 + $0x110] sm:$0xff]
    %v920 = vld [vmem:[#allocation12 + $0x118] sm:$0xff]
    %v921 = vld [vmem:[#allocation12 + $0x120] sm:$0xff]
    %v922 = vld [vmem:[#allocation12 + $0x128] sm:$0xff]
    %v923 = vld [vmem:[#allocation12 + $0x130] sm:$0xff]
    %v924 = vld [vmem:[#allocation12 + $0x138] sm:$0xff]
    %v925 = vld [vmem:[#allocation12 + $0x140] sm:$0xff]
    %v926 = vld [vmem:[#allocation12 + $0x148] sm:$0xff]
    %v927 = vld [vmem:[#allocation12 + $0x150] sm:$0xff]
    %v928 = vld [vmem:[#allocation12 + $0x158] sm:$0xff]
    %v929 = vld [vmem:[#allocation12 + $0x160] sm:$0xff]
    %v930 = vld [vmem:[#allocation12 + $0x168] sm:$0xff]
    %v931 = vld [vmem:[#allocation12 + $0x170] sm:$0xff]
    %v932 = vld [vmem:[#allocation12 + $0x178] sm:$0xff]
    %v981 = vunpack.c.l.b16 %v885
    %v982 = vunpack.c.h.b16 %v885
    %v983 = vunpack.c.l.b16 %v886
    %v984 = vunpack.c.h.b16 %v886
    %v985 = vunpack.c.l.b16 %v887
    %v986 = vunpack.c.h.b16 %v887
    %v987 = vunpack.c.l.b16 %v888
    %v988 = vunpack.c.h.b16 %v888
    %v989 = vunpack.c.l.b16 %v889
    %v990 = vunpack.c.h.b16 %v889
    %v991 = vunpack.c.l.b16 %v890
    %v992 = vunpack.c.h.b16 %v890
    %v993 = vunpack.c.l.b16 %v891
    %v994 = vunpack.c.h.b16 %v891
    %v995 = vunpack.c.l.b16 %v892
    %v996 = vunpack.c.h.b16 %v892
    %v997 = vunpack.c.l.b16 %v893
    %v998 = vunpack.c.h.b16 %v893
    %v999 = vunpack.c.l.b16 %v894
    %v1000 = vunpack.c.h.b16 %v894
    %v1001 = vunpack.c.l.b16 %v895
    %v1002 = vunpack.c.h.b16 %v895
    %v1003 = vunpack.c.l.b16 %v896
    %v1004 = vunpack.c.h.b16 %v896
    %v1005 = vunpack.c.l.b16 %v897
    %v1006 = vunpack.c.h.b16 %v897
    %v1007 = vunpack.c.l.b16 %v898
    %v1008 = vunpack.c.h.b16 %v898
    %v1009 = vunpack.c.l.b16 %v899
    %v1010 = vunpack.c.h.b16 %v899
    %v1011 = vunpack.c.l.b16 %v900
    %v1012 = vunpack.c.h.b16 %v900
    %v1013 = vunpack.c.l.b16 %v901
    %v1014 = vunpack.c.h.b16 %v901
    %v1015 = vunpack.c.l.b16 %v902
    %v1016 = vunpack.c.h.b16 %v902
    %v1017 = vunpack.c.l.b16 %v903
    %v1018 = vunpack.c.h.b16 %v903
    %v1019 = vunpack.c.l.b16 %v904
    %v1020 = vunpack.c.h.b16 %v904
    %v1021 = vunpack.c.l.b16 %v905
    %v1022 = vunpack.c.h.b16 %v905
    %v1023 = vunpack.c.l.b16 %v906
    %v1024 = vunpack.c.h.b16 %v906
    %v1025 = vunpack.c.l.b16 %v907
    %v1026 = vunpack.c.h.b16 %v907
    %v1027 = vunpack.c.l.b16 %v908
    %v1028 = vunpack.c.h.b16 %v908
    %v1029 = vunpack.c.l.b16 %v909
    %v1030 = vunpack.c.h.b16 %v909
    %v1031 = vunpack.c.l.b16 %v910
    %v1032 = vunpack.c.h.b16 %v910
    %v1033 = vunpack.c.l.b16 %v911
    %v1034 = vunpack.c.h.b16 %v911
    %v1035 = vunpack.c.l.b16 %v912
    %v1036 = vunpack.c.h.b16 %v912
    %v1037 = vunpack.c.l.b16 %v913
    %v1038 = vunpack.c.h.b16 %v913
    %v1039 = vunpack.c.l.b16 %v914
    %v1040 = vunpack.c.h.b16 %v914
    %v1041 = vunpack.c.l.b16 %v915
    %v1042 = vunpack.c.h.b16 %v915
    %v1043 = vunpack.c.l.b16 %v916
    %v1044 = vunpack.c.h.b16 %v916
    %v1045 = vunpack.c.l.b16 %v917
    %v1046 = vunpack.c.h.b16 %v917
    %v1047 = vunpack.c.l.b16 %v918
    %v1048 = vunpack.c.h.b16 %v918
    %v1049 = vunpack.c.l.b16 %v919
    %v1050 = vunpack.c.h.b16 %v919
    %v1051 = vunpack.c.l.b16 %v920
    %v1052 = vunpack.c.h.b16 %v920
    %v1053 = vunpack.c.l.b16 %v921
    %v1054 = vunpack.c.h.b16 %v921
    %v1055 = vunpack.c.l.b16 %v922
    %v1056 = vunpack.c.h.b16 %v922
    %v1057 = vunpack.c.l.b16 %v923
    %v1058 = vunpack.c.h.b16 %v923
    %v1059 = vunpack.c.l.b16 %v924
    %v1060 = vunpack.c.h.b16 %v924
    %v1061 = vunpack.c.l.b16 %v925
    %v1062 = vunpack.c.h.b16 %v925
    %v1063 = vunpack.c.l.b16 %v926
    %v1064 = vunpack.c.h.b16 %v926
    %v1065 = vunpack.c.l.b16 %v927
    %v1066 = vunpack.c.h.b16 %v927
    %v1067 = vunpack.c.l.b16 %v928
    %v1068 = vunpack.c.h.b16 %v928
    %v1069 = vunpack.c.l.b16 %v929
    %v1070 = vunpack.c.h.b16 %v929
    %v1071 = vunpack.c.l.b16 %v930
    %v1072 = vunpack.c.h.b16 %v930
    %v1073 = vunpack.c.l.b16 %v931
    %v1074 = vunpack.c.h.b16 %v931
    %v1075 = vunpack.c.l.b16 %v932
    %v1076 = vunpack.c.h.b16 %v932
    %v1077 = vpack.c.b16 %v987, %v981
    %v1078 = vpack.c.b16 %v988, %v982
    %v1079 = vpack.c.b16 %v989, %v983
    %v1080 = vpack.c.b16 %v990, %v984
    %v1081 = vpack.c.b16 %v991, %v985
    %v1082 = vpack.c.b16 %v992, %v986
    %v1083 = vpack.c.b16 %v999, %v993
    %v1084 = vpack.c.b16 %v1000, %v994
    %v1085 = vpack.c.b16 %v1001, %v995
    %v1086 = vpack.c.b16 %v1002, %v996
    %v1087 = vpack.c.b16 %v1003, %v997
    %v1088 = vpack.c.b16 %v1004, %v998
    %v1089 = vpack.c.b16 %v1011, %v1005
    %v1090 = vpack.c.b16 %v1012, %v1006
    %v1091 = vpack.c.b16 %v1013, %v1007
    %v1092 = vpack.c.b16 %v1014, %v1008
    %v1093 = vpack.c.b16 %v1015, %v1009
    %v1094 = vpack.c.b16 %v1016, %v1010
    %v1095 = vpack.c.b16 %v1023, %v1017
    %v1096 = vpack.c.b16 %v1024, %v1018
    %v1097 = vpack.c.b16 %v1025, %v1019
    %v1098 = vpack.c.b16 %v1026, %v1020
    %v1099 = vpack.c.b16 %v1027, %v1021
    %v1100 = vpack.c.b16 %v1028, %v1022
    %v1101 = vpack.c.b16 %v1035, %v1029
    %v1102 = vpack.c.b16 %v1036, %v1030
    %v1103 = vpack.c.b16 %v1037, %v1031
    %v1104 = vpack.c.b16 %v1038, %v1032
    %v1105 = vpack.c.b16 %v1039, %v1033
    %v1106 = vpack.c.b16 %v1040, %v1034
    %v1107 = vpack.c.b16 %v1047, %v1041
    %v1108 = vpack.c.b16 %v1048, %v1042
    %v1109 = vpack.c.b16 %v1049, %v1043
    %v1110 = vpack.c.b16 %v1050, %v1044
    %v1111 = vpack.c.b16 %v1051, %v1045
    %v1112 = vpack.c.b16 %v1052, %v1046
    %v1113 = vpack.c.b16 %v1059, %v1053
    %v1114 = vpack.c.b16 %v1060, %v1054
    %v1115 = vpack.c.b16 %v1061, %v1055
    %v1116 = vpack.c.b16 %v1062, %v1056
    %v1117 = vpack.c.b16 %v1063, %v1057
    %v1118 = vpack.c.b16 %v1064, %v1058
    %v1119 = vpack.c.b16 %v1071, %v1065
    %v1120 = vpack.c.b16 %v1072, %v1066
    %v1121 = vpack.c.b16 %v1073, %v1067
    %v1122 = vpack.c.b16 %v1074, %v1068
    %v1123 = vpack.c.b16 %v1075, %v1069
    %v1124 = vpack.c.b16 %v1076, %v1070
    %1173 = vmatprep.subr.bf16.mxu0 %v1078
    %1174 = vmatpush1.bf16.msra.mxu0 %v1077
    %1175 = vmatprep.subr.bf16.mxu0 %v1084
    %1176 = vmatpush1.bf16.msra.mxu0 %v1083
    %1177 = vmatprep.subr.bf16.mxu0 %v1090
    %1178 = vmatpush1.bf16.msra.mxu0 %v1089
    %1179 = vmatprep.subr.bf16.mxu0 %v1096
    %1180 = vmatpush1.bf16.msra.mxu0 %v1095
    %1181 = vmatprep.subr.bf16.mxu0 %v1102
    %1182 = vmatpush1.bf16.msra.mxu0 %v1101
    %1183 = vmatprep.subr.bf16.mxu0 %v1108
    %1184 = vmatpush1.bf16.msra.mxu0 %v1107
    %1185 = vmatprep.subr.bf16.mxu0 %v1114
    %1186 = vmatpush1.bf16.msra.mxu0 %v1113
    %1187 = vmatprep.subr.bf16.mxu0 %v1120
    %1188 = vmatpush1.bf16.msra.mxu0 %v1119
    %1189 = vmatprep.subr.bf16.mxu0 0
    %1190 = vmatpush1.bf16.msra.mxu0 0
    %1191 = vmatprep.subr.bf16.mxu0 0
    %1192 = vmatpush1.bf16.msra.mxu0 0
    %1193 = vmatprep.subr.bf16.mxu0 0
    %1194 = vmatpush1.bf16.msra.mxu0 0
    %1195 = vmatprep.subr.bf16.mxu0 0
    %1196 = vmatpush1.bf16.msra.mxu0 0
    %1197 = vmatprep.subr.bf16.mxu0 0
    %1198 = vmatpush1.bf16.msra.mxu0 0
    %1199 = vmatprep.subr.bf16.mxu0 0
    %1200 = vmatpush1.bf16.msra.mxu0 0
    %1201 = vmatprep.subr.bf16.mxu0 0
    %1202 = vmatpush1.bf16.msra.mxu0 0
    %1203 = vmatprep.subr.bf16.mxu0 0
    %1204 = vmatpush1.bf16.msra.mxu0 0
    %1205 = vmatprep.mubr.bf16.mxu0 0
    %1206 = vmatmul.mubr.bf16.gmra.mrb[0].mxu0 %v884
    %v1207 = vpop.f32.mrb[0].mxu0
    %v1208 = vadd.f32 0.0, %v1207
    %v1209 = vpop.f32.mrb[0].mxu0
    %v1210 = vadd.f32 0.0, %v1209
    %v1211 = vpop.f32.mrb[0].mxu0
    %v1212 = vpop.f32.mrb[0].mxu0
    %1213 = vdwg.mxu0
    %1214 = vmatprep.subr.bf16.mxu0 %v1080
    %1215 = vmatpush1.bf16.msra.mxu0 %v1079
    %1216 = vmatprep.subr.bf16.mxu0 %v1086
    %1217 = vmatpush1.bf16.msra.mxu0 %v1085
    %1218 = vmatprep.subr.bf16.mxu0 %v1092
    %1219 = vmatpush1.bf16.msra.mxu0 %v1091
    %1220 = vmatprep.subr.bf16.mxu0 %v1098
    %1221 = vmatpush1.bf16.msra.mxu0 %v1097
    %1222 = vmatprep.subr.bf16.mxu0 %v1104
    %1223 = vmatpush1.bf16.msra.mxu0 %v1103
    %1224 = vmatprep.subr.bf16.mxu0 %v1110
    %1225 = vmatpush1.bf16.msra.mxu0 %v1109
    %1226 = vmatprep.subr.bf16.mxu0 %v1116
    %1227 = vmatpush1.bf16.msra.mxu0 %v1115
    %1228 = vmatprep.subr.bf16.mxu0 %v1122
    %1229 = vmatpush1.bf16.msra.mxu0 %v1121
    %1230 = vmatprep.subr.bf16.mxu0 0
    %1231 = vmatpush1.bf16.msra.mxu0 0
    %1232 = vmatprep.subr.bf16.mxu0 0
    %1233 = vmatpush1.bf16.msra.mxu0 0
    %1234 = vmatprep.subr.bf16.mxu0 0
    %1235 = vmatpush1.bf16.msra.mxu0 0
    %1236 = vmatprep.subr.bf16.mxu0 0
    %1237 = vmatpush1.bf16.msra.mxu0 0
    %1238 = vmatprep.subr.bf16.mxu0 0
    %1239 = vmatpush1.bf16.msra.mxu0 0
    %1240 = vmatprep.subr.bf16.mxu0 0
    %1241 = vmatpush1.bf16.msra.mxu0 0
    %1242 = vmatprep.subr.bf16.mxu0 0
    %1243 = vmatpush1.bf16.msra.mxu0 0
    %1244 = vmatprep.subr.bf16.mxu0 0
    %1245 = vmatpush1.bf16.msra.mxu0 0
    %1246 = vmatprep.mubr.bf16.mxu0 0
    %1247 = vmatmul.mubr.bf16.gmra.mrb[0].mxu0 %v884
    %v1248 = vpop.f32.mrb[0].mxu0
    %v1249 = vadd.f32 0.0, %v1248
    %v1250 = vpop.f32.mrb[0].mxu0
    %v1251 = vadd.f32 0.0, %v1250
    %v1252 = vpop.f32.mrb[0].mxu0
    %v1253 = vpop.f32.mrb[0].mxu0
    %1254 = vdwg.mxu0
    %1255 = vmatprep.subr.bf16.mxu0 %v1082
    %1256 = vmatpush1.bf16.msra.mxu0 %v1081
    %1257 = vmatprep.subr.bf16.mxu0 %v1088
    %1258 = vmatpush1.bf16.msra.mxu0 %v1087
    %1259 = vmatprep.subr.bf16.mxu0 %v1094
    %1260 = vmatpush1.bf16.msra.mxu0 %v1093
    %1261 = vmatprep.subr.bf16.mxu0 %v1100
    %1262 = vmatpush1.bf16.msra.mxu0 %v1099
    %1263 = vmatprep.subr.bf16.mxu0 %v1106
    %1264 = vmatpush1.bf16.msra.mxu0 %v1105
    %1265 = vmatprep.subr.bf16.mxu0 %v1112
    %1266 = vmatpush1.bf16.msra.mxu0 %v1111
    %1267 = vmatprep.subr.bf16.mxu0 %v1118
    %1268 = vmatpush1.bf16.msra.mxu0 %v1117
    %1269 = vmatprep.subr.bf16.mxu0 %v1124
    %1270 = vmatpush1.bf16.msra.mxu0 %v1123
    %1271 = vmatprep.subr.bf16.mxu0 0
    %1272 = vmatpush1.bf16.msra.mxu0 0
    %1273 = vmatprep.subr.bf16.mxu0 0
    %1274 = vmatpush1.bf16.msra.mxu0 0
    %1275 = vmatprep.subr.bf16.mxu0 0
    %1276 = vmatpush1.bf16.msra.mxu0 0
    %1277 = vmatprep.subr.bf16.mxu0 0
    %1278 = vmatpush1.bf16.msra.mxu0 0
    %1279 = vmatprep.subr.bf16.mxu0 0
    %1280 = vmatpush1.bf16.msra.mxu0 0
    %1281 = vmatprep.subr.bf16.mxu0 0
    %1282 = vmatpush1.bf16.msra.mxu0 0
    %1283 = vmatprep.subr.bf16.mxu0 0
    %1284 = vmatpush1.bf16.msra.mxu0 0
    %1285 = vmatprep.subr.bf16.mxu0 0
    %1286 = vmatpush1.bf16.msra.mxu0 0
    %1287 = vmatprep.mubr.bf16.mxu0 0
    %1288 = vmatmul.mubr.bf16.gmra.mrb[0].mxu0 %v884
    %v1289 = vpop.f32.mrb[0].mxu0
    %v1290 = vadd.f32 0.0, %v1289
    %v1291 = vpop.f32.mrb[0].mxu0
    %v1292 = vadd.f32 0.0, %v1291
    %v1293 = vpop.f32.mrb[0].mxu0
    %v1294 = vpop.f32.mrb[0].mxu0
    %1295 = vdwg.mxu0
    %v1296 = vadd.f32 %v131, %v1208
    %v1297 = vadd.f32 %v132, %v1210
    %v1298 = vadd.f32 %v133, %v1249
    %v1299 = vadd.f32 %v134, %v1251
    %v1300 = vadd.f32 %v135, %v1290
    %v1301 = vadd.f32 %v136, %v1292
    %v1302 = vld [vmem:[#allocation8] sm:$0xff]
    %v1303 = vld [vmem:[#allocation8 + $0x8] sm:$0xff]
    %v1304 = vld [vmem:[#allocation8 + $0x10] sm:$0xff]
    %v1305 = vld [vmem:[#allocation8 + $0x18] sm:$0xff]
    %v1306 = vld [vmem:[#allocation8 + $0x20] sm:$0xff]
    %v1307 = vld [vmem:[#allocation8 + $0x28] sm:$0xff]
    %v1308 = vadd.f32 %v1296, %v1302
    %v1309 = vadd.f32 %v1297, %v1303
    %v1310 = vadd.f32 %v1298, %v1304
    %v1311 = vadd.f32 %v1299, %v1305
    %v1312 = vadd.f32 %v1300, %v1306
    %v1313 = vadd.f32 %v1301, %v1307
    %v1314 = vpack.c.bf16 %v1308, %v1308
    %v1315 = vpack.c.bf16 %v1309, %v1309
    %v1316 = vpack.c.bf16 %v1310, %v1310
    %v1317 = vpack.c.bf16 %v1311, %v1311
    %v1318 = vpack.c.bf16 %v1312, %v1312
    %v1319 = vpack.c.bf16 %v1313, %v1313
    %1320 = vmatprep.subr.bf16.mxu0 0
    %1321 = vmatpush1.bf16.msra.mxu0 %v438
    %1322 = vmatprep.subr.bf16.mxu0 0
    %1323 = vmatpush1.bf16.msra.mxu0 %v439
    %1324 = vmatprep.subr.bf16.mxu0 0
    %1325 = vmatpush1.bf16.msra.mxu0 %v440
    %1326 = vmatprep.subr.bf16.mxu0 0
    %1327 = vmatpush1.bf16.msra.mxu0 %v441
    %1328 = vmatprep.subr.bf16.mxu0 0
    %1329 = vmatpush1.bf16.msra.mxu0 %v442
    %1330 = vmatprep.subr.bf16.mxu0 0
    %1331 = vmatpush1.bf16.msra.mxu0 %v443
    %1332 = vmatprep.subr.bf16.mxu0 0
    %1333 = vmatpush1.bf16.msra.mxu0 %v444
    %1334 = vmatprep.subr.bf16.mxu0 0
    %1335 = vmatpush1.bf16.msra.mxu0 %v445
    %1336 = vmatprep.subr.bf16.mxu0 0
    %1337 = vmatpush1.bf16.msra.mxu0 %v446
    %1338 = vmatprep.subr.bf16.mxu0 0
    %1339 = vmatpush1.bf16.msra.mxu0 %v447
    %1340 = vmatprep.subr.bf16.mxu0 0
    %1341 = vmatpush1.bf16.msra.mxu0 %v448
    %1342 = vmatprep.subr.bf16.mxu0 0
    %1343 = vmatpush1.bf16.msra.mxu0 %v449
    %1344 = vmatprep.subr.bf16.mxu0 0
    %1345 = vmatpush1.bf16.msra.mxu0 %v450
    %1346 = vmatprep.subr.bf16.mxu0 0
    %1347 = vmatpush1.bf16.msra.mxu0 %v451
    %1348 = vmatprep.subr.bf16.mxu0 0
    %1349 = vmatpush1.bf16.msra.mxu0 %v452
    %1350 = vmatprep.subr.bf16.mxu0 0
    %1351 = vmatpush1.bf16.msra.mxu0 %v453
    %1352 = vmatprep.mubr.bf16.mxu0 %v1315
    %1353 = vmatmul.mubr.bf16.gmra.mrb[0].mxu0 %v1314
    %v1354 = vpop.f32.mrb[0].mxu0
    %v1355 = vadd.f32 %v244, %v1354
    %v1356 = vpop.f32.mrb[0].mxu0
    %v1357 = vpop.f32.mrb[0].mxu0
    %v1358 = vpop.f32.mrb[0].mxu0
    %1359 = vdwg.mxu0
    %1360 = vmatprep.subr.bf16.mxu0 0
    %1361 = vmatpush1.bf16.msra.mxu0 %v454
    %1362 = vmatprep.subr.bf16.mxu0 0
    %1363 = vmatpush1.bf16.msra.mxu0 %v455
    %1364 = vmatprep.subr.bf16.mxu0 0
    %1365 = vmatpush1.bf16.msra.mxu0 %v456
    %1366 = vmatprep.subr.bf16.mxu0 0
    %1367 = vmatpush1.bf16.msra.mxu0 %v457
    %1368 = vmatprep.subr.bf16.mxu0 0
    %1369 = vmatpush1.bf16.msra.mxu0 %v458
    %1370 = vmatprep.subr.bf16.mxu0 0
    %1371 = vmatpush1.bf16.msra.mxu0 %v459
    %1372 = vmatprep.subr.bf16.mxu0 0
    %1373 = vmatpush1.bf16.msra.mxu0 %v460
    %1374 = vmatprep.subr.bf16.mxu0 0
    %1375 = vmatpush1.bf16.msra.mxu0 %v461
    %1376 = vmatprep.subr.bf16.mxu0 0
    %1377 = vmatpush1.bf16.msra.mxu0 %v462
    %1378 = vmatprep.subr.bf16.mxu0 0
    %1379 = vmatpush1.bf16.msra.mxu0 %v463
    %1380 = vmatprep.subr.bf16.mxu0 0
    %1381 = vmatpush1.bf16.msra.mxu0 %v464
    %1382 = vmatprep.subr.bf16.mxu0 0
    %1383 = vmatpush1.bf16.msra.mxu0 %v465
    %1384 = vmatprep.subr.bf16.mxu0 0
    %1385 = vmatpush1.bf16.msra.mxu0 %v466
    %1386 = vmatprep.subr.bf16.mxu0 0
    %1387 = vmatpush1.bf16.msra.mxu0 %v467
    %1388 = vmatprep.subr.bf16.mxu0 0
    %1389 = vmatpush1.bf16.msra.mxu0 %v468
    %1390 = vmatprep.subr.bf16.mxu0 0
    %1391 = vmatpush1.bf16.msra.mxu0 %v469
    %1392 = vmatprep.mubr.bf16.mxu0 %v1317
    %1393 = vmatmul.mubr.bf16.gmra.mrb[0].mxu0 %v1316
    %v1394 = vpop.f32.mrb[0].mxu0
    %v1395 = vadd.f32 %v1355, %v1394
    %v1396 = vpop.f32.mrb[0].mxu0
    %v1397 = vpop.f32.mrb[0].mxu0
    %v1398 = vpop.f32.mrb[0].mxu0
    %1399 = vdwg.mxu0
    %1400 = vmatprep.subr.bf16.mxu0 0
    %1401 = vmatpush1.bf16.msra.mxu0 %v470
    %1402 = vmatprep.subr.bf16.mxu0 0
    %1403 = vmatpush1.bf16.msra.mxu0 %v471
    %1404 = vmatprep.subr.bf16.mxu0 0
    %1405 = vmatpush1.bf16.msra.mxu0 %v472
    %1406 = vmatprep.subr.bf16.mxu0 0
    %1407 = vmatpush1.bf16.msra.mxu0 %v473
    %1408 = vmatprep.subr.bf16.mxu0 0
    %1409 = vmatpush1.bf16.msra.mxu0 %v474
    %1410 = vmatprep.subr.bf16.mxu0 0
    %1411 = vmatpush1.bf16.msra.mxu0 %v475
    %1412 = vmatprep.subr.bf16.mxu0 0
    %1413 = vmatpush1.bf16.msra.mxu0 %v476
    %1414 = vmatprep.subr.bf16.mxu0 0
    %1415 = vmatpush1.bf16.msra.mxu0 %v477
    %1416 = vmatprep.subr.bf16.mxu0 0
    %1417 = vmatpush1.bf16.msra.mxu0 %v478
    %1418 = vmatprep.subr.bf16.mxu0 0
    %1419 = vmatpush1.bf16.msra.mxu0 %v479
    %1420 = vmatprep.subr.bf16.mxu0 0
    %1421 = vmatpush1.bf16.msra.mxu0 %v480
    %1422 = vmatprep.subr.bf16.mxu0 0
    %1423 = vmatpush1.bf16.msra.mxu0 %v481
    %1424 = vmatprep.subr.bf16.mxu0 0
    %1425 = vmatpush1.bf16.msra.mxu0 %v482
    %1426 = vmatprep.subr.bf16.mxu0 0
    %1427 = vmatpush1.bf16.msra.mxu0 %v483
    %1428 = vmatprep.subr.bf16.mxu0 0
    %1429 = vmatpush1.bf16.msra.mxu0 %v484
    %1430 = vmatprep.subr.bf16.mxu0 0
    %1431 = vmatpush1.bf16.msra.mxu0 %v485
    %1432 = vmatprep.mubr.bf16.mxu0 %v1319
    %1433 = vmatmul.mubr.bf16.gmra.mrb[0].mxu0 %v1318
    %v1434 = vpop.f32.mrb[0].mxu0
    %v1435 = vadd.f32 %v1395, %v1434
    %v1436 = vpop.f32.mrb[0].mxu0
    %v1437 = vpop.f32.mrb[0].mxu0
    %v1438 = vpop.f32.mrb[0].mxu0
    %1439 = vdwg.mxu0
    %v1440 = vtanh.pop %v1435
    %v1441 = vpack.c.bf16 %v1440, %v1440
    %1442 = vmatprep.subr.bf16.mxu0 0
    %1443 = vmatpush1.bf16.msra.mxu0 %v711
    %1444 = vmatprep.subr.bf16.mxu0 0
    %1445 = vmatpush1.bf16.msra.mxu0 %v712
    %1446 = vmatprep.subr.bf16.mxu0 0
    %1447 = vmatpush1.bf16.msra.mxu0 %v713
    %1448 = vmatprep.subr.bf16.mxu0 0
    %1449 = vmatpush1.bf16.msra.mxu0 %v714
    %1450 = vmatprep.subr.bf16.mxu0 0
    %1451 = vmatpush1.bf16.msra.mxu0 %v715
    %1452 = vmatprep.subr.bf16.mxu0 0
    %1453 = vmatpush1.bf16.msra.mxu0 %v716
    %1454 = vmatprep.subr.bf16.mxu0 0
    %1455 = vmatpush1.bf16.msra.mxu0 %v717
    %1456 = vmatprep.subr.bf16.mxu0 0
    %1457 = vmatpush1.bf16.msra.mxu0 %v718
    %1458 = vmatprep.subr.bf16.mxu0 0
    %1459 = vmatpush1.bf16.msra.mxu0 0
    %1460 = vmatprep.subr.bf16.mxu0 0
    %1461 = vmatpush1.bf16.msra.mxu0 0
    %1462 = vmatprep.subr.bf16.mxu0 0
    %1463 = vmatpush1.bf16.msra.mxu0 0
    %1464 = vmatprep.subr.bf16.mxu0 0
    %1465 = vmatpush1.bf16.msra.mxu0 0
    %1466 = vmatprep.subr.bf16.mxu0 0
    %1467 = vmatpush1.bf16.msra.mxu0 0
    %1468 = vmatprep.subr.bf16.mxu0 0
    %1469 = vmatpush1.bf16.msra.mxu0 0
    %1470 = vmatprep.subr.bf16.mxu0 0
    %1471 = vmatpush1.bf16.msra.mxu0 0
    %1472 = vmatprep.subr.bf16.mxu0 0
    %1473 = vmatpush1.bf16.msra.mxu0 0
    %1474 = vmatprep.mubr.bf16.mxu0 0
    %1475 = vmatmul.mubr.bf16.gmra.mrb[0].mxu0 %v1441
    %v1476 = vpop.f32.mrb[0].mxu0
    %v1477 = vadd.f32 %v677, %v1476
    %v1478 = vpop.f32.mrb[0].mxu0
    %v1479 = vpop.f32.mrb[0].mxu0
    %v1480 = vpop.f32.mrb[0].mxu0
    %1481 = vdwg.mxu0
    %1482 = vmax.xlane.f32.xlu0 %v1477
    %v1483 = vpop.xlane.xlu0 %1482
    %v1484 = vsub.f32 %v1477, %v1483
    %v1485 = vmul.f32 %v1484, 1.442695
    %v1486 = vpow.pop %v1485
    %1487 = vadd.xlane.f32.xlu0 %v1486
    %v1488 = vpop.xlane.xlu0 %1487
    %v1489 = vrcp.pop %v1488
    %v1490 = vmul.f32 %v1486, %v1489
    %v1491 = vpack.c.bf16 %v1490, %v1490
    %1492 = vmatprep.subr.bf16.mxu0 0
    %1493 = vmatpush1.bf16.msra.mxu0 %v825
    %1494 = vmatprep.subr.bf16.mxu0 0
    %1495 = vmatpush1.bf16.msra.mxu0 %v826
    %1496 = vmatprep.subr.bf16.mxu0 0
    %1497 = vmatpush1.bf16.msra.mxu0 %v827
    %1498 = vmatprep.subr.bf16.mxu0 0
    %1499 = vmatpush1.bf16.msra.mxu0 %v828
    %1500 = vmatprep.subr.bf16.mxu0 0
    %1501 = vmatpush1.bf16.msra.mxu0 %v829
    %1502 = vmatprep.subr.bf16.mxu0 0
    %1503 = vmatpush1.bf16.msra.mxu0 %v830
    %1504 = vmatprep.subr.bf16.mxu0 0
    %1505 = vmatpush1.bf16.msra.mxu0 %v831
    %1506 = vmatprep.subr.bf16.mxu0 0
    %1507 = vmatpush1.bf16.msra.mxu0 %v832
    %1508 = vmatprep.subr.bf16.mxu0 0
    %1509 = vmatpush1.bf16.msra.mxu0 0
    %1510 = vmatprep.subr.bf16.mxu0 0
    %1511 = vmatpush1.bf16.msra.mxu0 0
    %1512 = vmatprep.subr.bf16.mxu0 0
    %1513 = vmatpush1.bf16.msra.mxu0 0
    %1514 = vmatprep.subr.bf16.mxu0 0
    %1515 = vmatpush1.bf16.msra.mxu0 0
    %1516 = vmatprep.subr.bf16.mxu0 0
    %1517 = vmatpush1.bf16.msra.mxu0 0
    %1518 = vmatprep.subr.bf16.mxu0 0
    %1519 = vmatpush1.bf16.msra.mxu0 0
    %1520 = vmatprep.subr.bf16.mxu0 0
    %1521 = vmatpush1.bf16.msra.mxu0 0
    %1522 = vmatprep.subr.bf16.mxu0 0
    %1523 = vmatpush1.bf16.msra.mxu0 0
    %1524 = vmatprep.mubr.bf16.mxu0 0
    %1525 = vmatmul.mubr.bf16.gmra.mrb[0].mxu0 %v1491
    %v1526 = vpop.f32.mrb[0].mxu0
    %v1527 = vadd.f32 0.0, %v1526
    %v1528 = vpop.f32.mrb[0].mxu0
    %v1529 = vpop.f32.mrb[0].mxu0
    %v1530 = vpop.f32.mrb[0].mxu0
    %1531 = vdwg.mxu0
    %v1532 = vmul.f32 %v1440, %v1440
    %v1533 = vsub.f32 1.0, %v1532
    %v1534 = vmul.f32 %v1527, %v1533
    %v1535 = vpack.c.bf16 %v1534, %v1534
    %1536 = vmatprep.subr.bf16.mxu0 %v1078
    %1537 = vmatpush1.bf16.msra.mxu0 %v1077
    %1538 = vmatprep.subr.bf16.mxu0 %v1084
    %1539 = vmatpush1.bf16.msra.mxu0 %v1083
    %1540 = vmatprep.subr.bf16.mxu0 %v1090
    %1541 = vmatpush1.bf16.msra.mxu0 %v1089
    %1542 = vmatprep.subr.bf16.mxu0 %v1096
    %1543 = vmatpush1.bf16.msra.mxu0 %v1095
    %1544 = vmatprep.subr.bf16.mxu0 %v1102
    %1545 = vmatpush1.bf16.msra.mxu0 %v1101
    %1546 = vmatprep.subr.bf16.mxu0 %v1108
    %1547 = vmatpush1.bf16.msra.mxu0 %v1107
    %1548 = vmatprep.subr.bf16.mxu0 %v1114
    %1549 = vmatpush1.bf16.msra.mxu0 %v1113
    %1550 = vmatprep.subr.bf16.mxu0 %v1120
    %1551 = vmatpush1.bf16.msra.mxu0 %v1119
    %1552 = vmatprep.subr.bf16.mxu0 0
    %1553 = vmatpush1.bf16.msra.mxu0 0
    %1554 = vmatprep.subr.bf16.mxu0 0
    %1555 = vmatpush1.bf16.msra.mxu0 0
    %1556 = vmatprep.subr.bf16.mxu0 0
    %1557 = vmatpush1.bf16.msra.mxu0 0
    %1558 = vmatprep.subr.bf16.mxu0 0
    %1559 = vmatpush1.bf16.msra.mxu0 0
    %1560 = vmatprep.subr.bf16.mxu0 0
    %1561 = vmatpush1.bf16.msra.mxu0 0
    %1562 = vmatprep.subr.bf16.mxu0 0
    %1563 = vmatpush1.bf16.msra.mxu0 0
    %1564 = vmatprep.subr.bf16.mxu0 0
    %1565 = vmatpush1.bf16.msra.mxu0 0
    %1566 = vmatprep.subr.bf16.mxu0 0
    %1567 = vmatpush1.bf16.msra.mxu0 0
    %1568 = vmatprep.mubr.bf16.mxu0 0
    %1569 = vmatmul.mubr.bf16.gmra.mrb[0].mxu0 %v1535
    %v1570 = vpop.f32.mrb[0].mxu0
    %v1571 = vadd.f32 0.0, %v1570
    %v1572 = vpop.f32.mrb[0].mxu0
    %v1573 = vadd.f32 0.0, %v1572
    %v1574 = vpop.f32.mrb[0].mxu0
    %v1575 = vpop.f32.mrb[0].mxu0
    %1576 = vdwg.mxu0
    %1577 = vmatprep.subr.bf16.mxu0 %v1080
    %1578 = vmatpush1.bf16.msra.mxu0 %v1079
    %1579 = vmatprep.subr.bf16.mxu0 %v1086
    %1580 = vmatpush1.bf16.msra.mxu0 %v1085
    %1581 = vmatprep.subr.bf16.mxu0 %v1092
    %1582 = vmatpush1.bf16.msra.mxu0 %v1091
    %1583 = vmatprep.subr.bf16.mxu0 %v1098
    %1584 = vmatpush1.bf16.msra.mxu0 %v1097
    %1585 = vmatprep.subr.bf16.mxu0 %v1104
    %1586 = vmatpush1.bf16.msra.mxu0 %v1103
    %1587 = vmatprep.subr.bf16.mxu0 %v1110
    %1588 = vmatpush1.bf16.msra.mxu0 %v1109
    %1589 = vmatprep.subr.bf16.mxu0 %v1116
    %1590 = vmatpush1.bf16.msra.mxu0 %v1115
    %1591 = vmatprep.subr.bf16.mxu0 %v1122
    %1592 = vmatpush1.bf16.msra.mxu0 %v1121
    %1593 = vmatprep.subr.bf16.mxu0 0
    %1594 = vmatpush1.bf16.msra.mxu0 0
    %1595 = vmatprep.subr.bf16.mxu0 0
    %1596 = vmatpush1.bf16.msra.mxu0 0
    %1597 = vmatprep.subr.bf16.mxu0 0
    %1598 = vmatpush1.bf16.msra.mxu0 0
    %1599 = vmatprep.subr.bf16.mxu0 0
    %1600 = vmatpush1.bf16.msra.mxu0 0
    %1601 = vmatprep.subr.bf16.mxu0 0
    %1602 = vmatpush1.bf16.msra.mxu0 0
    %1603 = vmatprep.subr.bf16.mxu0 0
    %1604 = vmatpush1.bf16.msra.mxu0 0
    %1605 = vmatprep.subr.bf16.mxu0 0
    %1606 = vmatpush1.bf16.msra.mxu0 0
    %1607 = vmatprep.subr.bf16.mxu0 0
    %1608 = vmatpush1.bf16.msra.mxu0 0
    %1609 = vmatprep.mubr.bf16.mxu0 0
    %1610 = vmatmul.mubr.bf16.gmra.mrb[0].mxu0 %v1535
    %v1611 = vpop.f32.mrb[0].mxu0
    %v1612 = vadd.f32 0.0, %v1611
    %v1613 = vpop.f32.mrb[0].mxu0
    %v1614 = vadd.f32 0.0, %v1613
    %v1615 = vpop.f32.mrb[0].mxu0
    %v1616 = vpop.f32.mrb[0].mxu0
    %1617 = vdwg.mxu0
    %1618 = vmatprep.subr.bf16.mxu0 %v1082
    %1619 = vmatpush1.bf16.msra.mxu0 %v1081
    %1620 = vmatprep.subr.bf16.mxu0 %v1088
    %1621 = vmatpush1.bf16.msra.mxu0 %v1087
    %1622 = vmatprep.subr.bf16.mxu0 %v1094
    %1623 = vmatpush1.bf16.msra.mxu0 %v1093
    %1624 = vmatprep.subr.bf16.mxu0 %v1100
    %1625 = vmatpush1.bf16.msra.mxu0 %v1099
    %1626 = vmatprep.subr.bf16.mxu0 %v1106
    %1627 = vmatpush1.bf16.msra.mxu0 %v1105
    %1628 = vmatprep.subr.bf16.mxu0 %v1112
    %1629 = vmatpush1.bf16.msra.mxu0 %v1111
    %1630 = vmatprep.subr.bf16.mxu0 %v1118
    %1631 = vmatpush1.bf16.msra.mxu0 %v1117
    %1632 = vmatprep.subr.bf16.mxu0 %v1124
    %1633 = vmatpush1.bf16.msra.mxu0 %v1123
    %1634 = vmatprep.subr.bf16.mxu0 0
    %1635 = vmatpush1.bf16.msra.mxu0 0
    %1636 = vmatprep.subr.bf16.mxu0 0
    %1637 = vmatpush1.bf16.msra.mxu0 0
    %1638 = vmatprep.subr.bf16.mxu0 0
    %1639 = vmatpush1.bf16.msra.mxu0 0
    %1640 = vmatprep.subr.bf16.mxu0 0
    %1641 = vmatpush1.bf16.msra.mxu0 0
    %1642 = vmatprep.subr.bf16.mxu0 0
    %1643 = vmatpush1.bf16.msra.mxu0 0
    %1644 = vmatprep.subr.bf16.mxu0 0
    %1645 = vmatpush1.bf16.msra.mxu0 0
    %1646 = vmatprep.subr.bf16.mxu0 0
    %1647 = vmatpush1.bf16.msra.mxu0 0
    %1648 = vmatprep.subr.bf16.mxu0 0
    %1649 = vmatpush1.bf16.msra.mxu0 0
    %1650 = vmatprep.mubr.bf16.mxu0 0
    %1651 = vmatmul.mubr.bf16.gmra.mrb[0].mxu0 %v1535
    %v1652 = vpop.f32.mrb[0].mxu0
    %v1653 = vadd.f32 0.0, %v1652
    %v1654 = vpop.f32.mrb[0].mxu0
    %v1655 = vadd.f32 0.0, %v1654
    %v1656 = vpop.f32.mrb[0].mxu0
    %v1657 = vpop.f32.mrb[0].mxu0
    %1658 = vdwg.mxu0
    %v1659 = vadd.f32 %v1308, %v1571
    %v1660 = vadd.f32 %v1309, %v1573
    %v1661 = vadd.f32 %v1310, %v1612
    %v1662 = vadd.f32 %v1311, %v1614
    %v1663 = vadd.f32 %v1312, %v1653
    %v1664 = vadd.f32 %v1313, %v1655
    %s1665 = scalar_lea.vmem [#allocation8], 48
    %v1666 = vld [vmem:[%s1665] sm:$0xff]
    %v1667 = vld [vmem:[%s1665 + $0x8] sm:$0xff]
    %v1668 = vld [vmem:[%s1665 + $0x10] sm:$0xff]
    %v1669 = vld [vmem:[%s1665 + $0x18] sm:$0xff]
    %v1670 = vld [vmem:[%s1665 + $0x20] sm:$0xff]
    %v1671 = vld [vmem:[%s1665 + $0x28] sm:$0xff]
    %v1672 = vadd.f32 %v1659, %v1666
    %v1673 = vadd.f32 %v1660, %v1667
    %v1674 = vadd.f32 %v1661, %v1668
    %v1675 = vadd.f32 %v1662, %v1669
    %v1676 = vadd.f32 %v1663, %v1670
    %v1677 = vadd.f32 %v1664, %v1671
    %v1678 = vpack.c.bf16 %v1672, %v1672
    %v1679 = vpack.c.bf16 %v1673, %v1673
    %v1680 = vpack.c.bf16 %v1674, %v1674
    %v1681 = vpack.c.bf16 %v1675, %v1675
    %v1682 = vpack.c.bf16 %v1676, %v1676
    %v1683 = vpack.c.bf16 %v1677, %v1677
    %1684 = vmatprep.subr.bf16.mxu0 0
    %1685 = vmatpush1.bf16.msra.mxu0 %v438
    %1686 = vmatprep.subr.bf16.mxu0 0
    %1687 = vmatpush1.bf16.msra.mxu0 %v439
    %1688 = vmatprep.subr.bf16.mxu0 0
    %1689 = vmatpush1.bf16.msra.mxu0 %v440
    %1690 = vmatprep.subr.bf16.mxu0 0
    %1691 = vmatpush1.bf16.msra.mxu0 %v441
    %1692 = vmatprep.subr.bf16.mxu0 0
    %1693 = vmatpush1.bf16.msra.mxu0 %v442
    %1694 = vmatprep.subr.bf16.mxu0 0
    %1695 = vmatpush1.bf16.msra.mxu0 %v443
    %1696 = vmatprep.subr.bf16.mxu0 0
    %1697 = vmatpush1.bf16.msra.mxu0 %v444
    %1698 = vmatprep.subr.bf16.mxu0 0
    %1699 = vmatpush1.bf16.msra.mxu0 %v445
    %1700 = vmatprep.subr.bf16.mxu0 0
    %1701 = vmatpush1.bf16.msra.mxu0 %v446
    %1702 = vmatprep.subr.bf16.mxu0 0
    %1703 = vmatpush1.bf16.msra.mxu0 %v447
    %1704 = vmatprep.subr.bf16.mxu0 0
    %1705 = vmatpush1.bf16.msra.mxu0 %v448
    %1706 = vmatprep.subr.bf16.mxu0 0
    %1707 = vmatpush1.bf16.msra.mxu0 %v449
    %1708 = vmatprep.subr.bf16.mxu0 0
    %1709 = vmatpush1.bf16.msra.mxu0 %v450
    %1710 = vmatprep.subr.bf16.mxu0 0
    %1711 = vmatpush1.bf16.msra.mxu0 %v451
    %1712 = vmatprep.subr.bf16.mxu0 0
    %1713 = vmatpush1.bf16.msra.mxu0 %v452
    %1714 = vmatprep.subr.bf16.mxu0 0
    %1715 = vmatpush1.bf16.msra.mxu0 %v453
    %1716 = vmatprep.mubr.bf16.mxu0 %v1679
    %1717 = vmatmul.mubr.bf16.gmra.mrb[0].mxu0 %v1678
    %v1718 = vpop.f32.mrb[0].mxu0
    %v1719 = vadd.f32 %v244, %v1718
    %v1720 = vpop.f32.mrb[0].mxu0
    %v1721 = vpop.f32.mrb[0].mxu0
    %v1722 = vpop.f32.mrb[0].mxu0
    %1723 = vdwg.mxu0
    %1724 = vmatprep.subr.bf16.mxu0 0
    %1725 = vmatpush1.bf16.msra.mxu0 %v454
    %1726 = vmatprep.subr.bf16.mxu0 0
    %1727 = vmatpush1.bf16.msra.mxu0 %v455
    %1728 = vmatprep.subr.bf16.mxu0 0
    %1729 = vmatpush1.bf16.msra.mxu0 %v456
    %1730 = vmatprep.subr.bf16.mxu0 0
    %1731 = vmatpush1.bf16.msra.mxu0 %v457
    %1732 = vmatprep.subr.bf16.mxu0 0
    %1733 = vmatpush1.bf16.msra.mxu0 %v458
    %1734 = vmatprep.subr.bf16.mxu0 0
    %1735 = vmatpush1.bf16.msra.mxu0 %v459
    %1736 = vmatprep.subr.bf16.mxu0 0
    %1737 = vmatpush1.bf16.msra.mxu0 %v460
    %1738 = vmatprep.subr.bf16.mxu0 0
    %1739 = vmatpush1.bf16.msra.mxu0 %v461
    %1740 = vmatprep.subr.bf16.mxu0 0
    %1741 = vmatpush1.bf16.msra.mxu0 %v462
    %1742 = vmatprep.subr.bf16.mxu0 0
    %1743 = vmatpush1.bf16.msra.mxu0 %v463
    %1744 = vmatprep.subr.bf16.mxu0 0
    %1745 = vmatpush1.bf16.msra.mxu0 %v464
    %1746 = vmatprep.subr.bf16.mxu0 0
    %1747 = vmatpush1.bf16.msra.mxu0 %v465
    %1748 = vmatprep.subr.bf16.mxu0 0
    %1749 = vmatpush1.bf16.msra.mxu0 %v466
    %1750 = vmatprep.subr.bf16.mxu0 0
    %1751 = vmatpush1.bf16.msra.mxu0 %v467
    %1752 = vmatprep.subr.bf16.mxu0 0
    %1753 = vmatpush1.bf16.msra.mxu0 %v468
    %1754 = vmatprep.subr.bf16.mxu0 0
    %1755 = vmatpush1.bf16.msra.mxu0 %v469
    %1756 = vmatprep.mubr.bf16.mxu0 %v1681
    %1757 = vmatmul.mubr.bf16.gmra.mrb[0].mxu0 %v1680
    %v1758 = vpop.f32.mrb[0].mxu0
    %v1759 = vadd.f32 %v1719, %v1758
    %v1760 = vpop.f32.mrb[0].mxu0
    %v1761 = vpop.f32.mrb[0].mxu0
    %v1762 = vpop.f32.mrb[0].mxu0
    %1763 = vdwg.mxu0
    %1764 = vmatprep.subr.bf16.mxu0 0
    %1765 = vmatpush1.bf16.msra.mxu0 %v470
    %1766 = vmatprep.subr.bf16.mxu0 0
    %1767 = vmatpush1.bf16.msra.mxu0 %v471
    %1768 = vmatprep.subr.bf16.mxu0 0
    %1769 = vmatpush1.bf16.msra.mxu0 %v472
    %1770 = vmatprep.subr.bf16.mxu0 0
    %1771 = vmatpush1.bf16.msra.mxu0 %v473
    %1772 = vmatprep.subr.bf16.mxu0 0
    %1773 = vmatpush1.bf16.msra.mxu0 %v474
    %1774 = vmatprep.subr.bf16.mxu0 0
    %1775 = vmatpush1.bf16.msra.mxu0 %v475
    %1776 = vmatprep.subr.bf16.mxu0 0
    %1777 = vmatpush1.bf16.msra.mxu0 %v476
    %1778 = vmatprep.subr.bf16.mxu0 0
    %1779 = vmatpush1.bf16.msra.mxu0 %v477
    %1780 = vmatprep.subr.bf16.mxu0 0
    %1781 = vmatpush1.bf16.msra.mxu0 %v478
    %1782 = vmatprep.subr.bf16.mxu0 0
    %1783 = vmatpush1.bf16.msra.mxu0 %v479
    %1784 = vmatprep.subr.bf16.mxu0 0
    %1785 = vmatpush1.bf16.msra.mxu0 %v480
    %1786 = vmatprep.subr.bf16.mxu0 0
    %1787 = vmatpush1.bf16.msra.mxu0 %v481
    %1788 = vmatprep.subr.bf16.mxu0 0
    %1789 = vmatpush1.bf16.msra.mxu0 %v482
    %1790 = vmatprep.subr.bf16.mxu0 0
    %1791 = vmatpush1.bf16.msra.mxu0 %v483
    %1792 = vmatprep.subr.bf16.mxu0 0
    %1793 = vmatpush1.bf16.msra.mxu0 %v484
    %1794 = vmatprep.subr.bf16.mxu0 0
    %1795 = vmatpush1.bf16.msra.mxu0 %v485
    %1796 = vmatprep.mubr.bf16.mxu0 %v1683
    %1797 = vmatmul.mubr.bf16.gmra.mrb[0].mxu0 %v1682
    %v1798 = vpop.f32.mrb[0].mxu0
    %v1799 = vadd.f32 %v1759, %v1798
    %v1800 = vpop.f32.mrb[0].mxu0
    %v1801 = vpop.f32.mrb[0].mxu0
    %v1802 = vpop.f32.mrb[0].mxu0
    %1803 = vdwg.mxu0
    %v1804 = vtanh.pop %v1799
    %v1805 = vpack.c.bf16 %v1804, %v1804
    %1806 = vmatprep.subr.bf16.mxu0 0
    %1807 = vmatpush1.bf16.msra.mxu0 %v711
    %1808 = vmatprep.subr.bf16.mxu0 0
    %1809 = vmatpush1.bf16.msra.mxu0 %v712
    %1810 = vmatprep.subr.bf16.mxu0 0
    %1811 = vmatpush1.bf16.msra.mxu0 %v713
    %1812 = vmatprep.subr.bf16.mxu0 0
    %1813 = vmatpush1.bf16.msra.mxu0 %v714
    %1814 = vmatprep.subr.bf16.mxu0 0
    %1815 = vmatpush1.bf16.msra.mxu0 %v715
    %1816 = vmatprep.subr.bf16.mxu0 0
    %1817 = vmatpush1.bf16.msra.mxu0 %v716
    %1818 = vmatprep.subr.bf16.mxu0 0
    %1819 = vmatpush1.bf16.msra.mxu0 %v717
    %1820 = vmatprep.subr.bf16.mxu0 0
    %1821 = vmatpush1.bf16.msra.mxu0 %v718
    %1822 = vmatprep.subr.bf16.mxu0 0
    %1823 = vmatpush1.bf16.msra.mxu0 0
    %1824 = vmatprep.subr.bf16.mxu0 0
    %1825 = vmatpush1.bf16.msra.mxu0 0
    %1826 = vmatprep.subr.bf16.mxu0 0
    %1827 = vmatpush1.bf16.msra.mxu0 0
    %1828 = vmatprep.subr.bf16.mxu0 0
    %1829 = vmatpush1.bf16.msra.mxu0 0
    %1830 = vmatprep.subr.bf16.mxu0 0
    %1831 = vmatpush1.bf16.msra.mxu0 0
    %1832 = vmatprep.subr.bf16.mxu0 0
    %1833 = vmatpush1.bf16.msra.mxu0 0
    %1834 = vmatprep.subr.bf16.mxu0 0
    %1835 = vmatpush1.bf16.msra.mxu0 0
    %1836 = vmatprep.subr.bf16.mxu0 0
    %1837 = vmatpush1.bf16.msra.mxu0 0
    %1838 = vmatprep.mubr.bf16.mxu0 0
    %1839 = vmatmul.mubr.bf16.gmra.mrb[0].mxu0 %v1805
    %v1840 = vpop.f32.mrb[0].mxu0
    %v1841 = vadd.f32 %v677, %v1840
    %v1842 = vpop.f32.mrb[0].mxu0
    %v1843 = vpop.f32.mrb[0].mxu0
    %v1844 = vpop.f32.mrb[0].mxu0
    %1845 = vdwg.mxu0
    %1846 = vmax.xlane.f32.xlu0 %v1841
    %v1847 = vpop.xlane.xlu0 %1846
    %v1848 = vsub.f32 %v1841, %v1847
    %v1849 = vmul.f32 %v1848, 1.442695
    %v1850 = vpow.pop %v1849
    %1851 = vadd.xlane.f32.xlu0 %v1850
    %v1852 = vpop.xlane.xlu0 %1851
    %v1853 = vrcp.pop %v1852
    %v1854 = vmul.f32 %v1850, %v1853
    %v1855 = vpack.c.bf16 %v1854, %v1854
    %1856 = vmatprep.subr.bf16.mxu0 0
    %1857 = vmatpush1.bf16.msra.mxu0 %v825
    %1858 = vmatprep.subr.bf16.mxu0 0
    %1859 = vmatpush1.bf16.msra.mxu0 %v826
    %1860 = vmatprep.subr.bf16.mxu0 0
    %1861 = vmatpush1.bf16.msra.mxu0 %v827
    %1862 = vmatprep.subr.bf16.mxu0 0
    %1863 = vmatpush1.bf16.msra.mxu0 %v828
    %1864 = vmatprep.subr.bf16.mxu0 0
    %1865 = vmatpush1.bf16.msra.mxu0 %v829
    %1866 = vmatprep.subr.bf16.mxu0 0
    %1867 = vmatpush1.bf16.msra.mxu0 %v830
    %1868 = vmatprep.subr.bf16.mxu0 0
    %1869 = vmatpush1.bf16.msra.mxu0 %v831
    %1870 = vmatprep.subr.bf16.mxu0 0
    %1871 = vmatpush1.bf16.msra.mxu0 %v832
    %1872 = vmatprep.subr.bf16.mxu0 0
    %1873 = vmatpush1.bf16.msra.mxu0 0
    %1874 = vmatprep.subr.bf16.mxu0 0
    %1875 = vmatpush1.bf16.msra.mxu0 0
    %1876 = vmatprep.subr.bf16.mxu0 0
    %1877 = vmatpush1.bf16.msra.mxu0 0
    %1878 = vmatprep.subr.bf16.mxu0 0
    %1879 = vmatpush1.bf16.msra.mxu0 0
    %1880 = vmatprep.subr.bf16.mxu0 0
    %1881 = vmatpush1.bf16.msra.mxu0 0
    %1882 = vmatprep.subr.bf16.mxu0 0
    %1883 = vmatpush1.bf16.msra.mxu0 0
    %1884 = vmatprep.subr.bf16.mxu0 0
    %1885 = vmatpush1.bf16.msra.mxu0 0
    %1886 = vmatprep.subr.bf16.mxu0 0
    %1887 = vmatpush1.bf16.msra.mxu0 0
    %1888 = vmatprep.mubr.bf16.mxu0 0
    %1889 = vmatmul.mubr.bf16.gmra.mrb[0].mxu0 %v1855
    %v1890 = vpop.f32.mrb[0].mxu0
    %v1891 = vadd.f32 0.0, %v1890
    %v1892 = vpop.f32.mrb[0].mxu0
    %v1893 = vpop.f32.mrb[0].mxu0
    %v1894 = vpop.f32.mrb[0].mxu0
    %1895 = vdwg.mxu0
    %v1896 = vmul.f32 %v1804, %v1804
    %v1897 = vsub.f32 1.0, %v1896
    %v1898 = vmul.f32 %v1891, %v1897
    %v1899 = vpack.c.bf16 %v1898, %v1898
    %1900 = vmatprep.subr.bf16.mxu0 %v1078
    %1901 = vmatpush1.bf16.msra.mxu0 %v1077
    %1902 = vmatprep.subr.bf16.mxu0 %v1084
    %1903 = vmatpush1.bf16.msra.mxu0 %v1083
    %1904 = vmatprep.subr.bf16.mxu0 %v1090
    %1905 = vmatpush1.bf16.msra.mxu0 %v1089
    %1906 = vmatprep.subr.bf16.mxu0 %v1096
    %1907 = vmatpush1.bf16.msra.mxu0 %v1095
    %1908 = vmatprep.subr.bf16.mxu0 %v1102
    %1909 = vmatpush1.bf16.msra.mxu0 %v1101
    %1910 = vmatprep.subr.bf16.mxu0 %v1108
    %1911 = vmatpush1.bf16.msra.mxu0 %v1107
    %1912 = vmatprep.subr.bf16.mxu0 %v1114
    %1913 = vmatpush1.bf16.msra.mxu0 %v1113
    %1914 = vmatprep.subr.bf16.mxu0 %v1120
    %1915 = vmatpush1.bf16.msra.mxu0 %v1119
    %1916 = vmatprep.subr.bf16.mxu0 0
    %1917 = vmatpush1.bf16.msra.mxu0 0
    %1918 = vmatprep.subr.bf16.mxu0 0
    %1919 = vmatpush1.bf16.msra.mxu0 0
    %1920 = vmatprep.subr.bf16.mxu0 0
    %1921 = vmatpush1.bf16.msra.mxu0 0
    %1922 = vmatprep.subr.bf16.mxu0 0
    %1923 = vmatpush1.bf16.msra.mxu0 0
    %1924 = vmatprep.subr.bf16.mxu0 0
    %1925 = vmatpush1.bf16.msra.mxu0 0
    %1926 = vmatprep.subr.bf16.mxu0 0
    %1927 = vmatpush1.bf16.msra.mxu0 0
    %1928 = vmatprep.subr.bf16.mxu0 0
    %1929 = vmatpush1.bf16.msra.mxu0 0
    %1930 = vmatprep.subr.bf16.mxu0 0
    %1931 = vmatpush1.bf16.msra.mxu0 0
    %1932 = vmatprep.mubr.bf16.mxu0 0
    %1933 = vmatmul.mubr.bf16.gmra.mrb[0].mxu0 %v1899
    %v1934 = vpop.f32.mrb[0].mxu0
    %v1935 = vadd.f32 0.0, %v1934
    %v1936 = vpop.f32.mrb[0].mxu0
    %v1937 = vadd.f32 0.0, %v1936
    %v1938 = vpop.f32.mrb[0].mxu0
    %v1939 = vpop.f32.mrb[0].mxu0
    %1940 = vdwg.mxu0
    %1941 = vmatprep.subr.bf16.mxu0 %v1080
    %1942 = vmatpush1.bf16.msra.mxu0 %v1079
    %1943 = vmatprep.subr.bf16.mxu0 %v1086
    %1944 = vmatpush1.bf16.msra.mxu0 %v1085
    %1945 = vmatprep.subr.bf16.mxu0 %v1092
    %1946 = vmatpush1.bf16.msra.mxu0 %v1091
    %1947 = vmatprep.subr.bf16.mxu0 %v1098
    %1948 = vmatpush1.bf16.msra.mxu0 %v1097
    %1949 = vmatprep.subr.bf16.mxu0 %v1104
    %1950 = vmatpush1.bf16.msra.mxu0 %v1103
    %1951 = vmatprep.subr.bf16.mxu0 %v1110
    %1952 = vmatpush1.bf16.msra.mxu0 %v1109
    %1953 = vmatprep.subr.bf16.mxu0 %v1116
    %1954 = vmatpush1.bf16.msra.mxu0 %v1115
    %1955 = vmatprep.subr.bf16.mxu0 %v1122
    %1956 = vmatpush1.bf16.msra.mxu0 %v1121
    %1957 = vmatprep.subr.bf16.mxu0 0
    %1958 = vmatpush1.bf16.msra.mxu0 0
    %1959 = vmatprep.subr.bf16.mxu0 0
    %1960 = vmatpush1.bf16.msra.mxu0 0
    %1961 = vmatprep.subr.bf16.mxu0 0
    %1962 = vmatpush1.bf16.msra.mxu0 0
    %1963 = vmatprep.subr.bf16.mxu0 0
    %1964 = vmatpush1.bf16.msra.mxu0 0
    %1965 = vmatprep.subr.bf16.mxu0 0
    %1966 = vmatpush1.bf16.msra.mxu0 0
    %1967 = vmatprep.subr.bf16.mxu0 0
    %1968 = vmatpush1.bf16.msra.mxu0 0
    %1969 = vmatprep.subr.bf16.mxu0 0
    %1970 = vmatpush1.bf16.msra.mxu0 0
    %1971 = vmatprep.subr.bf16.mxu0 0
    %1972 = vmatpush1.bf16.msra.mxu0 0
    %1973 = vmatprep.mubr.bf16.mxu0 0
    %1974 = vmatmul.mubr.bf16.gmra.mrb[0].mxu0 %v1899
    %v1975 = vpop.f32.mrb[0].mxu0
    %v1976 = vadd.f32 0.0, %v1975
    %v1977 = vpop.f32.mrb[0].mxu0
    %v1978 = vadd.f32 0.0, %v1977
    %v1979 = vpop.f32.mrb[0].mxu0
    %v1980 = vpop.f32.mrb[0].mxu0
    %1981 = vdwg.mxu0
    %1982 = vmatprep.subr.bf16.mxu0 %v1082
    %1983 = vmatpush1.bf16.msra.mxu0 %v1081
    %1984 = vmatprep.subr.bf16.mxu0 %v1088
    %1985 = vmatpush1.bf16.msra.mxu0 %v1087
    %1986 = vmatprep.subr.bf16.mxu0 %v1094
    %1987 = vmatpush1.bf16.msra.mxu0 %v1093
    %1988 = vmatprep.subr.bf16.mxu0 %v1100
    %1989 = vmatpush1.bf16.msra.mxu0 %v1099
    %1990 = vmatprep.subr.bf16.mxu0 %v1106
    %1991 = vmatpush1.bf16.msra.mxu0 %v1105
    %1992 = vmatprep.subr.bf16.mxu0 %v1112
    %1993 = vmatpush1.bf16.msra.mxu0 %v1111
    %1994 = vmatprep.subr.bf16.mxu0 %v1118
    %1995 = vmatpush1.bf16.msra.mxu0 %v1117
    %1996 = vmatprep.subr.bf16.mxu0 %v1124
    %1997 = vmatpush1.bf16.msra.mxu0 %v1123
    %1998 = vmatprep.subr.bf16.mxu0 0
    %1999 = vmatpush1.bf16.msra.mxu0 0
    %2000 = vmatprep.subr.bf16.mxu0 0
    %2001 = vmatpush1.bf16.msra.mxu0 0
    %2002 = vmatprep.subr.bf16.mxu0 0
    %2003 = vmatpush1.bf16.msra.mxu0 0
    %2004 = vmatprep.subr.bf16.mxu0 0
    %2005 = vmatpush1.bf16.msra.mxu0 0
    %2006 = vmatprep.subr.bf16.mxu0 0
    %2007 = vmatpush1.bf16.msra.mxu0 0
    %2008 = vmatprep.subr.bf16.mxu0 0
    %2009 = vmatpush1.bf16.msra.mxu0 0
    %2010 = vmatprep.subr.bf16.mxu0 0
    %2011 = vmatpush1.bf16.msra.mxu0 0
    %2012 = vmatprep.subr.bf16.mxu0 0
    %2013 = vmatpush1.bf16.msra.mxu0 0
    %2014 = vmatprep.mubr.bf16.mxu0 0
    %2015 = vmatmul.mubr.bf16.gmra.mrb[0].mxu0 %v1899
    %v2016 = vpop.f32.mrb[0].mxu0
    %v2017 = vadd.f32 0.0, %v2016
    %v2018 = vpop.f32.mrb[0].mxu0
    %v2019 = vadd.f32 0.0, %v2018
    %v2020 = vpop.f32.mrb[0].mxu0
    %v2021 = vpop.f32.mrb[0].mxu0
    %2022 = vdwg.mxu0
    %v2023 = vadd.f32 %v1672, %v1935
    %v2024 = vadd.f32 %v1673, %v1937
    %v2025 = vadd.f32 %v1674, %v1976
    %v2026 = vadd.f32 %v1675, %v1978
    %v2027 = vadd.f32 %v1676, %v2017
    %v2028 = vadd.f32 %v1677, %v2019
    %s2029 = scalar_lea.vmem [#allocation8], 96
    %v2030 = vld [vmem:[%s2029] sm:$0xff]
    %v2031 = vld [vmem:[%s2029 + $0x8] sm:$0xff]
    %v2032 = vld [vmem:[%s2029 + $0x10] sm:$0xff]
    %v2033 = vld [vmem:[%s2029 + $0x18] sm:$0xff]
    %v2034 = vld [vmem:[%s2029 + $0x20] sm:$0xff]
    %v2035 = vld [vmem:[%s2029 + $0x28] sm:$0xff]
    %v2036 = vadd.f32 %v2023, %v2030
    %v2037 = vadd.f32 %v2024, %v2031
    %v2038 = vadd.f32 %v2025, %v2032
    %v2039 = vadd.f32 %v2026, %v2033
    %v2040 = vadd.f32 %v2027, %v2034
    %v2041 = vadd.f32 %v2028, %v2035
    %2042 = vst [vmem:[#allocation15] sm:$0xff] %v2036
    %2043 = vst [vmem:[#allocation15 + $0x8] sm:$0xff] %v2037
    %2044 = vst [vmem:[#allocation15 + $0x10] sm:$0xff] %v2038
    %2045 = vst [vmem:[#allocation15 + $0x18] sm:$0xff] %v2039
    %2046 = vst [vmem:[#allocation15 + $0x20] sm:$0xff] %v2040
    %2047 = vst [vmem:[#allocation15 + $0x28] sm:$0xff] %v2041
    %v2048 = vld [vmem:[#allocation2] sm:$0xff]
    %v2049 = vld [vmem:[#allocation2 + $0x8] sm:$0xff]
    %v2050 = vld [vmem:[#allocation2 + $0x10] sm:$0xff]
    %v2051 = vld [vmem:[#allocation2 + $0x18] sm:$0xff]
    %v2052 = vld [vmem:[#allocation2 + $0x20] sm:$0xff]
    %v2053 = vld [vmem:[#allocation2 + $0x28] sm:$0xff]
    %v2054 = vpack.c.bf16 %v2048, %v2048
    %v2055 = vpack.c.bf16 %v2049, %v2049
    %v2056 = vpack.c.bf16 %v2050, %v2050
    %v2057 = vpack.c.bf16 %v2051, %v2051
    %v2058 = vpack.c.bf16 %v2052, %v2052
    %v2059 = vpack.c.bf16 %v2053, %v2053
    %v2060 = vld [vmem:[#allocation9] sm:$0xf]
    %v2061 = vld [vmem:[#allocation9 + $0x4] sm:$0xf]
    %v2062 = vld [vmem:[#allocation9 + $0x8] sm:$0xf]
    %v2063 = vld [vmem:[#allocation9 + $0xc] sm:$0xf]
    %v2064 = vld [vmem:[#allocation9 + $0x10] sm:$0xf]
    %v2065 = vld [vmem:[#allocation9 + $0x14] sm:$0xf]
    %v2066 = vld [vmem:[#allocation9 + $0x18] sm:$0xf]
    %v2067 = vld [vmem:[#allocation9 + $0x1c] sm:$0xf]
    %v2068 = vld [vmem:[#allocation9 + $0x20] sm:$0xf]
    %v2069 = vld [vmem:[#allocation9 + $0x24] sm:$0xf]
    %v2070 = vld [vmem:[#allocation9 + $0x28] sm:$0xf]
    %v2071 = vld [vmem:[#allocation9 + $0x2c] sm:$0xf]
    %v2072 = vld [vmem:[#allocation9 + $0x30] sm:$0xf]
    %v2073 = vld [vmem:[#allocation9 + $0x34] sm:$0xf]
    %v2074 = vld [vmem:[#allocation9 + $0x38] sm:$0xf]
    %v2075 = vld [vmem:[#allocation9 + $0x3c] sm:$0xf]
    %v2076 = vld [vmem:[#allocation9 + $0x40] sm:$0xf]
    %v2077 = vld [vmem:[#allocation9 + $0x44] sm:$0xf]
    %v2078 = vld [vmem:[#allocation9 + $0x48] sm:$0xf]
    %v2079 = vld [vmem:[#allocation9 + $0x4c] sm:$0xf]
    %v2080 = vld [vmem:[#allocation9 + $0x50] sm:$0xf]
    %v2081 = vld [vmem:[#allocation9 + $0x54] sm:$0xf]
    %v2082 = vld [vmem:[#allocation9 + $0x58] sm:$0xf]
    %v2083 = vld [vmem:[#allocation9 + $0x5c] sm:$0xf]
    %v2084 = vld [vmem:[#allocation9 + $0x60] sm:$0xf]
    %v2085 = vld [vmem:[#allocation9 + $0x64] sm:$0xf]
    %v2086 = vld [vmem:[#allocation9 + $0x68] sm:$0xf]
    %v2087 = vld [vmem:[#allocation9 + $0x6c] sm:$0xf]
    %v2088 = vld [vmem:[#allocation9 + $0x70] sm:$0xf]
    %v2089 = vld [vmem:[#allocation9 + $0x74] sm:$0xf]
    %v2090 = vld [vmem:[#allocation9 + $0x78] sm:$0xf]
    %v2091 = vld [vmem:[#allocation9 + $0x7c] sm:$0xf]
    %v2092 = vld [vmem:[#allocation9 + $0x80] sm:$0xf]
    %v2093 = vld [vmem:[#allocation9 + $0x84] sm:$0xf]
    %v2094 = vld [vmem:[#allocation9 + $0x88] sm:$0xf]
    %v2095 = vld [vmem:[#allocation9 + $0x8c] sm:$0xf]
    %v2096 = vld [vmem:[#allocation9 + $0x90] sm:$0xf]
    %v2097 = vld [vmem:[#allocation9 + $0x94] sm:$0xf]
    %v2098 = vld [vmem:[#allocation9 + $0x98] sm:$0xf]
    %v2099 = vld [vmem:[#allocation9 + $0x9c] sm:$0xf]
    %v2100 = vld [vmem:[#allocation9 + $0xa0] sm:$0xf]
    %v2101 = vld [vmem:[#allocation9 + $0xa4] sm:$0xf]
    %v2102 = vld [vmem:[#allocation9 + $0xa8] sm:$0xf]
    %v2103 = vld [vmem:[#allocation9 + $0xac] sm:$0xf]
    %v2104 = vld [vmem:[#allocation9 + $0xb0] sm:$0xf]
    %v2105 = vld [vmem:[#allocation9 + $0xb4] sm:$0xf]
    %v2106 = vld [vmem:[#allocation9 + $0xb8] sm:$0xf]
    %v2107 = vld [vmem:[#allocation9 + $0xbc] sm:$0xf]
    %v2108 = vld [vmem:[#allocation9 + $0xc0] sm:$0xf]
    %v2109 = vld [vmem:[#allocation9 + $0xc4] sm:$0xf]
    %v2110 = vld [vmem:[#allocation9 + $0xc8] sm:$0xf]
    %v2111 = vld [vmem:[#allocation9 + $0xcc] sm:$0xf]
    %v2112 = vld [vmem:[#allocation9 + $0xd0] sm:$0xf]
    %v2113 = vld [vmem:[#allocation9 + $0xd4] sm:$0xf]
    %v2114 = vld [vmem:[#allocation9 + $0xd8] sm:$0xf]
    %v2115 = vld [vmem:[#allocation9 + $0xdc] sm:$0xf]
    %v2116 = vld [vmem:[#allocation9 + $0xe0] sm:$0xf]
    %v2117 = vld [vmem:[#allocation9 + $0xe4] sm:$0xf]
    %v2118 = vld [vmem:[#allocation9 + $0xe8] sm:$0xf]
    %v2119 = vld [vmem:[#allocation9 + $0xec] sm:$0xf]
    %v2120 = vld [vmem:[#allocation9 + $0xf0] sm:$0xf]
    %v2121 = vld [vmem:[#allocation9 + $0xf4] sm:$0xf]
    %v2122 = vld [vmem:[#allocation9 + $0xf8] sm:$0xf]
    %v2123 = vld [vmem:[#allocation9 + $0xfc] sm:$0xf]
    %v2124 = vld [vmem:[#allocation9 + $0x100] sm:$0xf]
    %v2125 = vld [vmem:[#allocation9 + $0x104] sm:$0xf]
    %v2126 = vld [vmem:[#allocation9 + $0x108] sm:$0xf]
    %v2127 = vld [vmem:[#allocation9 + $0x10c] sm:$0xf]
    %v2128 = vld [vmem:[#allocation9 + $0x110] sm:$0xf]
    %v2129 = vld [vmem:[#allocation9 + $0x114] sm:$0xf]
    %v2130 = vld [vmem:[#allocation9 + $0x118] sm:$0xf]
    %v2131 = vld [vmem:[#allocation9 + $0x11c] sm:$0xf]
    %v2132 = vld [vmem:[#allocation9 + $0x120] sm:$0xf]
    %v2133 = vld [vmem:[#allocation9 + $0x124] sm:$0xf]
    %v2134 = vld [vmem:[#allocation9 + $0x128] sm:$0xf]
    %v2135 = vld [vmem:[#allocation9 + $0x12c] sm:$0xf]
    %v2136 = vld [vmem:[#allocation9 + $0x130] sm:$0xf]
    %v2137 = vld [vmem:[#allocation9 + $0x134] sm:$0xf]
    %v2138 = vld [vmem:[#allocation9 + $0x138] sm:$0xf]
    %v2139 = vld [vmem:[#allocation9 + $0x13c] sm:$0xf]
    %v2140 = vld [vmem:[#allocation9 + $0x140] sm:$0xf]
    %v2141 = vld [vmem:[#allocation9 + $0x144] sm:$0xf]
    %v2142 = vld [vmem:[#allocation9 + $0x148] sm:$0xf]
    %v2143 = vld [vmem:[#allocation9 + $0x14c] sm:$0xf]
    %v2144 = vld [vmem:[#allocation9 + $0x150] sm:$0xf]
    %v2145 = vld [vmem:[#allocation9 + $0x154] sm:$0xf]
    %v2146 = vld [vmem:[#allocation9 + $0x158] sm:$0xf]
    %v2147 = vld [vmem:[#allocation9 + $0x15c] sm:$0xf]
    %v2148 = vld [vmem:[#allocation9 + $0x160] sm:$0xf]
    %v2149 = vld [vmem:[#allocation9 + $0x164] sm:$0xf]
    %v2150 = vld [vmem:[#allocation9 + $0x168] sm:$0xf]
    %v2151 = vld [vmem:[#allocation9 + $0x16c] sm:$0xf]
    %v2152 = vld [vmem:[#allocation9 + $0x170] sm:$0xf]
    %v2153 = vld [vmem:[#allocation9 + $0x174] sm:$0xf]
    %v2154 = vld [vmem:[#allocation9 + $0x178] sm:$0xf]
    %v2155 = vld [vmem:[#allocation9 + $0x17c] sm:$0xf]
    %v2156 = vld [vmem:[%s5] sm:$0x1]
    %v2158 = vlaneseq
    %v2159 = vshrl.u32 %v2158, 7
    %v2160 = vsub.s32 0, %v2159
    %v2161 = vrot.slane %v2156, %v2160
    %v2259 = vunpack.c.l.b16 %v2060
    %v2260 = vunpack.c.l.b16 %v2061
    %v2261 = vunpack.c.l.b16 %v2062
    %v2262 = vunpack.c.l.b16 %v2063
    %v2263 = vunpack.c.l.b16 %v2064
    %v2264 = vunpack.c.l.b16 %v2065
    %v2265 = vunpack.c.l.b16 %v2066
    %v2266 = vunpack.c.l.b16 %v2067
    %v2267 = vunpack.c.l.b16 %v2068
    %v2268 = vunpack.c.l.b16 %v2069
    %v2269 = vunpack.c.l.b16 %v2070
    %v2270 = vunpack.c.l.b16 %v2071
    %v2271 = vunpack.c.l.b16 %v2072
    %v2272 = vunpack.c.l.b16 %v2073
    %v2273 = vunpack.c.l.b16 %v2074
    %v2274 = vunpack.c.l.b16 %v2075
    %v2275 = vunpack.c.l.b16 %v2076
    %v2276 = vunpack.c.l.b16 %v2077
    %v2277 = vunpack.c.l.b16 %v2078
    %v2278 = vunpack.c.l.b16 %v2079
    %v2279 = vunpack.c.l.b16 %v2080
    %v2280 = vunpack.c.l.b16 %v2081
    %v2281 = vunpack.c.l.b16 %v2082
    %v2282 = vunpack.c.l.b16 %v2083
    %v2283 = vunpack.c.l.b16 %v2084
    %v2284 = vunpack.c.l.b16 %v2085
    %v2285 = vunpack.c.l.b16 %v2086
    %v2286 = vunpack.c.l.b16 %v2087
    %v2287 = vunpack.c.l.b16 %v2088
    %v2288 = vunpack.c.l.b16 %v2089
    %v2289 = vunpack.c.l.b16 %v2090
    %v2290 = vunpack.c.l.b16 %v2091
    %v2291 = vunpack.c.l.b16 %v2092
    %v2292 = vunpack.c.l.b16 %v2093
    %v2293 = vunpack.c.l.b16 %v2094
    %v2294 = vunpack.c.l.b16 %v2095
    %v2295 = vunpack.c.l.b16 %v2096
    %v2296 = vunpack.c.l.b16 %v2097
    %v2297 = vunpack.c.l.b16 %v2098
    %v2298 = vunpack.c.l.b16 %v2099
    %v2299 = vunpack.c.l.b16 %v2100
    %v2300 = vunpack.c.l.b16 %v2101
    %v2301 = vunpack.c.l.b16 %v2102
    %v2302 = vunpack.c.l.b16 %v2103
    %v2303 = vunpack.c.l.b16 %v2104
    %v2304 = vunpack.c.l.b16 %v2105
    %v2305 = vunpack.c.l.b16 %v2106
    %v2306 = vunpack.c.l.b16 %v2107
    %v2307 = vunpack.c.l.b16 %v2108
    %v2308 = vunpack.c.l.b16 %v2109
    %v2309 = vunpack.c.l.b16 %v2110
    %v2310 = vunpack.c.l.b16 %v2111
    %v2311 = vunpack.c.l.b16 %v2112
    %v2312 = vunpack.c.l.b16 %v2113
    %v2313 = vunpack.c.l.b16 %v2114
    %v2314 = vunpack.c.l.b16 %v2115
    %v2315 = vunpack.c.l.b16 %v2116
    %v2316 = vunpack.c.l.b16 %v2117
    %v2317 = vunpack.c.l.b16 %v2118
    %v2318 = vunpack.c.l.b16 %v2119
    %v2319 = vunpack.c.l.b16 %v2120
    %v2320 = vunpack.c.l.b16 %v2121
    %v2321 = vunpack.c.l.b16 %v2122
    %v2322 = vunpack.c.l.b16 %v2123
    %v2323 = vunpack.c.l.b16 %v2124
    %v2324 = vunpack.c.l.b16 %v2125
    %v2325 = vunpack.c.l.b16 %v2126
    %v2326 = vunpack.c.l.b16 %v2127
    %v2327 = vunpack.c.l.b16 %v2128
    %v2328 = vunpack.c.l.b16 %v2129
    %v2329 = vunpack.c.l.b16 %v2130
    %v2330 = vunpack.c.l.b16 %v2131
    %v2331 = vunpack.c.l.b16 %v2132
    %v2332 = vunpack.c.l.b16 %v2133
    %v2333 = vunpack.c.l.b16 %v2134
    %v2334 = vunpack.c.l.b16 %v2135
    %v2335 = vunpack.c.l.b16 %v2136
    %v2336 = vunpack.c.l.b16 %v2137
    %v2337 = vunpack.c.l.b16 %v2138
    %v2338 = vunpack.c.l.b16 %v2139
    %v2339 = vunpack.c.l.b16 %v2140
    %v2340 = vunpack.c.l.b16 %v2141
    %v2341 = vunpack.c.l.b16 %v2142
    %v2342 = vunpack.c.l.b16 %v2143
    %v2343 = vunpack.c.l.b16 %v2144
    %v2344 = vunpack.c.l.b16 %v2145
    %v2345 = vunpack.c.l.b16 %v2146
    %v2346 = vunpack.c.l.b16 %v2147
    %v2347 = vunpack.c.l.b16 %v2148
    %v2348 = vunpack.c.l.b16 %v2149
    %v2349 = vunpack.c.l.b16 %v2150
    %v2350 = vunpack.c.l.b16 %v2151
    %v2351 = vunpack.c.l.b16 %v2152
    %v2352 = vunpack.c.l.b16 %v2153
    %v2353 = vunpack.c.l.b16 %v2154
    %v2354 = vunpack.c.l.b16 %v2155
    %v2355 = vpack.c.b16 %v2260, %v2259
    %v2356 = vpack.c.b16 %v2262, %v2261
    %v2357 = vpack.c.b16 %v2264, %v2263
    %v2358 = vpack.c.b16 %v2266, %v2265
    %v2359 = vpack.c.b16 %v2268, %v2267
    %v2360 = vpack.c.b16 %v2270, %v2269
    %v2361 = vpack.c.b16 %v2272, %v2271
    %v2362 = vpack.c.b16 %v2274, %v2273
    %v2363 = vpack.c.b16 %v2276, %v2275
    %v2364 = vpack.c.b16 %v2278, %v2277
    %v2365 = vpack.c.b16 %v2280, %v2279
    %v2366 = vpack.c.b16 %v2282, %v2281
    %v2367 = vpack.c.b16 %v2284, %v2283
    %v2368 = vpack.c.b16 %v2286, %v2285
    %v2369 = vpack.c.b16 %v2288, %v2287
    %v2370 = vpack.c.b16 %v2290, %v2289
    %v2371 = vpack.c.b16 %v2292, %v2291
    %v2372 = vpack.c.b16 %v2294, %v2293
    %v2373 = vpack.c.b16 %v2296, %v2295
    %v2374 = vpack.c.b16 %v2298, %v2297
    %v2375 = vpack.c.b16 %v2300, %v2299
    %v2376 = vpack.c.b16 %v2302, %v2301
    %v2377 = vpack.c.b16 %v2304, %v2303
    %v2378 = vpack.c.b16 %v2306, %v2305
    %v2379 = vpack.c.b16 %v2308, %v2307
    %v2380 = vpack.c.b16 %v2310, %v2309
    %v2381 = vpack.c.b16 %v2312, %v2311
    %v2382 = vpack.c.b16 %v2314, %v2313
    %v2383 = vpack.c.b16 %v2316, %v2315
    %v2384 = vpack.c.b16 %v2318, %v2317
    %v2385 = vpack.c.b16 %v2320, %v2319
    %v2386 = vpack.c.b16 %v2322, %v2321
    %v2387 = vpack.c.b16 %v2324, %v2323
    %v2388 = vpack.c.b16 %v2326, %v2325
    %v2389 = vpack.c.b16 %v2328, %v2327
    %v2390 = vpack.c.b16 %v2330, %v2329
    %v2391 = vpack.c.b16 %v2332, %v2331
    %v2392 = vpack.c.b16 %v2334, %v2333
    %v2393 = vpack.c.b16 %v2336, %v2335
    %v2394 = vpack.c.b16 %v2338, %v2337
    %v2395 = vpack.c.b16 %v2340, %v2339
    %v2396 = vpack.c.b16 %v2342, %v2341
    %v2397 = vpack.c.b16 %v2344, %v2343
    %v2398 = vpack.c.b16 %v2346, %v2345
    %v2399 = vpack.c.b16 %v2348, %v2347
    %v2400 = vpack.c.b16 %v2350, %v2349
    %v2401 = vpack.c.b16 %v2352, %v2351
    %v2402 = vpack.c.b16 %v2354, %v2353
    %2451 = vmatprep.subr.bf16.mxu0 0
    %2452 = vmatpush1.bf16.msra.mxu0 %v2355
    %2453 = vmatprep.subr.bf16.mxu0 0
    %2454 = vmatpush1.bf16.msra.mxu0 %v2356
    %2455 = vmatprep.subr.bf16.mxu0 0
    %2456 = vmatpush1.bf16.msra.mxu0 %v2357
    %2457 = vmatprep.subr.bf16.mxu0 0
    %2458 = vmatpush1.bf16.msra.mxu0 %v2358
    %2459 = vmatprep.subr.bf16.mxu0 0
    %2460 = vmatpush1.bf16.msra.mxu0 %v2359
    %2461 = vmatprep.subr.bf16.mxu0 0
    %2462 = vmatpush1.bf16.msra.mxu0 %v2360
    %2463 = vmatprep.subr.bf16.mxu0 0
    %2464 = vmatpush1.bf16.msra.mxu0 %v2361
    %2465 = vmatprep.subr.bf16.mxu0 0
    %2466 = vmatpush1.bf16.msra.mxu0 %v2362
    %2467 = vmatprep.subr.bf16.mxu0 0
    %2468 = vmatpush1.bf16.msra.mxu0 %v2363
    %2469 = vmatprep.subr.bf16.mxu0 0
    %2470 = vmatpush1.bf16.msra.mxu0 %v2364
    %2471 = vmatprep.subr.bf16.mxu0 0
    %2472 = vmatpush1.bf16.msra.mxu0 %v2365
    %2473 = vmatprep.subr.bf16.mxu0 0
    %2474 = vmatpush1.bf16.msra.mxu0 %v2366
    %2475 = vmatprep.subr.bf16.mxu0 0
    %2476 = vmatpush1.bf16.msra.mxu0 %v2367
    %2477 = vmatprep.subr.bf16.mxu0 0
    %2478 = vmatpush1.bf16.msra.mxu0 %v2368
    %2479 = vmatprep.subr.bf16.mxu0 0
    %2480 = vmatpush1.bf16.msra.mxu0 %v2369
    %2481 = vmatprep.subr.bf16.mxu0 0
    %2482 = vmatpush1.bf16.msra.mxu0 %v2370
    %2483 = vmatprep.mubr.bf16.mxu0 %v2055
    %2484 = vmatmul.mubr.bf16.gmra.mrb[0].mxu0 %v2054
    %v2485 = vpop.f32.mrb[0].mxu0
    %v2486 = vadd.f32 %v2161, %v2485
    %v2487 = vpop.f32.mrb[0].mxu0
    %v2488 = vpop.f32.mrb[0].mxu0
    %v2489 = vpop.f32.mrb[0].mxu0
    %2490 = vdwg.mxu0
    %2491 = vmatprep.subr.bf16.mxu0 0
    %2492 = vmatpush1.bf16.msra.mxu0 %v2371
    %2493 = vmatprep.subr.bf16.mxu0 0
    %2494 = vmatpush1.bf16.msra.mxu0 %v2372
    %2495 = vmatprep.subr.bf16.mxu0 0
    %2496 = vmatpush1.bf16.msra.mxu0 %v2373
    %2497 = vmatprep.subr.bf16.mxu0 0
    %2498 = vmatpush1.bf16.msra.mxu0 %v2374
    %2499 = vmatprep.subr.bf16.mxu0 0
    %2500 = vmatpush1.bf16.msra.mxu0 %v2375
    %2501 = vmatprep.subr.bf16.mxu0 0
    %2502 = vmatpush1.bf16.msra.mxu0 %v2376
    %2503 = vmatprep.subr.bf16.mxu0 0
    %2504 = vmatpush1.bf16.msra.mxu0 %v2377
    %2505 = vmatprep.subr.bf16.mxu0 0
    %2506 = vmatpush1.bf16.msra.mxu0 %v2378
    %2507 = vmatprep.subr.bf16.mxu0 0
    %2508 = vmatpush1.bf16.msra.mxu0 %v2379
    %2509 = vmatprep.subr.bf16.mxu0 0
    %2510 = vmatpush1.bf16.msra.mxu0 %v2380
    %2511 = vmatprep.subr.bf16.mxu0 0
    %2512 = vmatpush1.bf16.msra.mxu0 %v2381
    %2513 = vmatprep.subr.bf16.mxu0 0
    %2514 = vmatpush1.bf16.msra.mxu0 %v2382
    %2515 = vmatprep.subr.bf16.mxu0 0
    %2516 = vmatpush1.bf16.msra.mxu0 %v2383
    %2517 = vmatprep.subr.bf16.mxu0 0
    %2518 = vmatpush1.bf16.msra.mxu0 %v2384
    %2519 = vmatprep.subr.bf16.mxu0 0
    %2520 = vmatpush1.bf16.msra.mxu0 %v2385
    %2521 = vmatprep.subr.bf16.mxu0 0
    %2522 = vmatpush1.bf16.msra.mxu0 %v2386
    %2523 = vmatprep.mubr.bf16.mxu0 %v2057
    %2524 = vmatmul.mubr.bf16.gmra.mrb[0].mxu0 %v2056
    %v2525 = vpop.f32.mrb[0].mxu0
    %v2526 = vadd.f32 %v2486, %v2525
    %v2527 = vpop.f32.mrb[0].mxu0
    %v2528 = vpop.f32.mrb[0].mxu0
    %v2529 = vpop.f32.mrb[0].mxu0
    %2530 = vdwg.mxu0
    %2531 = vmatprep.subr.bf16.mxu0 0
    %2532 = vmatpush1.bf16.msra.mxu0 %v2387
    %2533 = vmatprep.subr.bf16.mxu0 0
    %2534 = vmatpush1.bf16.msra.mxu0 %v2388
    %2535 = vmatprep.subr.bf16.mxu0 0
    %2536 = vmatpush1.bf16.msra.mxu0 %v2389
    %2537 = vmatprep.subr.bf16.mxu0 0
    %2538 = vmatpush1.bf16.msra.mxu0 %v2390
    %2539 = vmatprep.subr.bf16.mxu0 0
    %2540 = vmatpush1.bf16.msra.mxu0 %v2391
    %2541 = vmatprep.subr.bf16.mxu0 0
    %2542 = vmatpush1.bf16.msra.mxu0 %v2392
    %2543 = vmatprep.subr.bf16.mxu0 0
    %2544 = vmatpush1.bf16.msra.mxu0 %v2393
    %2545 = vmatprep.subr.bf16.mxu0 0
    %2546 = vmatpush1.bf16.msra.mxu0 %v2394
    %2547 = vmatprep.subr.bf16.mxu0 0
    %2548 = vmatpush1.bf16.msra.mxu0 %v2395
    %2549 = vmatprep.subr.bf16.mxu0 0
    %2550 = vmatpush1.bf16.msra.mxu0 %v2396
    %2551 = vmatprep.subr.bf16.mxu0 0
    %2552 = vmatpush1.bf16.msra.mxu0 %v2397
    %2553 = vmatprep.subr.bf16.mxu0 0
    %2554 = vmatpush1.bf16.msra.mxu0 %v2398
    %2555 = vmatprep.subr.bf16.mxu0 0
    %2556 = vmatpush1.bf16.msra.mxu0 %v2399
    %2557 = vmatprep.subr.bf16.mxu0 0
    %2558 = vmatpush1.bf16.msra.mxu0 %v2400
    %2559 = vmatprep.subr.bf16.mxu0 0
    %2560 = vmatpush1.bf16.msra.mxu0 %v2401
    %2561 = vmatprep.subr.bf16.mxu0 0
    %2562 = vmatpush1.bf16.msra.mxu0 %v2402
    %2563 = vmatprep.mubr.bf16.mxu0 %v2059
    %2564 = vmatmul.mubr.bf16.gmra.mrb[0].mxu0 %v2058
    %v2565 = vpop.f32.mrb[0].mxu0
    %v2566 = vadd.f32 %v2526, %v2565
    %v2567 = vpop.f32.mrb[0].mxu0
    %v2568 = vpop.f32.mrb[0].mxu0
    %v2569 = vpop.f32.mrb[0].mxu0
    %2570 = vdwg.mxu0
    %v2571 = vtanh.pop %v2566
    %v2572 = vpack.c.bf16 %v2571, %v2571
    %v2573 = vld [vmem:[#allocation11] sm:$0xf]
    %v2574 = vld [vmem:[#allocation11 + $0x4] sm:$0xf]
    %v2575 = vld [vmem:[#allocation11 + $0x8] sm:$0xf]
    %v2576 = vld [vmem:[#allocation11 + $0xc] sm:$0xf]
    %v2577 = vld [vmem:[#allocation11 + $0x10] sm:$0xf]
    %v2578 = vld [vmem:[#allocation11 + $0x14] sm:$0xf]
    %v2579 = vld [vmem:[#allocation11 + $0x18] sm:$0xf]
    %v2580 = vld [vmem:[#allocation11 + $0x1c] sm:$0xf]
    %v2581 = vld [vmem:[#allocation11 + $0x20] sm:$0xf]
    %v2582 = vld [vmem:[#allocation11 + $0x24] sm:$0xf]
    %v2583 = vld [vmem:[#allocation11 + $0x28] sm:$0xf]
    %v2584 = vld [vmem:[#allocation11 + $0x2c] sm:$0xf]
    %v2585 = vld [vmem:[#allocation11 + $0x30] sm:$0xf]
    %v2586 = vld [vmem:[#allocation11 + $0x34] sm:$0xf]
    %v2587 = vld [vmem:[#allocation11 + $0x38] sm:$0xf]
    %v2588 = vld [vmem:[#allocation11 + $0x3c] sm:$0xf]
    %v2589 = vld [vmem:[%s7] sm:$0x1]
    %v2591 = vlaneseq
    %v2592 = vshrl.u32 %v2591, 7
    %v2593 = vsub.s32 0, %v2592
    %v2594 = vrot.slane %v2589, %v2593
    %v2612 = vunpack.c.l.b16 %v2573
    %v2613 = vunpack.c.l.b16 %v2574
    %v2614 = vunpack.c.l.b16 %v2575
    %v2615 = vunpack.c.l.b16 %v2576
    %v2616 = vunpack.c.l.b16 %v2577
    %v2617 = vunpack.c.l.b16 %v2578
    %v2618 = vunpack.c.l.b16 %v2579
    %v2619 = vunpack.c.l.b16 %v2580
    %v2620 = vunpack.c.l.b16 %v2581
    %v2621 = vunpack.c.l.b16 %v2582
    %v2622 = vunpack.c.l.b16 %v2583
    %v2623 = vunpack.c.l.b16 %v2584
    %v2624 = vunpack.c.l.b16 %v2585
    %v2625 = vunpack.c.l.b16 %v2586
    %v2626 = vunpack.c.l.b16 %v2587
    %v2627 = vunpack.c.l.b16 %v2588
    %v2628 = vpack.c.b16 %v2613, %v2612
    %v2629 = vpack.c.b16 %v2615, %v2614
    %v2630 = vpack.c.b16 %v2617, %v2616
    %v2631 = vpack.c.b16 %v2619, %v2618
    %v2632 = vpack.c.b16 %v2621, %v2620
    %v2633 = vpack.c.b16 %v2623, %v2622
    %v2634 = vpack.c.b16 %v2625, %v2624
    %v2635 = vpack.c.b16 %v2627, %v2626
    %2644 = vmatprep.subr.bf16.mxu0 0
    %2645 = vmatpush1.bf16.msra.mxu0 %v2628
    %2646 = vmatprep.subr.bf16.mxu0 0
    %2647 = vmatpush1.bf16.msra.mxu0 %v2629
    %2648 = vmatprep.subr.bf16.mxu0 0
    %2649 = vmatpush1.bf16.msra.mxu0 %v2630
    %2650 = vmatprep.subr.bf16.mxu0 0
    %2651 = vmatpush1.bf16.msra.mxu0 %v2631
    %2652 = vmatprep.subr.bf16.mxu0 0
    %2653 = vmatpush1.bf16.msra.mxu0 %v2632
    %2654 = vmatprep.subr.bf16.mxu0 0
    %2655 = vmatpush1.bf16.msra.mxu0 %v2633
    %2656 = vmatprep.subr.bf16.mxu0 0
    %2657 = vmatpush1.bf16.msra.mxu0 %v2634
    %2658 = vmatprep.subr.bf16.mxu0 0
    %2659 = vmatpush1.bf16.msra.mxu0 %v2635
    %2660 = vmatprep.subr.bf16.mxu0 0
    %2661 = vmatpush1.bf16.msra.mxu0 0
    %2662 = vmatprep.subr.bf16.mxu0 0
    %2663 = vmatpush1.bf16.msra.mxu0 0
    %2664 = vmatprep.subr.bf16.mxu0 0
    %2665 = vmatpush1.bf16.msra.mxu0 0
    %2666 = vmatprep.subr.bf16.mxu0 0
    %2667 = vmatpush1.bf16.msra.mxu0 0
    %2668 = vmatprep.subr.bf16.mxu0 0
    %2669 = vmatpush1.bf16.msra.mxu0 0
    %2670 = vmatprep.subr.bf16.mxu0 0
    %2671 = vmatpush1.bf16.msra.mxu0 0
    %2672 = vmatprep.subr.bf16.mxu0 0
    %2673 = vmatpush1.bf16.msra.mxu0 0
    %2674 = vmatprep.subr.bf16.mxu0 0
    %2675 = vmatpush1.bf16.msra.mxu0 0
    %2676 = vmatprep.mubr.bf16.mxu0 0
    %2677 = vmatmul.mubr.bf16.gmra.mrb[0].mxu0 %v2572
    %v2678 = vpop.f32.mrb[0].mxu0
    %v2679 = vadd.f32 %v2594, %v2678
    %v2680 = vpop.f32.mrb[0].mxu0
    %v2681 = vpop.f32.mrb[0].mxu0
    %v2682 = vpop.f32.mrb[0].mxu0
    %2683 = vdwg.mxu0
    %v2684 = vpack.c.bf16 %v2036, %v2036
    %v2685 = vpack.c.bf16 %v2037, %v2037
    %v2686 = vpack.c.bf16 %v2038, %v2038
    %v2687 = vpack.c.bf16 %v2039, %v2039
    %v2688 = vpack.c.bf16 %v2040, %v2040
    %v2689 = vpack.c.bf16 %v2041, %v2041
    %2690 = vmatprep.subr.bf16.mxu0 0
    %2691 = vmatpush1.bf16.msra.mxu0 %v2355
    %2692 = vmatprep.subr.bf16.mxu0 0
    %2693 = vmatpush1.bf16.msra.mxu0 %v2356
    %2694 = vmatprep.subr.bf16.mxu0 0
    %2695 = vmatpush1.bf16.msra.mxu0 %v2357
    %2696 = vmatprep.subr.bf16.mxu0 0
    %2697 = vmatpush1.bf16.msra.mxu0 %v2358
    %2698 = vmatprep.subr.bf16.mxu0 0
    %2699 = vmatpush1.bf16.msra.mxu0 %v2359
    %2700 = vmatprep.subr.bf16.mxu0 0
    %2701 = vmatpush1.bf16.msra.mxu0 %v2360
    %2702 = vmatprep.subr.bf16.mxu0 0
    %2703 = vmatpush1.bf16.msra.mxu0 %v2361
    %2704 = vmatprep.subr.bf16.mxu0 0
    %2705 = vmatpush1.bf16.msra.mxu0 %v2362
    %2706 = vmatprep.subr.bf16.mxu0 0
    %2707 = vmatpush1.bf16.msra.mxu0 %v2363
    %2708 = vmatprep.subr.bf16.mxu0 0
    %2709 = vmatpush1.bf16.msra.mxu0 %v2364
    %2710 = vmatprep.subr.bf16.mxu0 0
    %2711 = vmatpush1.bf16.msra.mxu0 %v2365
    %2712 = vmatprep.subr.bf16.mxu0 0
    %2713 = vmatpush1.bf16.msra.mxu0 %v2366
    %2714 = vmatprep.subr.bf16.mxu0 0
    %2715 = vmatpush1.bf16.msra.mxu0 %v2367
    %2716 = vmatprep.subr.bf16.mxu0 0
    %2717 = vmatpush1.bf16.msra.mxu0 %v2368
    %2718 = vmatprep.subr.bf16.mxu0 0
    %2719 = vmatpush1.bf16.msra.mxu0 %v2369
    %2720 = vmatprep.subr.bf16.mxu0 0
    %2721 = vmatpush1.bf16.msra.mxu0 %v2370
    %2722 = vmatprep.mubr.bf16.mxu0 %v2685
    %2723 = vmatmul.mubr.bf16.gmra.mrb[0].mxu0 %v2684
    %v2724 = vpop.f32.mrb[0].mxu0
    %v2725 = vadd.f32 %v2161, %v2724
    %v2726 = vpop.f32.mrb[0].mxu0
    %v2727 = vpop.f32.mrb[0].mxu0
    %v2728 = vpop.f32.mrb[0].mxu0
    %2729 = vdwg.mxu0
    %2730 = vmatprep.subr.bf16.mxu0 0
    %2731 = vmatpush1.bf16.msra.mxu0 %v2371
    %2732 = vmatprep.subr.bf16.mxu0 0
    %2733 = vmatpush1.bf16.msra.mxu0 %v2372
    %2734 = vmatprep.subr.bf16.mxu0 0
    %2735 = vmatpush1.bf16.msra.mxu0 %v2373
    %2736 = vmatprep.subr.bf16.mxu0 0
    %2737 = vmatpush1.bf16.msra.mxu0 %v2374
    %2738 = vmatprep.subr.bf16.mxu0 0
    %2739 = vmatpush1.bf16.msra.mxu0 %v2375
    %2740 = vmatprep.subr.bf16.mxu0 0
    %2741 = vmatpush1.bf16.msra.mxu0 %v2376
    %2742 = vmatprep.subr.bf16.mxu0 0
    %2743 = vmatpush1.bf16.msra.mxu0 %v2377
    %2744 = vmatprep.subr.bf16.mxu0 0
    %2745 = vmatpush1.bf16.msra.mxu0 %v2378
    %2746 = vmatprep.subr.bf16.mxu0 0
    %2747 = vmatpush1.bf16.msra.mxu0 %v2379
    %2748 = vmatprep.subr.bf16.mxu0 0
    %2749 = vmatpush1.bf16.msra.mxu0 %v2380
    %2750 = vmatprep.subr.bf16.mxu0 0
    %2751 = vmatpush1.bf16.msra.mxu0 %v2381
    %2752 = vmatprep.subr.bf16.mxu0 0
    %2753 = vmatpush1.bf16.msra.mxu0 %v2382
    %2754 = vmatprep.subr.bf16.mxu0 0
    %2755 = vmatpush1.bf16.msra.mxu0 %v2383
    %2756 = vmatprep.subr.bf16.mxu0 0
    %2757 = vmatpush1.bf16.msra.mxu0 %v2384
    %2758 = vmatprep.subr.bf16.mxu0 0
    %2759 = vmatpush1.bf16.msra.mxu0 %v2385
    %2760 = vmatprep.subr.bf16.mxu0 0
    %2761 = vmatpush1.bf16.msra.mxu0 %v2386
    %2762 = vmatprep.mubr.bf16.mxu0 %v2687
    %2763 = vmatmul.mubr.bf16.gmra.mrb[0].mxu0 %v2686
    %v2764 = vpop.f32.mrb[0].mxu0
    %v2765 = vadd.f32 %v2725, %v2764
    %v2766 = vpop.f32.mrb[0].mxu0
    %v2767 = vpop.f32.mrb[0].mxu0
    %v2768 = vpop.f32.mrb[0].mxu0
    %2769 = vdwg.mxu0
    %2770 = vmatprep.subr.bf16.mxu0 0
    %2771 = vmatpush1.bf16.msra.mxu0 %v2387
    %2772 = vmatprep.subr.bf16.mxu0 0
    %2773 = vmatpush1.bf16.msra.mxu0 %v2388
    %2774 = vmatprep.subr.bf16.mxu0 0
    %2775 = vmatpush1.bf16.msra.mxu0 %v2389
    %2776 = vmatprep.subr.bf16.mxu0 0
    %2777 = vmatpush1.bf16.msra.mxu0 %v2390
    %2778 = vmatprep.subr.bf16.mxu0 0
    %2779 = vmatpush1.bf16.msra.mxu0 %v2391
    %2780 = vmatprep.subr.bf16.mxu0 0
    %2781 = vmatpush1.bf16.msra.mxu0 %v2392
    %2782 = vmatprep.subr.bf16.mxu0 0
    %2783 = vmatpush1.bf16.msra.mxu0 %v2393
    %2784 = vmatprep.subr.bf16.mxu0 0
    %2785 = vmatpush1.bf16.msra.mxu0 %v2394
    %2786 = vmatprep.subr.bf16.mxu0 0
    %2787 = vmatpush1.bf16.msra.mxu0 %v2395
    %2788 = vmatprep.subr.bf16.mxu0 0
    %2789 = vmatpush1.bf16.msra.mxu0 %v2396
    %2790 = vmatprep.subr.bf16.mxu0 0
    %2791 = vmatpush1.bf16.msra.mxu0 %v2397
    %2792 = vmatprep.subr.bf16.mxu0 0
    %2793 = vmatpush1.bf16.msra.mxu0 %v2398
    %2794 = vmatprep.subr.bf16.mxu0 0
    %2795 = vmatpush1.bf16.msra.mxu0 %v2399
    %2796 = vmatprep.subr.bf16.mxu0 0
    %2797 = vmatpush1.bf16.msra.mxu0 %v2400
    %2798 = vmatprep.subr.bf16.mxu0 0
    %2799 = vmatpush1.bf16.msra.mxu0 %v2401
    %2800 = vmatprep.subr.bf16.mxu0 0
    %2801 = vmatpush1.bf16.msra.mxu0 %v2402
    %2802 = vmatprep.mubr.bf16.mxu0 %v2689
    %2803 = vmatmul.mubr.bf16.gmra.mrb[0].mxu0 %v2688
    %v2804 = vpop.f32.mrb[0].mxu0
    %v2805 = vadd.f32 %v2765, %v2804
    %v2806 = vpop.f32.mrb[0].mxu0
    %v2807 = vpop.f32.mrb[0].mxu0
    %v2808 = vpop.f32.mrb[0].mxu0
    %2809 = vdwg.mxu0
    %v2810 = vtanh.pop %v2805
    %v2811 = vpack.c.bf16 %v2810, %v2810
    %2812 = vmatprep.subr.bf16.mxu0 0
    %2813 = vmatpush1.bf16.msra.mxu0 %v2628
    %2814 = vmatprep.subr.bf16.mxu0 0
    %2815 = vmatpush1.bf16.msra.mxu0 %v2629
    %2816 = vmatprep.subr.bf16.mxu0 0
    %2817 = vmatpush1.bf16.msra.mxu0 %v2630
    %2818 = vmatprep.subr.bf16.mxu0 0
    %2819 = vmatpush1.bf16.msra.mxu0 %v2631
    %2820 = vmatprep.subr.bf16.mxu0 0
    %2821 = vmatpush1.bf16.msra.mxu0 %v2632
    %2822 = vmatprep.subr.bf16.mxu0 0
    %2823 = vmatpush1.bf16.msra.mxu0 %v2633
    %2824 = vmatprep.subr.bf16.mxu0 0
    %2825 = vmatpush1.bf16.msra.mxu0 %v2634
    %2826 = vmatprep.subr.bf16.mxu0 0
    %2827 = vmatpush1.bf16.msra.mxu0 %v2635
    %2828 = vmatprep.subr.bf16.mxu0 0
    %2829 = vmatpush1.bf16.msra.mxu0 0
    %2830 = vmatprep.subr.bf16.mxu0 0
    %2831 = vmatpush1.bf16.msra.mxu0 0
    %2832 = vmatprep.subr.bf16.mxu0 0
    %2833 = vmatpush1.bf16.msra.mxu0 0
    %2834 = vmatprep.subr.bf16.mxu0 0
    %2835 = vmatpush1.bf16.msra.mxu0 0
    %2836 = vmatprep.subr.bf16.mxu0 0
    %2837 = vmatpush1.bf16.msra.mxu0 0
    %2838 = vmatprep.subr.bf16.mxu0 0
    %2839 = vmatpush1.bf16.msra.mxu0 0
    %2840 = vmatprep.subr.bf16.mxu0 0
    %2841 = vmatpush1.bf16.msra.mxu0 0
    %2842 = vmatprep.subr.bf16.mxu0 0
    %2843 = vmatpush1.bf16.msra.mxu0 0
    %2844 = vmatprep.mubr.bf16.mxu0 0
    %2845 = vmatmul.mubr.bf16.gmra.mrb[0].mxu0 %v2811
    %v2846 = vpop.f32.mrb[0].mxu0
    %v2847 = vadd.f32 %v2594, %v2846
    %v2848 = vpop.f32.mrb[0].mxu0
    %v2849 = vpop.f32.mrb[0].mxu0
    %v2850 = vpop.f32.mrb[0].mxu0
    %2851 = vdwg.mxu0
    %2852 = vmax.xlane.f32.xlu0 %v2679
    %v2853 = vpop.xlane.xlu0 %2852
    %v2854 = vsub.f32 %v2679, %v2853
    %v2855 = vmul.f32 %v2854, 1.442695
    %v2856 = vpow.pop %v2855
    %2857 = vadd.xlane.f32.xlu0 %v2856
    %v2858 = vpop.xlane.xlu0 %2857
    %v2859 = vlog2.pop %v2858
    %v2860 = vmul.f32 %v2859, 0.6931472
    %v2861 = vadd.f32 %v2853, %v2860
    %2862 = vmax.xlane.f32.xlu0 %v2847
    %v2863 = vpop.xlane.xlu0 %2862
    %v2864 = vsub.f32 %v2847, %v2863
    %v2865 = vmul.f32 %v2864, 1.442695
    %v2866 = vpow.pop %v2865
    %2867 = vadd.xlane.f32.xlu0 %v2866
    %v2868 = vpop.xlane.xlu0 %2867
    %v2869 = vlog2.pop %v2868
    %v2870 = vmul.f32 %v2869, 0.6931472
    %v2871 = vadd.f32 %v2863, %v2870
    %v2872 = vld [vmem:[%s3] sm:$0xff]
    %v2873 = vmul.f32 %v2679, %v2872
    %2874 = vadd.xlane.f32.xlu0 %v2873
    %v2875 = vpop.xlane.xlu0 %2874
    %v2876 = vsub.f32 %v2861, %v2875
    %v2877 = vsub.f32 %v2861, %v2871
    %v2878 = vsub.f32 0.0, %v2877
    %v2879 = vadd.f32 %v2876, %v2878
    %v2880 = vlaneseq
    %v2881 = vshrl.u32 %v2880, 7
    %vm2882 = vcmp.lt.s32.totalorder %v2881, 2
    %v2883 = vsel %vm2882, 1, 0
    %v2884 = vcvt.s32.f32 %v2883
    %v2885 = vmul.f32 %v2879, %v2884
    %vm2886 = vcmask 7168
    %v2887 = vsel %vm2886, %v2885, 0.0
    %2888 = vadd.xlane.f32.xlu0 %v2887
    %v2889 = vpop.xlane.xlu0 %2888
    %v2890 = vrot.slane %v2889, 4
    %v2891 = vadd.f32 %v2889, %v2890
    %v2892 = vrot.slane %v2891, 2
    %v2893 = vadd.f32 %v2891, %v2892
    %v2894 = vrot.slane %v2893, 1
    %v2895 = vadd.f32 %v2893, %v2894
    %s2896 = vtos %v2895
    %s2897 = smul.f32 %s2896, 0.5
    %s2898 = scalar_lea.smem [#allocation16], 0
    %2899 = sst [smem:[%s2898]] %s2897
    // Predicated region
    $region70: #{tpu_custom_call.1} parent=1 // pred_check
      _
    $region71: #{tpu_custom_call.1} parent=1 // pred_check_branch
      %2901 = sbr.rel (0) target = $region73
    $region72: #{tpu_custom_call.1} parent=1 // pred_region
      %s2903 = ssub.s32 768, 768
      %2904 = vsyncadd [#allocation4], %s2903
      %s2906 = sshll.u32 [#allocation15], 4
      %s2907 = int_to_ptr.vmem [resolvable:$true] %s2906
      %2909 = dma.vmem_to_hbm [thread:$0]  %s2907, 768, %s10, [#allocation4]
    $region73: #{tpu_custom_call.1} parent=1 // pred_fallthru
      _
    // Predicated region
    $region74: #{tpu_custom_call.1} parent=1 // pred_check
      _
    $region75: #{tpu_custom_call.1} parent=1 // pred_check_branch
      %2911 = sbr.rel (0) target = $region77
    $region76: #{tpu_custom_call.1} parent=1 // pred_region
      %s2913 = ssub.s32 16, 16
      %2914 = vsyncadd [#allocation5], %s2913
      %2917 = dma.smem_to_hbm [#allocation16], 16, %s11, [#allocation5]
    $region77: #{tpu_custom_call.1} parent=1 // pred_fallthru
      _
    // Predicated region
    $region78: #{tpu_custom_call.1} parent=1 // pred_check
      _
    $region79: #{tpu_custom_call.1} parent=1 // pred_check_branch
      %2919 = sbr.rel (0) target = $region81
    $region80: #{tpu_custom_call.1} parent=1 // pred_region
      %2920 = dma.done [#allocation4], 768
    $region81: #{tpu_custom_call.1} parent=1 // pred_fallthru
      _
    // Predicated region
    $region82: #{tpu_custom_call.1} parent=1 // pred_check
      _
    $region83: #{tpu_custom_call.1} parent=1 // pred_check_branch
      %2922 = sbr.rel (0) target = $region85
    $region84: #{tpu_custom_call.1} parent=1 // pred_region
      %2923 = dma.done [#allocation5], 16
    $region85: #{tpu_custom_call.1} parent=1 // pred_fallthru
      _
    %2924 = sfence
    %2925 = vsyncpa [#allocation3], 1
    %2926 = vsyncpa [#allocation7], 1
    %2927 = vsyncpa [#allocation10], 1
    %2928 = vsyncpa [#allocation13], 1
    %2929 = vsyncpa [#allocation4], 1
    %2930 = vsyncpa [#allocation5], 1

</llo_original>
